<compile_context>
chip_gen: v7x
topology: tpu7x:2x2x1
jax: 0.10.0
libtpu: 0.0.40
codegen_flags: <defaults>
</compile_context>

<pallas_src>
import math
import functools

import jax
import jax.numpy as jnp
from jax import lax
from jax.experimental import pallas as pl
from jax.experimental.pallas import tpu as pltpu


MXU_DTYPE = jnp.bfloat16   # MXU operand dtype; accumulation stays float32
LN_EPS = 1e-5


# ----------------------------------------------------------------------------
# In-kernel math helpers (traced inside the Pallas kernel bodies)
# ----------------------------------------------------------------------------

def _mm(a, b):
    """MXU matmul: bf16 operands, f32 accumulation."""
    return jnp.dot(a.astype(MXU_DTYPE), b.astype(MXU_DTYPE),
                   preferred_element_type=jnp.float32)


def _layernorm(x, g, b, eps=LN_EPS):
    mean = jnp.mean(x, axis=-1, keepdims=True)
    var = jnp.mean(jnp.square(x - mean), axis=-1, keepdims=True)
    return g * ((x - mean) * lax.rsqrt(var + eps)) + b


def _softmax_rows(s):
    s = s - jnp.max(s, axis=-1, keepdims=True)
    p = jnp.exp(s)
    return p * pl.reciprocal(jnp.sum(p, axis=-1, keepdims=True), approx=True)


def _attention_block(q, k, v, num_heads, mask):
    """q, k, v: (S, D) with heads packed head-major along the last axis.
    mask: (S, S) additive mask or None. Returns (S, D)."""
    _, d_model = q.shape
    hd = d_model // num_heads
    scale = 1.0 / math.sqrt(hd)
    heads = []
    for h in range(num_heads):
        sl = slice(h * hd, (h + 1) * hd)
        qh, kh, vh = q[:, sl], k[:, sl], v[:, sl]
        s = lax.dot_general(qh.astype(MXU_DTYPE), kh.astype(MXU_DTYPE),
                            (((1,), (1,)), ((), ())),
                            preferred_element_type=jnp.float32) * scale
        if mask is not None:
            s = s + mask
        heads.append(_mm(_softmax_rows(s), vh))
    return jnp.concatenate(heads, axis=1)


# ----------------------------------------------------------------------------
# Fused encoder stack kernel:  grid = (B, L); the output block (one batch row)
# is VMEM-resident across the layer axis and acts as the carried activation.
# ----------------------------------------------------------------------------

def _make_encoder_kernel(num_heads, has_mask):
    def kernel(*refs):
        it = iter(refs)
        x_in = next(it)                                   # (S, D) embeddings
        mask_ref = next(it) if has_mask else None         # (S, S) or absent
        (qkv_w, qkv_b, ao_w, ao_b, n1_g, n1_b,
         f1_w, f1_b, f2_w, f2_b, n2_g, n2_b) = (next(it) for _ in range(12))
        o_ref = next(it)                                  # (S, D) carry/output

        l = pl.program_id(1)

        @pl.when(l == 0)
        def _init():
            o_ref[...] = x_in[...]

        x = o_ref[...]
        d_model = x.shape[-1]
        mask = mask_ref[...] if mask_ref is not None else None

        # --- multi-head self attention + residual + LayerNorm ---
        qkv = _mm(x, qkv_w[...]) + qkv_b[...]             # (S, 3D), [Q | K | V]
        q, k, v = qkv[:, :d_model], qkv[:, d_model:2 * d_model], qkv[:, 2 * d_model:]
        vals = _attention_block(q, k, v, num_heads, mask)
        x = _layernorm(_mm(vals, ao_w[...]) + ao_b[...] + x, n1_g[...], n1_b[...])

        # --- position-wise FFN + residual + LayerNorm ---
        h = jnp.maximum(_mm(x, f1_w[...]) + f1_b[...], 0.0)
        x = _layernorm(_mm(h, f2_w[...]) + f2_b[...] + x, n2_g[...], n2_b[...])

        o_ref[...] = x
    return kernel


def encoder_stack(x_emb, mask, w, num_heads):
    """x_emb: (B, S, D); mask: (B, S, S) or None; w: stacked per-layer weights."""
    B, S, D = x_emb.shape
    L = w["qkv_w"].shape[0]

    act_spec = pl.BlockSpec((None, S, D), lambda b, l: (b, 0, 0))

    def wspec(a):
        return pl.BlockSpec((None,) + a.shape[1:],
                            lambda b, l: (l,) + (0,) * (a.ndim - 1))

    weight_order = ["qkv_w", "qkv_b", "ao_w", "ao_b", "n1_g", "n1_b",
                    "f1_w", "f1_b", "f2_w", "f2_b", "n2_g", "n2_b"]
    weights = [w[k] for k in weight_order]

    args, in_specs = [x_emb], [act_spec]
    if mask is not None:
        args.append(mask)
        in_specs.append(pl.BlockSpec((None, S, S), lambda b, l: (b, 0, 0)))
    args += weights
    in_specs += [wspec(a) for a in weights]

    return pl.pallas_call(
        _make_encoder_kernel(num_heads, mask is not None),
        out_shape=jax.ShapeDtypeStruct((B, S, D), jnp.float32),
        grid=(B, L),
        in_specs=in_specs,
        out_specs=pl.BlockSpec((None, S, D), lambda b, l: (b, 0, 0)),
        compiler_params=pltpu.CompilerParams(
            dimension_semantics=("parallel", "arbitrary")),
    )(*args)


# ----------------------------------------------------------------------------
# Fused decoder stack kernel (+ final lane-padded vocab projection).
# grid = (B, L); decoder activation carried in a VMEM scratch across layers.
# ----------------------------------------------------------------------------

def _make_decoder_kernel(num_heads, has_smask, has_cmask):
    def kernel(*refs):
        it = iter(refs)
        x_in = next(it)                                   # (S, D) encoder out
        y_in = next(it)                                   # (S, D) dec embeddings
        smask_ref = next(it) if has_smask else None
        cmask_ref = next(it) if has_cmask else None
        (sqkv_w, sqkv_b, so_w, so_b, n1_g, n1_b,
         kv_w, kv_b, q_w, q_b, co_w, co_b, n2_g, n2_b,
         f1_w, f1_b, f2_w, f2_b, n3_g, n3_b,
         fin_w, fin_b) = (next(it) for _ in range(22))
        logits_ref = next(it)                             # (S, Vpad) output
        y_scr = next(it)                                  # (S, D) VMEM carry

        l = pl.program_id(1)

        @pl.when(l == 0)
        def _init():
            y_scr[...] = y_in[...]

        y = y_scr[...]
        x = x_in[...]
        d_model = y.shape[-1]
        smask = smask_ref[...] if smask_ref is not None else None
        cmask = cmask_ref[...] if cmask_ref is not None else None

        # --- self attention + residual + LayerNorm ---
        qkv = _mm(y, sqkv_w[...]) + sqkv_b[...]           # (S, 3D), [Q | K | V]
        q, k, v = qkv[:, :d_model], qkv[:, d_model:2 * d_model], qkv[:, 2 * d_model:]
        vals = _attention_block(q, k, v, num_heads, smask)
        y = _layernorm(_mm(vals, so_w[...]) + so_b[...] + y, n1_g[...], n1_b[...])

        # --- encoder-decoder cross attention + residual + LayerNorm ---
        kv = _mm(x, kv_w[...]) + kv_b[...]                # (S, 2D), [K | V]
        qc = _mm(y, q_w[...]) + q_b[...]                  # (S, D)
        vals = _attention_block(qc, kv[:, :d_model], kv[:, d_model:],
                                num_heads, cmask)
        y = _layernorm(_mm(vals, co_w[...]) + co_b[...] + y, n2_g[...], n2_b[...])

        # --- position-wise FFN + residual + LayerNorm ---
        h = jnp.maximum(_mm(y, f1_w[...]) + f1_b[...], 0.0)
        y = _layernorm(_mm(h, f2_w[...]) + f2_b[...] + y, n3_g[...], n3_b[...])

        y_scr[...] = y

        # --- final vocab projection (lane-dense, 128-wide), last layer only ---
        @pl.when(l == pl.num_programs(1) - 1)
        def _final():
            logits_ref[...] = _mm(y, fin_w[...]) + fin_b[...]
    return kernel


def decoder_stack(x_enc, y_emb, self_mask, cross_mask, w, fin_w, fin_b, num_heads):
    B, S, D = y_emb.shape
    L = w["sqkv_w"].shape[0]
    Vp = fin_w.shape[1]

    act_spec = pl.BlockSpec((None, S, D), lambda b, l: (b, 0, 0))
    mask_spec = pl.BlockSpec((None, S, S), lambda b, l: (b, 0, 0))

    def wspec(a):
        return pl.BlockSpec((None,) + a.shape[1:],
                            lambda b, l: (l,) + (0,) * (a.ndim - 1))

    weight_order = ["sqkv_w", "sqkv_b", "so_w", "so_b", "n1_g", "n1_b",
                    "kv_w", "kv_b", "q_w", "q_b", "co_w", "co_b", "n2_g", "n2_b",
                    "f1_w", "f1_b", "f2_w", "f2_b", "n3_g", "n3_b"]
    weights = [w[k] for k in weight_order]

    args, in_specs = [x_enc, y_emb], [act_spec, act_spec]
    if self_mask is not None:
        args.append(self_mask)
        in_specs.append(mask_spec)
    if cross_mask is not None:
        args.append(cross_mask)
        in_specs.append(mask_spec)
    args += weights + [fin_w, fin_b]
    in_specs += [wspec(a) for a in weights]
    in_specs += [pl.BlockSpec(fin_w.shape, lambda b, l: (0, 0)),
                 pl.BlockSpec(fin_b.shape, lambda b, l: (0, 0))]

    return pl.pallas_call(
        _make_decoder_kernel(num_heads, self_mask is not None, cross_mask is not None),
        out_shape=jax.ShapeDtypeStruct((B, S, Vp), jnp.float32),
        grid=(B, L),
        in_specs=in_specs,
        out_specs=pl.BlockSpec((None, S, Vp), lambda b, l: (b, 0, 0)),
        scratch_shapes=[pltpu.VMEM((S, D), jnp.float32)],
        compiler_params=pltpu.CompilerParams(
            dimension_semantics=("parallel", "arbitrary")),
    )(*args)


# ----------------------------------------------------------------------------
# Plain-JAX glue: embeddings, positional encoding, forward orchestration
# ----------------------------------------------------------------------------

def positional_encoding(d_model, max_seq_len):
    even_i = jnp.arange(0, d_model, 2, dtype=jnp.float32)
    denom = jnp.power(10000.0, even_i / d_model)
    pos = jnp.arange(max_seq_len, dtype=jnp.float32).reshape(max_seq_len, 1)
    even_pe = jnp.sin(pos / denom)
    odd_pe = jnp.cos(pos / denom)
    return jnp.stack([even_pe, odd_pe], axis=2).reshape(max_seq_len, d_model)


def sentence_embedding(tokens, emb_table, d_model, max_seq_len):
    # tokens: (B, S) int32; dropout is identity in eval mode.
    emb = jnp.take(emb_table, tokens, axis=0)             # (B, S, D)
    return emb + positional_encoding(d_model, max_seq_len)[None, :, :]


def transformer_forward(prep, x_tokens, y_tokens, cfg,
                        enc_self_mask=None, dec_self_mask=None, dec_cross_mask=None):
    D, H, S = cfg["d_model"], cfg["num_heads"], cfg["max_seq_len"]
    x = sentence_embedding(x_tokens, prep["enc_emb"], D, S)
    x = encoder_stack(x, enc_self_mask, prep["enc"], H)
    y = sentence_embedding(y_tokens, prep["dec_emb"], D, S)
    logits = decoder_stack(x, y, dec_self_mask, dec_cross_mask,
                           prep["dec"], prep["fin_w"], prep["fin_b"], H)
    return logits[:, :, :cfg["to_vocab_size"]]            # drop lane padding


# ----------------------------------------------------------------------------
# Parameter init (PyTorch-layout) and preparation (stack layers, pack heads,
# pad vocab projection) -- done once in plain JAX, outside the kernels.
# ----------------------------------------------------------------------------

def init_linear(key, din, dout, scale=0.05):
    kw, kb = jax.random.split(key)
    return {"w": scale * jax.random.normal(kw, (din, dout), jnp.float32),
            "b": scale * jax.random.normal(kb, (dout,), jnp.float32)}


def init_encoder_layer(key, d_model, ffn_hidden):
    ks = jax.random.split(key, 4)
    return {
        "attn": {"qkv": init_linear(ks[0], d_model, 3 * d_model),
                 "out": init_linear(ks[1], d_model, d_model)},
        "norm1_g": jnp.ones((d_model,), jnp.float32),
        "norm1_b": jnp.zeros((d_model,), jnp.float32),
        "ffn1": init_linear(ks[2], d_model, ffn_hidden),
        "ffn2": init_linear(ks[3], ffn_hidden, d_model),
        "norm2_g": jnp.ones((d_model,), jnp.float32),
        "norm2_b": jnp.zeros((d_model,), jnp.float32),
    }


def init_decoder_layer(key, d_model, ffn_hidden):
    ks = jax.random.split(key, 7)
    return {
        "self_attn": {"qkv": init_linear(ks[0], d_model, 3 * d_model),
                      "out": init_linear(ks[1], d_model, d_model)},
        "norm1_g": jnp.ones((d_model,), jnp.float32),
        "norm1_b": jnp.zeros((d_model,), jnp.float32),
        "cross_attn": {"kv": init_linear(ks[2], d_model, 2 * d_model),
                       "q": init_linear(ks[3], d_model, d_model),
                       "out": init_linear(ks[4], d_model, d_model)},
        "norm2_g": jnp.ones((d_model,), jnp.float32),
        "norm2_b": jnp.zeros((d_model,), jnp.float32),
        "ffn1": init_linear(ks[5], d_model, ffn_hidden),
        "ffn2": init_linear(ks[6], ffn_hidden, d_model),
        "norm3_g": jnp.ones((d_model,), jnp.float32),
        "norm3_b": jnp.zeros((d_model,), jnp.float32),
    }


def init_params(key, cfg, from_vocab, to_vocab):
    keys = jax.random.split(key, 4 + 2 * cfg["num_layers"])
    return {
        "enc_emb": 0.05 * jax.random.normal(keys[0], (from_vocab, cfg["d_model"]), jnp.float32),
        "dec_emb": 0.05 * jax.random.normal(keys[1], (to_vocab, cfg["d_model"]), jnp.float32),
        "final": init_linear(keys[2], cfg["d_model"], to_vocab),
        "enc_layers": [init_encoder_layer(keys[4 + i], cfg["d_model"], cfg["ffn_hidden"])
                       for i in range(cfg["num_layers"])],
        "dec_layers": [init_decoder_layer(keys[4 + cfg["num_layers"] + i],
                                          cfg["d_model"], cfg["ffn_hidden"])
                       for i in range(cfg["num_layers"])],
    }


def _packed_col_perm(d_model, num_heads, parts):
    """Column permutation: PyTorch per-head interleave [h: p0|p1|...] ->
    packed [p0 all heads | p1 all heads | ...], head-major within each part."""
    hd = d_model // num_heads
    idx = []
    for p in range(parts):
        for h in range(num_heads):
            base = h * parts * hd + p * hd
            idx.extend(range(base, base + hd))
    return jnp.array(idx, dtype=jnp.int32)


def prepare_params(params, cfg):
    D, H = cfg["d_model"], cfg["num_heads"]
    perm3 = _packed_col_perm(D, H, 3)   # qkv -> [Q | K | V]
    perm2 = _packed_col_perm(D, H, 2)   # kv  -> [K | V]

    def stk(layers, fn):
        return jnp.stack([fn(lp) for lp in layers])

    enc_l = params["enc_layers"]
    enc = {
        "qkv_w": stk(enc_l, lambda p: p["attn"]["qkv"]["w"][:, perm3]),
        "qkv_b": stk(enc_l, lambda p: p["attn"]["qkv"]["b"][perm3][None, :]),
        "ao_w":  stk(enc_l, lambda p: p["attn"]["out"]["w"]),
        "ao_b":  stk(enc_l, lambda p: p["attn"]["out"]["b"][None, :]),
        "n1_g":  stk(enc_l, lambda p: p["norm1_g"][None, :]),
        "n1_b":  stk(enc_l, lambda p: p["norm1_b"][None, :]),
        "f1_w":  stk(enc_l, lambda p: p["ffn1"]["w"]),
        "f1_b":  stk(enc_l, lambda p: p["ffn1"]["b"][None, :]),
        "f2_w":  stk(enc_l, lambda p: p["ffn2"]["w"]),
        "f2_b":  stk(enc_l, lambda p: p["ffn2"]["b"][None, :]),
        "n2_g":  stk(enc_l, lambda p: p["norm2_g"][None, :]),
        "n2_b":  stk(enc_l, lambda p: p["norm2_b"][None, :]),
    }
    dec_l = params["dec_layers"]
    dec = {
        "sqkv_w": stk(dec_l, lambda p: p["self_attn"]["qkv"]["w"][:, perm3]),
        "sqkv_b": stk(dec_l, lambda p: p["self_attn"]["qkv"]["b"][perm3][None, :]),
        "so_w":   stk(dec_l, lambda p: p["self_attn"]["out"]["w"]),
        "so_b":   stk(dec_l, lambda p: p["self_attn"]["out"]["b"][None, :]),
        "n1_g":   stk(dec_l, lambda p: p["norm1_g"][None, :]),
        "n1_b":   stk(dec_l, lambda p: p["norm1_b"][None, :]),
        "kv_w":   stk(dec_l, lambda p: p["cross_attn"]["kv"]["w"][:, perm2]),
        "kv_b":   stk(dec_l, lambda p: p["cross_attn"]["kv"]["b"][perm2][None, :]),
        "q_w":    stk(dec_l, lambda p: p["cross_attn"]["q"]["w"]),
        "q_b":    stk(dec_l, lambda p: p["cross_attn"]["q"]["b"][None, :]),
        "co_w":   stk(dec_l, lambda p: p["cross_attn"]["out"]["w"]),
        "co_b":   stk(dec_l, lambda p: p["cross_attn"]["out"]["b"][None, :]),
        "n2_g":   stk(dec_l, lambda p: p["norm2_g"][None, :]),
        "n2_b":   stk(dec_l, lambda p: p["norm2_b"][None, :]),
        "f1_w":   stk(dec_l, lambda p: p["ffn1"]["w"]),
        "f1_b":   stk(dec_l, lambda p: p["ffn1"]["b"][None, :]),
        "f2_w":   stk(dec_l, lambda p: p["ffn2"]["w"]),
        "f2_b":   stk(dec_l, lambda p: p["ffn2"]["b"][None, :]),
        "n3_g":   stk(dec_l, lambda p: p["norm3_g"][None, :]),
        "n3_b":   stk(dec_l, lambda p: p["norm3_b"][None, :]),
    }
    # Lane-dense final projection: pad vocab dim up to a multiple of 128.
    V = params["final"]["w"].shape[1]
    Vp = ((V + 127) // 128) * 128
    fin_w = jnp.zeros((D, Vp), jnp.float32).at[:, :V].set(params["final"]["w"])
    fin_b = jnp.zeros((1, Vp), jnp.float32).at[:, :V].set(params["final"]["b"])
    return {"enc_emb": params["enc_emb"], "dec_emb": params["dec_emb"],
            "enc": enc, "dec": dec, "fin_w": fin_w, "fin_b": fin_b}


# ----------------------------------------------------------------------------
# Host-side character tokenization (Python glue; no Pallas equivalent)
# ----------------------------------------------------------------------------
# TODO(synk): string tokenization is inherently host-side Python; done outside the kernels.

START_TOKEN, END_TOKEN, PADDING_TOKEN = "<s>", "</s>", "<pad>"


def build_vocab():
    chars = list("abcdefghijklmnopqrstuvwxyz ")
    vocab = {c: i for i, c in enumerate(chars)}
    vocab[START_TOKEN] = len(vocab)
    vocab[END_TOKEN] = len(vocab)
    vocab[PADDING_TOKEN] = len(vocab)
    return vocab


def batch_tokenize(batch, lang_to_index, max_seq_len, start_token, end_token):
    rows = []
    for sentence in batch:
        idx = [lang_to_index[c] for c in list(sentence)]
        if start_token:
            idx.insert(0, lang_to_index[START_TOKEN])
        if end_token:
            idx.append(lang_to_index[END_TOKEN])
        while len(idx) < max_seq_len:
            idx.append(lang_to_index[PADDING_TOKEN])
        rows.append(idx[:max_seq_len])
    return jnp.array(rows, dtype=jnp.int32)


# ----------------------------------------------------------------------------
# Main
# ----------------------------------------------------------------------------

if __name__ == "__main__":
    cfg = dict(d_model=32, ffn_hidden=64, num_heads=4, num_layers=2, max_seq_len=8)

    from_lang_to_index = build_vocab()
    to_lang_to_index = build_vocab()
    cfg["to_vocab_size"] = len(to_lang_to_index)

    key = jax.random.PRNGKey(0)
    params = init_params(key, cfg, len(from_lang_to_index), len(to_lang_to_index))
    prep = prepare_params(params, cfg)

    # Small deterministic string batch (batch=2, seq padded to 8).
    x_sentences = ["hello", "kernels"]
    y_sentences = ["hola", "nucleos"]
    x_tokens = batch_tokenize(x_sentences, from_lang_to_index, cfg["max_seq_len"],
                              start_token=False, end_token=False)
    y_tokens = batch_tokenize(y_sentences, to_lang_to_index, cfg["max_seq_len"],
                              start_token=False, end_token=False)

    fwd = jax.jit(functools.partial(transformer_forward, cfg=cfg))
    out = fwd(prep, x_tokens, y_tokens)          # masks default to None (as in PyTorch)
    out = jax.block_until_ready(out)

    assert out.shape == (2, cfg["max_seq_len"], len(to_lang_to_index)), out.shape
    assert bool(jnp.all(jnp.isfinite(out)))
    print("KERNEL_OK")
</pallas_src>

<mosaic_0001>
module attributes {stable_mosaic.version = 11 : i64} {
  func.func @kernel(%arg0: i32, %arg1: i32, %arg2: memref<1x8x32xf32, #tpu.memory_space<vmem>>, %arg3: memref<1x32x96xf32, #tpu.memory_space<vmem>>, %arg4: memref<1x1x96xf32, #tpu.memory_space<vmem>>, %arg5: memref<1x32x32xf32, #tpu.memory_space<vmem>>, %arg6: memref<1x1x32xf32, #tpu.memory_space<vmem>>, %arg7: memref<1x1x32xf32, #tpu.memory_space<vmem>>, %arg8: memref<1x1x32xf32, #tpu.memory_space<vmem>>, %arg9: memref<1x32x64xf32, #tpu.memory_space<vmem>>, %arg10: memref<1x1x64xf32, #tpu.memory_space<vmem>>, %arg11: memref<1x64x32xf32, #tpu.memory_space<vmem>>, %arg12: memref<1x1x32xf32, #tpu.memory_space<vmem>>, %arg13: memref<1x1x32xf32, #tpu.memory_space<vmem>>, %arg14: memref<1x1x32xf32, #tpu.memory_space<vmem>>, %arg15: memref<1x8x32xf32, #tpu.memory_space<vmem>>) attributes {dimension_semantics = [#tpu.dimension_semantics<parallel>, #tpu.dimension_semantics<arbitrary>], iteration_bounds = array<i64: 2, 2>, scalar_prefetch = 0 : i64, scratch_operands = 0 : i64, tpu.core_type = #tpu.core_type<tc>, window_params = [{transform_indices = @transform_0, window_bounds = array<i64: 1, 8, 32>}, {transform_indices = @transform_1, window_bounds = array<i64: 1, 32, 96>}, {transform_indices = @transform_2, window_bounds = array<i64: 1, 1, 96>}, {transform_indices = @transform_3, window_bounds = array<i64: 1, 32, 32>}, {transform_indices = @transform_4, window_bounds = array<i64: 1, 1, 32>}, {transform_indices = @transform_5, window_bounds = array<i64: 1, 1, 32>}, {transform_indices = @transform_6, window_bounds = array<i64: 1, 1, 32>}, {transform_indices = @transform_7, window_bounds = array<i64: 1, 32, 64>}, {transform_indices = @transform_8, window_bounds = array<i64: 1, 1, 64>}, {transform_indices = @transform_9, window_bounds = array<i64: 1, 64, 32>}, {transform_indices = @transform_10, window_bounds = array<i64: 1, 1, 32>}, {transform_indices = @transform_11, window_bounds = array<i64: 1, 1, 32>}, {transform_indices = @transform_12, window_bounds = array<i64: 1, 1, 32>}, {transform_indices = @transform_13, window_bounds = array<i64: 1, 8, 32>}]} {
    %c0_i32 = arith.constant 0 : i32
    %0 = arith.cmpi eq, %arg1, %c0_i32 : i32
    %1 = arith.extui %0 : i1 to i32
    %c0_i32_0 = arith.constant 0 : i32
    %2 = arith.cmpi ne, %1, %c0_i32_0 : i32
    scf.if %2 {
      %c0_76 = arith.constant 0 : index
      %c0_77 = arith.constant 0 : index
      %c0_78 = arith.constant 0 : index
      %188 = vector.load %arg2[%c0_76, %c0_77, %c0_78] : memref<1x8x32xf32, #tpu.memory_space<vmem>>, vector<1x8x32xf32>
      %189 = vector.shape_cast %188 : vector<1x8x32xf32> to vector<8x32xf32>
      %c0_79 = arith.constant 0 : index
      %c0_80 = arith.constant 0 : index
      %c0_81 = arith.constant 0 : index
      %190 = vector.load %arg15[%c0_79, %c0_80, %c0_81] : memref<1x8x32xf32, #tpu.memory_space<vmem>>, vector<1x8x32xf32>
      %191 = vector.shape_cast %190 : vector<1x8x32xf32> to vector<8x32xf32>
      %192 = vector.shape_cast %189 : vector<8x32xf32> to vector<1x8x32xf32>
      tpu.vector_store %arg15[%c0_79, %c0_80, %c0_81], %192 {strides = array<i32>} : memref<1x8x32xf32, #tpu.memory_space<vmem>>, vector<1x8x32xf32>,
    } else {
    }
    %c0 = arith.constant 0 : index
    %c0_1 = arith.constant 0 : index
    %c0_2 = arith.constant 0 : index
    %3 = vector.load %arg15[%c0, %c0_1, %c0_2] : memref<1x8x32xf32, #tpu.memory_space<vmem>>, vector<1x8x32xf32>
    %4 = vector.shape_cast %3 : vector<1x8x32xf32> to vector<8x32xf32>
    %c0_3 = arith.constant 0 : index
    %c0_4 = arith.constant 0 : index
    %c0_5 = arith.constant 0 : index
    %5 = vector.load %arg3[%c0_3, %c0_4, %c0_5] : memref<1x32x96xf32, #tpu.memory_space<vmem>>, vector<1x32x96xf32>
    %6 = vector.shape_cast %5 : vector<1x32x96xf32> to vector<32x96xf32>
    %7 = arith.truncf %4 : vector<8x32xf32> to vector<8x32xbf16>
    %8 = arith.truncf %6 : vector<32x96xf32> to vector<32x96xbf16>
    %cst = arith.constant dense<0.000000e+00> : vector<8x96xf32>
    %9 = tpu.matmul %7, %8, %cst {dimension_numbers = #tpu.dot_dimension_numbers<[1], [0], [0], [1], [0, 0, 1, 1], [], []>} : vector<8x32xbf16>, vector<32x96xbf16>, vector<8x96xf32> -> vector<8x96xf32>
    %c0_6 = arith.constant 0 : index
    %c0_7 = arith.constant 0 : index
    %c0_8 = arith.constant 0 : index
    %10 = vector.load %arg4[%c0_6, %c0_7, %c0_8] : memref<1x1x96xf32, #tpu.memory_space<vmem>>, vector<1x1x96xf32>
    %11 = vector.shape_cast %10 : vector<1x1x96xf32> to vector<1x96xf32>
    %12 = vector.broadcast %11 : vector<1x96xf32> to vector<8x96xf32>
    %13 = arith.addf %9, %12 : vector<8x96xf32>
    %14 = vector.extract_strided_slice %13 {offsets = [0, 0], sizes = [8, 32], strides = [1, 1]} : vector<8x96xf32> to vector<8x32xf32>
    %15 = vector.extract_strided_slice %13 {offsets = [0, 32], sizes = [8, 32], strides = [1, 1]} : vector<8x96xf32> to vector<8x32xf32>
    %16 = vector.extract_strided_slice %13 {offsets = [0, 64], sizes = [8, 32], strides = [1, 1]} : vector<8x96xf32> to vector<8x32xf32>
    %17 = vector.extract_strided_slice %14 {offsets = [0, 0], sizes = [8, 8], strides = [1, 1]} : vector<8x32xf32> to vector<8x8xf32>
    %18 = vector.extract_strided_slice %15 {offsets = [0, 0], sizes = [8, 8], strides = [1, 1]} : vector<8x32xf32> to vector<8x8xf32>
    %19 = vector.extract_strided_slice %16 {offsets = [0, 0], sizes = [8, 8], strides = [1, 1]} : vector<8x32xf32> to vector<8x8xf32>
    %20 = arith.truncf %17 : vector<8x8xf32> to vector<8x8xbf16>
    %21 = arith.truncf %18 : vector<8x8xf32> to vector<8x8xbf16>
    %cst_9 = arith.constant dense<0.000000e+00> : vector<8x8xf32>
    %22 = tpu.matmul %20, %21, %cst_9 {dimension_numbers = #tpu.dot_dimension_numbers<[1], [1], [0], [0], [0, 0, 1, 0], [], []>} : vector<8x8xbf16>, vector<8x8xbf16>, vector<8x8xf32> -> vector<8x8xf32>
    %cst_10 = arith.constant 0.353553385 : f32
    %23 = vector.broadcast %cst_10 : f32 to vector<8x8xf32>
    %24 = arith.mulf %22, %23 : vector<8x8xf32>
    %cst_11 = arith.constant dense<0xFF800000> : vector<8xf32>
    %25 = vector.multi_reduction <maximumf>, %24, %cst_11 [1] : vector<8x8xf32> to vector<8xf32>
    %26 = vector.shape_cast %25 : vector<8xf32> to vector<8x1xf32>
    %27 = vector.broadcast %26 : vector<8x1xf32> to vector<8x8xf32>
    %28 = arith.subf %24, %27 : vector<8x8xf32>
    %29 = math.exp %28 : vector<8x8xf32>
    %cst_12 = arith.constant dense<0.000000e+00> : vector<8xf32>
    %30 = vector.multi_reduction <add>, %29, %cst_12 [1] : vector<8x8xf32> to vector<8xf32>
    %31 = vector.shape_cast %30 : vector<8xf32> to vector<8x1xf32>
    %32 = tpu.reciprocal %31 {approx = true} : vector<8x1xf32> -> vector<8x1xf32>
    %33 = vector.broadcast %32 : vector<8x1xf32> to vector<8x8xf32>
    %34 = arith.mulf %29, %33 : vector<8x8xf32>
    %35 = arith.truncf %34 : vector<8x8xf32> to vector<8x8xbf16>
    %36 = arith.truncf %19 : vector<8x8xf32> to vector<8x8xbf16>
    %cst_13 = arith.constant dense<0.000000e+00> : vector<8x8xf32>
    %37 = tpu.matmul %35, %36, %cst_13 {dimension_numbers = #tpu.dot_dimension_numbers<[1], [0], [0], [1], [0, 0, 1, 1], [], []>} : vector<8x8xbf16>, vector<8x8xbf16>, vector<8x8xf32> -> vector<8x8xf32>
    %38 = vector.extract_strided_slice %14 {offsets = [0, 8], sizes = [8, 8], strides = [1, 1]} : vector<8x32xf32> to vector<8x8xf32>
    %39 = vector.extract_strided_slice %15 {offsets = [0, 8], sizes = [8, 8], strides = [1, 1]} : vector<8x32xf32> to vector<8x8xf32>
    %40 = vector.extract_strided_slice %16 {offsets = [0, 8], sizes = [8, 8], strides = [1, 1]} : vector<8x32xf32> to vector<8x8xf32>
    %41 = arith.truncf %38 : vector<8x8xf32> to vector<8x8xbf16>
    %42 = arith.truncf %39 : vector<8x8xf32> to vector<8x8xbf16>
    %cst_14 = arith.constant dense<0.000000e+00> : vector<8x8xf32>
    %43 = tpu.matmul %41, %42, %cst_14 {dimension_numbers = #tpu.dot_dimension_numbers<[1], [1], [0], [0], [0, 0, 1, 0], [], []>} : vector<8x8xbf16>, vector<8x8xbf16>, vector<8x8xf32> -> vector<8x8xf32>
    %cst_15 = arith.constant 0.353553385 : f32
    %44 = vector.broadcast %cst_15 : f32 to vector<8x8xf32>
    %45 = arith.mulf %43, %44 : vector<8x8xf32>
    %cst_16 = arith.constant dense<0xFF800000> : vector<8xf32>
    %46 = vector.multi_reduction <maximumf>, %45, %cst_16 [1] : vector<8x8xf32> to vector<8xf32>
    %47 = vector.shape_cast %46 : vector<8xf32> to vector<8x1xf32>
    %48 = vector.broadcast %47 : vector<8x1xf32> to vector<8x8xf32>
    %49 = arith.subf %45, %48 : vector<8x8xf32>
    %50 = math.exp %49 : vector<8x8xf32>
    %cst_17 = arith.constant dense<0.000000e+00> : vector<8xf32>
    %51 = vector.multi_reduction <add>, %50, %cst_17 [1] : vector<8x8xf32> to vector<8xf32>
    %52 = vector.shape_cast %51 : vector<8xf32> to vector<8x1xf32>
    %53 = tpu.reciprocal %52 {approx = true} : vector<8x1xf32> -> vector<8x1xf32>
    %54 = vector.broadcast %53 : vector<8x1xf32> to vector<8x8xf32>
    %55 = arith.mulf %50, %54 : vector<8x8xf32>
    %56 = arith.truncf %55 : vector<8x8xf32> to vector<8x8xbf16>
    %57 = arith.truncf %40 : vector<8x8xf32> to vector<8x8xbf16>
    %cst_18 = arith.constant dense<0.000000e+00> : vector<8x8xf32>
    %58 = tpu.matmul %56, %57, %cst_18 {dimension_numbers = #tpu.dot_dimension_numbers<[1], [0], [0], [1], [0, 0, 1, 1], [], []>} : vector<8x8xbf16>, vector<8x8xbf16>, vector<8x8xf32> -> vector<8x8xf32>
    %59 = vector.extract_strided_slice %14 {offsets = [0, 16], sizes = [8, 8], strides = [1, 1]} : vector<8x32xf32> to vector<8x8xf32>
    %60 = vector.extract_strided_slice %15 {offsets = [0, 16], sizes = [8, 8], strides = [1, 1]} : vector<8x32xf32> to vector<8x8xf32>
    %61 = vector.extract_strided_slice %16 {offsets = [0, 16], sizes = [8, 8], strides = [1, 1]} : vector<8x32xf32> to vector<8x8xf32>
    %62 = arith.truncf %59 : vector<8x8xf32> to vector<8x8xbf16>
    %63 = arith.truncf %60 : vector<8x8xf32> to vector<8x8xbf16>
    %cst_19 = arith.constant dense<0.000000e+00> : vector<8x8xf32>
    %64 = tpu.matmul %62, %63, %cst_19 {dimension_numbers = #tpu.dot_dimension_numbers<[1], [1], [0], [0], [0, 0, 1, 0], [], []>} : vector<8x8xbf16>, vector<8x8xbf16>, vector<8x8xf32> -> vector<8x8xf32>
    %cst_20 = arith.constant 0.353553385 : f32
    %65 = vector.broadcast %cst_20 : f32 to vector<8x8xf32>
    %66 = arith.mulf %64, %65 : vector<8x8xf32>
    %cst_21 = arith.constant dense<0xFF800000> : vector<8xf32>
    %67 = vector.multi_reduction <maximumf>, %66, %cst_21 [1] : vector<8x8xf32> to vector<8xf32>
    %68 = vector.shape_cast %67 : vector<8xf32> to vector<8x1xf32>
    %69 = vector.broadcast %68 : vector<8x1xf32> to vector<8x8xf32>
    %70 = arith.subf %66, %69 : vector<8x8xf32>
    %71 = math.exp %70 : vector<8x8xf32>
    %cst_22 = arith.constant dense<0.000000e+00> : vector<8xf32>
    %72 = vector.multi_reduction <add>, %71, %cst_22 [1] : vector<8x8xf32> to vector<8xf32>
    %73 = vector.shape_cast %72 : vector<8xf32> to vector<8x1xf32>
    %74 = tpu.reciprocal %73 {approx = true} : vector<8x1xf32> -> vector<8x1xf32>
    %75 = vector.broadcast %74 : vector<8x1xf32> to vector<8x8xf32>
    %76 = arith.mulf %71, %75 : vector<8x8xf32>
    %77 = arith.truncf %76 : vector<8x8xf32> to vector<8x8xbf16>
    %78 = arith.truncf %61 : vector<8x8xf32> to vector<8x8xbf16>
    %cst_23 = arith.constant dense<0.000000e+00> : vector<8x8xf32>
    %79 = tpu.matmul %77, %78, %cst_23 {dimension_numbers = #tpu.dot_dimension_numbers<[1], [0], [0], [1], [0, 0, 1, 1], [], []>} : vector<8x8xbf16>, vector<8x8xbf16>, vector<8x8xf32> -> vector<8x8xf32>
    %80 = vector.extract_strided_slice %14 {offsets = [0, 24], sizes = [8, 8], strides = [1, 1]} : vector<8x32xf32> to vector<8x8xf32>
    %81 = vector.extract_strided_slice %15 {offsets = [0, 24], sizes = [8, 8], strides = [1, 1]} : vector<8x32xf32> to vector<8x8xf32>
    %82 = vector.extract_strided_slice %16 {offsets = [0, 24], sizes = [8, 8], strides = [1, 1]} : vector<8x32xf32> to vector<8x8xf32>
    %83 = arith.truncf %80 : vector<8x8xf32> to vector<8x8xbf16>
    %84 = arith.truncf %81 : vector<8x8xf32> to vector<8x8xbf16>
    %cst_24 = arith.constant dense<0.000000e+00> : vector<8x8xf32>
    %85 = tpu.matmul %83, %84, %cst_24 {dimension_numbers = #tpu.dot_dimension_numbers<[1], [1], [0], [0], [0, 0, 1, 0], [], []>} : vector<8x8xbf16>, vector<8x8xbf16>, vector<8x8xf32> -> vector<8x8xf32>
    %cst_25 = arith.constant 0.353553385 : f32
    %86 = vector.broadcast %cst_25 : f32 to vector<8x8xf32>
    %87 = arith.mulf %85, %86 : vector<8x8xf32>
    %cst_26 = arith.constant dense<0xFF800000> : vector<8xf32>
    %88 = vector.multi_reduction <maximumf>, %87, %cst_26 [1] : vector<8x8xf32> to vector<8xf32>
    %89 = vector.shape_cast %88 : vector<8xf32> to vector<8x1xf32>
    %90 = vector.broadcast %89 : vector<8x1xf32> to vector<8x8xf32>
    %91 = arith.subf %87, %90 : vector<8x8xf32>
    %92 = math.exp %91 : vector<8x8xf32>
    %cst_27 = arith.constant dense<0.000000e+00> : vector<8xf32>
    %93 = vector.multi_reduction <add>, %92, %cst_27 [1] : vector<8x8xf32> to vector<8xf32>
    %94 = vector.shape_cast %93 : vector<8xf32> to vector<8x1xf32>
    %95 = tpu.reciprocal %94 {approx = true} : vector<8x1xf32> -> vector<8x1xf32>
    %96 = vector.broadcast %95 : vector<8x1xf32> to vector<8x8xf32>
    %97 = arith.mulf %92, %96 : vector<8x8xf32>
    %98 = arith.truncf %97 : vector<8x8xf32> to vector<8x8xbf16>
    %99 = arith.truncf %82 : vector<8x8xf32> to vector<8x8xbf16>
    %cst_28 = arith.constant dense<0.000000e+00> : vector<8x8xf32>
    %100 = tpu.matmul %98, %99, %cst_28 {dimension_numbers = #tpu.dot_dimension_numbers<[1], [0], [0], [1], [0, 0, 1, 1], [], []>} : vector<8x8xbf16>, vector<8x8xbf16>, vector<8x8xf32> -> vector<8x8xf32>
    %101 = tpu.concatenate %37, %58, %79, %100 in 1 : vector<8x8xf32>, vector<8x8xf32>, vector<8x8xf32>, vector<8x8xf32> -> vector<8x32xf32>
    %c0_29 = arith.constant 0 : index
    %c0_30 = arith.constant 0 : index
    %c0_31 = arith.constant 0 : index
    %102 = vector.load %arg5[%c0_29, %c0_30, %c0_31] : memref<1x32x32xf32, #tpu.memory_space<vmem>>, vector<1x32x32xf32>
    %103 = vector.shape_cast %102 : vector<1x32x32xf32> to vector<32x32xf32>
    %104 = arith.truncf %101 : vector<8x32xf32> to vector<8x32xbf16>
    %105 = arith.truncf %103 : vector<32x32xf32> to vector<32x32xbf16>
    %cst_32 = arith.constant dense<0.000000e+00> : vector<8x32xf32>
    %106 = tpu.matmul %104, %105, %cst_32 {dimension_numbers = #tpu.dot_dimension_numbers<[1], [0], [0], [1], [0, 0, 1, 1], [], []>} : vector<8x32xbf16>, vector<32x32xbf16>, vector<8x32xf32> -> vector<8x32xf32>
    %c0_33 = arith.constant 0 : index
    %c0_34 = arith.constant 0 : index
    %c0_35 = arith.constant 0 : index
    %107 = vector.load %arg6[%c0_33, %c0_34, %c0_35] : memref<1x1x32xf32, #tpu.memory_space<vmem>>, vector<1x1x32xf32>
    %108 = vector.shape_cast %107 : vector<1x1x32xf32> to vector<1x32xf32>
    %109 = vector.broadcast %108 : vector<1x32xf32> to vector<8x32xf32>
    %110 = arith.addf %106, %109 : vector<8x32xf32>
    %111 = arith.addf %110, %4 : vector<8x32xf32>
    %c0_36 = arith.constant 0 : index
    %c0_37 = arith.constant 0 : index
    %c0_38 = arith.constant 0 : index
    %112 = vector.load %arg7[%c0_36, %c0_37, %c0_38] : memref<1x1x32xf32, #tpu.memory_space<vmem>>, vector<1x1x32xf32>
    %113 = vector.shape_cast %112 : vector<1x1x32xf32> to vector<1x32xf32>
    %c0_39 = arith.constant 0 : index
    %c0_40 = arith.constant 0 : index
    %c0_41 = arith.constant 0 : index
    %114 = vector.load %arg8[%c0_39, %c0_40, %c0_41] : memref<1x1x32xf32, #tpu.memory_space<vmem>>, vector<1x1x32xf32>
    %115 = vector.shape_cast %114 : vector<1x1x32xf32> to vector<1x32xf32>
    %cst_42 = arith.constant dense<0.000000e+00> : vector<8xf32>
    %116 = vector.multi_reduction <add>, %111, %cst_42 [1] : vector<8x32xf32> to vector<8xf32>
    %117 = vector.shape_cast %116 : vector<8xf32> to vector<8x1xf32>
    %cst_43 = arith.constant 3.200000e+01 : f32
    %118 = vector.broadcast %cst_43 : f32 to vector<8x1xf32>
    %119 = arith.divf %117, %118 : vector<8x1xf32>
    %120 = vector.broadcast %119 : vector<8x1xf32> to vector<8x32xf32>
    %121 = arith.subf %111, %120 : vector<8x32xf32>
    %122 = arith.mulf %121, %121 : vector<8x32xf32>
    %cst_44 = arith.constant dense<0.000000e+00> : vector<8xf32>
    %123 = vector.multi_reduction <add>, %122, %cst_44 [1] : vector<8x32xf32> to vector<8xf32>
    %124 = vector.shape_cast %123 : vector<8xf32> to vector<8x1xf32>
    %cst_45 = arith.constant 3.200000e+01 : f32
    %125 = vector.broadcast %cst_45 : f32 to vector<8x1xf32>
    %126 = arith.divf %124, %125 : vector<8x1xf32>
    %127 = vector.broadcast %119 : vector<8x1xf32> to vector<8x32xf32>
    %128 = arith.subf %111, %127 : vector<8x32xf32>
    %cst_46 = arith.constant 9.99999974E-6 : f32
    %129 = vector.broadcast %cst_46 : f32 to vector<8x1xf32>
    %130 = arith.addf %126, %129 : vector<8x1xf32>
    %131 = math.rsqrt %130 : vector<8x1xf32>
    %132 = vector.broadcast %131 : vector<8x1xf32> to vector<8x32xf32>
    %133 = arith.mulf %128, %132 : vector<8x32xf32>
    %134 = vector.broadcast %113 : vector<1x32xf32> to vector<8x32xf32>
    %135 = arith.mulf %134, %133 : vector<8x32xf32>
    %136 = vector.broadcast %115 : vector<1x32xf32> to vector<8x32xf32>
    %137 = arith.addf %135, %136 : vector<8x32xf32>
    %c0_47 = arith.constant 0 : index
    %c0_48 = arith.constant 0 : index
    %c0_49 = arith.constant 0 : index
    %138 = vector.load %arg9[%c0_47, %c0_48, %c0_49] : memref<1x32x64xf32, #tpu.memory_space<vmem>>, vector<1x32x64xf32>
    %139 = vector.shape_cast %138 : vector<1x32x64xf32> to vector<32x64xf32>
    %140 = arith.truncf %137 : vector<8x32xf32> to vector<8x32xbf16>
    %141 = arith.truncf %139 : vector<32x64xf32> to vector<32x64xbf16>
    %cst_50 = arith.constant dense<0.000000e+00> : vector<8x64xf32>
    %142 = tpu.matmul %140, %141, %cst_50 {dimension_numbers = #tpu.dot_dimension_numbers<[1], [0], [0], [1], [0, 0, 1, 1], [], []>} : vector<8x32xbf16>, vector<32x64xbf16>, vector<8x64xf32> -> vector<8x64xf32>
    %c0_51 = arith.constant 0 : index
    %c0_52 = arith.constant 0 : index
    %c0_53 = arith.constant 0 : index
    %143 = vector.load %arg10[%c0_51, %c0_52, %c0_53] : memref<1x1x64xf32, #tpu.memory_space<vmem>>, vector<1x1x64xf32>
    %144 = vector.shape_cast %143 : vector<1x1x64xf32> to vector<1x64xf32>
    %145 = vector.broadcast %144 : vector<1x64xf32> to vector<8x64xf32>
    %146 = arith.addf %142, %145 : vector<8x64xf32>
    %cst_54 = arith.constant 0.000000e+00 : f32
    %147 = vector.broadcast %cst_54 : f32 to vector<8x64xf32>
    %148 = arith.maximumf %146, %147 : vector<8x64xf32>
    %c0_55 = arith.constant 0 : index
    %c0_56 = arith.constant 0 : index
    %c0_57 = arith.constant 0 : index
    %149 = vector.load %arg11[%c0_55, %c0_56, %c0_57] : memref<1x64x32xf32, #tpu.memory_space<vmem>>, vector<1x64x32xf32>
    %150 = vector.shape_cast %149 : vector<1x64x32xf32> to vector<64x32xf32>
    %151 = arith.truncf %148 : vector<8x64xf32> to vector<8x64xbf16>
    %152 = arith.truncf %150 : vector<64x32xf32> to vector<64x32xbf16>
    %cst_58 = arith.constant dense<0.000000e+00> : vector<8x32xf32>
    %153 = tpu.matmul %151, %152, %cst_58 {dimension_numbers = #tpu.dot_dimension_numbers<[1], [0], [0], [1], [0, 0, 1, 1], [], []>} : vector<8x64xbf16>, vector<64x32xbf16>, vector<8x32xf32> -> vector<8x32xf32>
    %c0_59 = arith.constant 0 : index
    %c0_60 = arith.constant 0 : index
    %c0_61 = arith.constant 0 : index
    %154 = vector.load %arg12[%c0_59, %c0_60, %c0_61] : memref<1x1x32xf32, #tpu.memory_space<vmem>>, vector<1x1x32xf32>
    %155 = vector.shape_cast %154 : vector<1x1x32xf32> to vector<1x32xf32>
    %156 = vector.broadcast %155 : vector<1x32xf32> to vector<8x32xf32>
    %157 = arith.addf %153, %156 : vector<8x32xf32>
    %158 = arith.addf %157, %137 : vector<8x32xf32>
    %c0_62 = arith.constant 0 : index
    %c0_63 = arith.constant 0 : index
    %c0_64 = arith.constant 0 : index
    %159 = vector.load %arg13[%c0_62, %c0_63, %c0_64] : memref<1x1x32xf32, #tpu.memory_space<vmem>>, vector<1x1x32xf32>
    %160 = vector.shape_cast %159 : vector<1x1x32xf32> to vector<1x32xf32>
    %c0_65 = arith.constant 0 : index
    %c0_66 = arith.constant 0 : index
    %c0_67 = arith.constant 0 : index
    %161 = vector.load %arg14[%c0_65, %c0_66, %c0_67] : memref<1x1x32xf32, #tpu.memory_space<vmem>>, vector<1x1x32xf32>
    %162 = vector.shape_cast %161 : vector<1x1x32xf32> to vector<1x32xf32>
    %cst_68 = arith.constant dense<0.000000e+00> : vector<8xf32>
    %163 = vector.multi_reduction <add>, %158, %cst_68 [1] : vector<8x32xf32> to vector<8xf32>
    %164 = vector.shape_cast %163 : vector<8xf32> to vector<8x1xf32>
    %cst_69 = arith.constant 3.200000e+01 : f32
    %165 = vector.broadcast %cst_69 : f32 to vector<8x1xf32>
    %166 = arith.divf %164, %165 : vector<8x1xf32>
    %167 = vector.broadcast %166 : vector<8x1xf32> to vector<8x32xf32>
    %168 = arith.subf %158, %167 : vector<8x32xf32>
    %169 = arith.mulf %168, %168 : vector<8x32xf32>
    %cst_70 = arith.constant dense<0.000000e+00> : vector<8xf32>
    %170 = vector.multi_reduction <add>, %169, %cst_70 [1] : vector<8x32xf32> to vector<8xf32>
    %171 = vector.shape_cast %170 : vector<8xf32> to vector<8x1xf32>
    %cst_71 = arith.constant 3.200000e+01 : f32
    %172 = vector.broadcast %cst_71 : f32 to vector<8x1xf32>
    %173 = arith.divf %171, %172 : vector<8x1xf32>
    %174 = vector.broadcast %166 : vector<8x1xf32> to vector<8x32xf32>
    %175 = arith.subf %158, %174 : vector<8x32xf32>
    %cst_72 = arith.constant 9.99999974E-6 : f32
    %176 = vector.broadcast %cst_72 : f32 to vector<8x1xf32>
    %177 = arith.addf %173, %176 : vector<8x1xf32>
    %178 = math.rsqrt %177 : vector<8x1xf32>
    %179 = vector.broadcast %178 : vector<8x1xf32> to vector<8x32xf32>
    %180 = arith.mulf %175, %179 : vector<8x32xf32>
    %181 = vector.broadcast %160 : vector<1x32xf32> to vector<8x32xf32>
    %182 = arith.mulf %181, %180 : vector<8x32xf32>
    %183 = vector.broadcast %162 : vector<1x32xf32> to vector<8x32xf32>
    %184 = arith.addf %182, %183 : vector<8x32xf32>
    %c0_73 = arith.constant 0 : index
    %c0_74 = arith.constant 0 : index
    %c0_75 = arith.constant 0 : index
    %185 = vector.load %arg15[%c0_73, %c0_74, %c0_75] : memref<1x8x32xf32, #tpu.memory_space<vmem>>, vector<1x8x32xf32>
    %186 = vector.shape_cast %185 : vector<1x8x32xf32> to vector<8x32xf32>
    %187 = vector.shape_cast %184 : vector<8x32xf32> to vector<1x8x32xf32>
    tpu.vector_store %arg15[%c0_73, %c0_74, %c0_75], %187 {strides = array<i32>} : memref<1x8x32xf32, #tpu.memory_space<vmem>>, vector<1x8x32xf32>,
    return
  }
  func.func @transform_0(%arg0: i32, %arg1: i32) -> (i32, i32, i32) {
    %c0_i32 = arith.constant 0 : i32
    %c0_i32_0 = arith.constant 0 : i32
    %c0_i32_1 = arith.constant 0 : i32
    return %arg0, %c0_i32, %c0_i32_0 : i32, i32, i32
  }
  func.func @transform_1(%arg0: i32, %arg1: i32) -> (i32, i32, i32) {
    %c0_i32 = arith.constant 0 : i32
    %c0_i32_0 = arith.constant 0 : i32
    %c0_i32_1 = arith.constant 0 : i32
    return %arg1, %c0_i32, %c0_i32_0 : i32, i32, i32
  }
  func.func @transform_2(%arg0: i32, %arg1: i32) -> (i32, i32, i32) {
    %c0_i32 = arith.constant 0 : i32
    %c0_i32_0 = arith.constant 0 : i32
    %c0_i32_1 = arith.constant 0 : i32
    return %arg1, %c0_i32, %c0_i32_0 : i32, i32, i32
  }
  func.func @transform_3(%arg0: i32, %arg1: i32) -> (i32, i32, i32) {
    %c0_i32 = arith.constant 0 : i32
    %c0_i32_0 = arith.constant 0 : i32
    %c0_i32_1 = arith.constant 0 : i32
    return %arg1, %c0_i32, %c0_i32_0 : i32, i32, i32
  }
  func.func @transform_4(%arg0: i32, %arg1: i32) -> (i32, i32, i32) {
    %c0_i32 = arith.constant 0 : i32
    %c0_i32_0 = arith.constant 0 : i32
    %c0_i32_1 = arith.constant 0 : i32
    return %arg1, %c0_i32, %c0_i32_0 : i32, i32, i32
  }
  func.func @transform_5(%arg0: i32, %arg1: i32) -> (i32, i32, i32) {
    %c0_i32 = arith.constant 0 : i32
    %c0_i32_0 = arith.constant 0 : i32
    %c0_i32_1 = arith.constant 0 : i32
    return %arg1, %c0_i32, %c0_i32_0 : i32, i32, i32
  }
  func.func @transform_6(%arg0: i32, %arg1: i32) -> (i32, i32, i32) {
    %c0_i32 = arith.constant 0 : i32
    %c0_i32_0 = arith.constant 0 : i32
    %c0_i32_1 = arith.constant 0 : i32
    return %arg1, %c0_i32, %c0_i32_0 : i32, i32, i32
  }
  func.func @transform_7(%arg0: i32, %arg1: i32) -> (i32, i32, i32) {
    %c0_i32 = arith.constant 0 : i32
    %c0_i32_0 = arith.constant 0 : i32
    %c0_i32_1 = arith.constant 0 : i32
    return %arg1, %c0_i32, %c0_i32_0 : i32, i32, i32
  }
  func.func @transform_8(%arg0: i32, %arg1: i32) -> (i32, i32, i32) {
    %c0_i32 = arith.constant 0 : i32
    %c0_i32_0 = arith.constant 0 : i32
    %c0_i32_1 = arith.constant 0 : i32
    return %arg1, %c0_i32, %c0_i32_0 : i32, i32, i32
  }
  func.func @transform_9(%arg0: i32, %arg1: i32) -> (i32, i32, i32) {
    %c0_i32 = arith.constant 0 : i32
    %c0_i32_0 = arith.constant 0 : i32
    %c0_i32_1 = arith.constant 0 : i32
    return %arg1, %c0_i32, %c0_i32_0 : i32, i32, i32
  }
  func.func @transform_10(%arg0: i32, %arg1: i32) -> (i32, i32, i32) {
    %c0_i32 = arith.constant 0 : i32
    %c0_i32_0 = arith.constant 0 : i32
    %c0_i32_1 = arith.constant 0 : i32
    return %arg1, %c0_i32, %c0_i32_0 : i32, i32, i32
  }
  func.func @transform_11(%arg0: i32, %arg1: i32) -> (i32, i32, i32) {
    %c0_i32 = arith.constant 0 : i32
    %c0_i32_0 = arith.constant 0 : i32
    %c0_i32_1 = arith.constant 0 : i32
    return %arg1, %c0_i32, %c0_i32_0 : i32, i32, i32
  }
  func.func @transform_12(%arg0: i32, %arg1: i32) -> (i32, i32, i32) {
    %c0_i32 = arith.constant 0 : i32
    %c0_i32_0 = arith.constant 0 : i32
    %c0_i32_1 = arith.constant 0 : i32
    return %arg1, %c0_i32, %c0_i32_0 : i32, i32, i32
  }
  func.func @transform_13(%arg0: i32, %arg1: i32) -> (i32, i32, i32) {
    %c0_i32 = arith.constant 0 : i32
    %c0_i32_0 = arith.constant 0 : i32
    %c0_i32_1 = arith.constant 0 : i32
    return %arg0, %c0_i32, %c0_i32_0 : i32, i32, i32
  }
}

module attributes {stable_mosaic.version = 11 : i64} {
  func.func @kernel(%arg0: i32, %arg1: i32, %arg2: memref<1x8x32xf32, #tpu.memory_space<vmem>>, %arg3: memref<1x8x32xf32, #tpu.memory_space<vmem>>, %arg4: memref<1x32x96xf32, #tpu.memory_space<vmem>>, %arg5: memref<1x1x96xf32, #tpu.memory_space<vmem>>, %arg6: memref<1x32x32xf32, #tpu.memory_space<vmem>>, %arg7: memref<1x1x32xf32, #tpu.memory_space<vmem>>, %arg8: memref<1x1x32xf32, #tpu.memory_space<vmem>>, %arg9: memref<1x1x32xf32, #tpu.memory_space<vmem>>, %arg10: memref<1x32x64xf32, #tpu.memory_space<vmem>>, %arg11: memref<1x1x64xf32, #tpu.memory_space<vmem>>, %arg12: memref<1x32x32xf32, #tpu.memory_space<vmem>>, %arg13: memref<1x1x32xf32, #tpu.memory_space<vmem>>, %arg14: memref<1x32x32xf32, #tpu.memory_space<vmem>>, %arg15: memref<1x1x32xf32, #tpu.memory_space<vmem>>, %arg16: memref<1x1x32xf32, #tpu.memory_space<vmem>>, %arg17: memref<1x1x32xf32, #tpu.memory_space<vmem>>, %arg18: memref<1x32x64xf32, #tpu.memory_space<vmem>>, %arg19: memref<1x1x64xf32, #tpu.memory_space<vmem>>, %arg20: memref<1x64x32xf32, #tpu.memory_space<vmem>>, %arg21: memref<1x1x32xf32, #tpu.memory_space<vmem>>, %arg22: memref<1x1x32xf32, #tpu.memory_space<vmem>>, %arg23: memref<1x1x32xf32, #tpu.memory_space<vmem>>, %arg24: memref<32x128xf32, #tpu.memory_space<vmem>>, %arg25: memref<1x128xf32, #tpu.memory_space<vmem>>, %arg26: memref<1x8x128xf32, #tpu.memory_space<vmem>>, %arg27: memref<8x32xf32, #tpu.memory_space<vmem>>) attributes {dimension_semantics = [#tpu.dimension_semantics<parallel>, #tpu.dimension_semantics<arbitrary>], iteration_bounds = array<i64: 2, 2>, scalar_prefetch = 0 : i64, scratch_operands = 1 : i64, tpu.core_type = #tpu.core_type<tc>, window_params = [{transform_indices = @transform_0, window_bounds = array<i64: 1, 8, 32>}, {transform_indices = @transform_1, window_bounds = array<i64: 1, 8, 32>}, {transform_indices = @transform_2, window_bounds = array<i64: 1, 32, 96>}, {transform_indices = @transform_3, window_bounds = array<i64: 1, 1, 96>}, {transform_indices = @transform_4, window_bounds = array<i64: 1, 32, 32>}, {transform_indices = @transform_5, window_bounds = array<i64: 1, 1, 32>}, {transform_indices = @transform_6, window_bounds = array<i64: 1, 1, 32>}, {transform_indices = @transform_7, window_bounds = array<i64: 1, 1, 32>}, {transform_indices = @transform_8, window_bounds = array<i64: 1, 32, 64>}, {transform_indices = @transform_9, window_bounds = array<i64: 1, 1, 64>}, {transform_indices = @transform_10, window_bounds = array<i64: 1, 32, 32>}, {transform_indices = @transform_11, window_bounds = array<i64: 1, 1, 32>}, {transform_indices = @transform_12, window_bounds = array<i64: 1, 32, 32>}, {transform_indices = @transform_13, window_bounds = array<i64: 1, 1, 32>}, {transform_indices = @transform_14, window_bounds = array<i64: 1, 1, 32>}, {transform_indices = @transform_15, window_bounds = array<i64: 1, 1, 32>}, {transform_indices = @transform_16, window_bounds = array<i64: 1, 32, 64>}, {transform_indices = @transform_17, window_bounds = array<i64: 1, 1, 64>}, {transform_indices = @transform_18, window_bounds = array<i64: 1, 64, 32>}, {transform_indices = @transform_19, window_bounds = array<i64: 1, 1, 32>}, {transform_indices = @transform_20, window_bounds = array<i64: 1, 1, 32>}, {transform_indices = @transform_21, window_bounds = array<i64: 1, 1, 32>}, {pipeline_mode = #tpu.pipeline_mode<synchronous>, transform_indices = @transform_22, window_bounds = array<i64: 32, 128>}, {pipeline_mode = #tpu.pipeline_mode<synchronous>, transform_indices = @transform_23, window_bounds = array<i64: 1, 128>}, {transform_indices = @transform_24, window_bounds = array<i64: 1, 8, 128>}]} {
    %c0_i32 = arith.constant 0 : i32
    %0 = arith.cmpi eq, %arg1, %c0_i32 : i32
    %1 = arith.extui %0 : i1 to i32
    %c0_i32_0 = arith.constant 0 : i32
    %2 = arith.cmpi ne, %1, %c0_i32_0 : i32
    scf.if %2 {
      %c0_130 = arith.constant 0 : index
      %c0_131 = arith.constant 0 : index
      %c0_132 = arith.constant 0 : index
      %331 = vector.load %arg3[%c0_130, %c0_131, %c0_132] : memref<1x8x32xf32, #tpu.memory_space<vmem>>, vector<1x8x32xf32>
      %332 = vector.shape_cast %331 : vector<1x8x32xf32> to vector<8x32xf32>
      %c0_133 = arith.constant 0 : index
      %c0_134 = arith.constant 0 : index
      %333 = vector.load %arg27[%c0_133, %c0_134] : memref<8x32xf32, #tpu.memory_space<vmem>>, vector<8x32xf32>
      tpu.vector_store %arg27[%c0_133, %c0_134], %332 {strides = array<i32>} : memref<8x32xf32, #tpu.memory_space<vmem>>, vector<8x32xf32>,
    } else {
    }
    %c0 = arith.constant 0 : index
    %c0_1 = arith.constant 0 : index
    %3 = vector.load %arg27[%c0, %c0_1] : memref<8x32xf32, #tpu.memory_space<vmem>>, vector<8x32xf32>
    %c0_2 = arith.constant 0 : index
    %c0_3 = arith.constant 0 : index
    %c0_4 = arith.constant 0 : index
    %4 = vector.load %arg2[%c0_2, %c0_3, %c0_4] : memref<1x8x32xf32, #tpu.memory_space<vmem>>, vector<1x8x32xf32>
    %5 = vector.shape_cast %4 : vector<1x8x32xf32> to vector<8x32xf32>
    %c0_5 = arith.constant 0 : index
    %c0_6 = arith.constant 0 : index
    %c0_7 = arith.constant 0 : index
    %6 = vector.load %arg4[%c0_5, %c0_6, %c0_7] : memref<1x32x96xf32, #tpu.memory_space<vmem>>, vector<1x32x96xf32>
    %7 = vector.shape_cast %6 : vector<1x32x96xf32> to vector<32x96xf32>
    %8 = arith.truncf %3 : vector<8x32xf32> to vector<8x32xbf16>
    %9 = arith.truncf %7 : vector<32x96xf32> to vector<32x96xbf16>
    %cst = arith.constant dense<0.000000e+00> : vector<8x96xf32>
    %10 = tpu.matmul %8, %9, %cst {dimension_numbers = #tpu.dot_dimension_numbers<[1], [0], [0], [1], [0, 0, 1, 1], [], []>} : vector<8x32xbf16>, vector<32x96xbf16>, vector<8x96xf32> -> vector<8x96xf32>
    %c0_8 = arith.constant 0 : index
    %c0_9 = arith.constant 0 : index
    %c0_10 = arith.constant 0 : index
    %11 = vector.load %arg5[%c0_8, %c0_9, %c0_10] : memref<1x1x96xf32, #tpu.memory_space<vmem>>, vector<1x1x96xf32>
    %12 = vector.shape_cast %11 : vector<1x1x96xf32> to vector<1x96xf32>
    %13 = vector.broadcast %12 : vector<1x96xf32> to vector<8x96xf32>
    %14 = arith.addf %10, %13 : vector<8x96xf32>
    %15 = vector.extract_strided_slice %14 {offsets = [0, 0], sizes = [8, 32], strides = [1, 1]} : vector<8x96xf32> to vector<8x32xf32>
    %16 = vector.extract_strided_slice %14 {offsets = [0, 32], sizes = [8, 32], strides = [1, 1]} : vector<8x96xf32> to vector<8x32xf32>
    %17 = vector.extract_strided_slice %14 {offsets = [0, 64], sizes = [8, 32], strides = [1, 1]} : vector<8x96xf32> to vector<8x32xf32>
    %18 = vector.extract_strided_slice %15 {offsets = [0, 0], sizes = [8, 8], strides = [1, 1]} : vector<8x32xf32> to vector<8x8xf32>
    %19 = vector.extract_strided_slice %16 {offsets = [0, 0], sizes = [8, 8], strides = [1, 1]} : vector<8x32xf32> to vector<8x8xf32>
    %20 = vector.extract_strided_slice %17 {offsets = [0, 0], sizes = [8, 8], strides = [1, 1]} : vector<8x32xf32> to vector<8x8xf32>
    %21 = arith.truncf %18 : vector<8x8xf32> to vector<8x8xbf16>
    %22 = arith.truncf %19 : vector<8x8xf32> to vector<8x8xbf16>
    %cst_11 = arith.constant dense<0.000000e+00> : vector<8x8xf32>
    %23 = tpu.matmul %21, %22, %cst_11 {dimension_numbers = #tpu.dot_dimension_numbers<[1], [1], [0], [0], [0, 0, 1, 0], [], []>} : vector<8x8xbf16>, vector<8x8xbf16>, vector<8x8xf32> -> vector<8x8xf32>
    %cst_12 = arith.constant 0.353553385 : f32
    %24 = vector.broadcast %cst_12 : f32 to vector<8x8xf32>
    %25 = arith.mulf %23, %24 : vector<8x8xf32>
    %cst_13 = arith.constant dense<0xFF800000> : vector<8xf32>
    %26 = vector.multi_reduction <maximumf>, %25, %cst_13 [1] : vector<8x8xf32> to vector<8xf32>
    %27 = vector.shape_cast %26 : vector<8xf32> to vector<8x1xf32>
    %28 = vector.broadcast %27 : vector<8x1xf32> to vector<8x8xf32>
    %29 = arith.subf %25, %28 : vector<8x8xf32>
    %30 = math.exp %29 : vector<8x8xf32>
    %cst_14 = arith.constant dense<0.000000e+00> : vector<8xf32>
    %31 = vector.multi_reduction <add>, %30, %cst_14 [1] : vector<8x8xf32> to vector<8xf32>
    %32 = vector.shape_cast %31 : vector<8xf32> to vector<8x1xf32>
    %33 = tpu.reciprocal %32 {approx = true} : vector<8x1xf32> -> vector<8x1xf32>
    %34 = vector.broadcast %33 : vector<8x1xf32> to vector<8x8xf32>
    %35 = arith.mulf %30, %34 : vector<8x8xf32>
    %36 = arith.truncf %35 : vector<8x8xf32> to vector<8x8xbf16>
    %37 = arith.truncf %20 : vector<8x8xf32> to vector<8x8xbf16>
    %cst_15 = arith.constant dense<0.000000e+00> : vector<8x8xf32>
    %38 = tpu.matmul %36, %37, %cst_15 {dimension_numbers = #tpu.dot_dimension_numbers<[1], [0], [0], [1], [0, 0, 1, 1], [], []>} : vector<8x8xbf16>, vector<8x8xbf16>, vector<8x8xf32> -> vector<8x8xf32>
    %39 = vector.extract_strided_slice %15 {offsets = [0, 8], sizes = [8, 8], strides = [1, 1]} : vector<8x32xf32> to vector<8x8xf32>
    %40 = vector.extract_strided_slice %16 {offsets = [0, 8], sizes = [8, 8], strides = [1, 1]} : vector<8x32xf32> to vector<8x8xf32>
    %41 = vector.extract_strided_slice %17 {offsets = [0, 8], sizes = [8, 8], strides = [1, 1]} : vector<8x32xf32> to vector<8x8xf32>
    %42 = arith.truncf %39 : vector<8x8xf32> to vector<8x8xbf16>
    %43 = arith.truncf %40 : vector<8x8xf32> to vector<8x8xbf16>
    %cst_16 = arith.constant dense<0.000000e+00> : vector<8x8xf32>
    %44 = tpu.matmul %42, %43, %cst_16 {dimension_numbers = #tpu.dot_dimension_numbers<[1], [1], [0], [0], [0, 0, 1, 0], [], []>} : vector<8x8xbf16>, vector<8x8xbf16>, vector<8x8xf32> -> vector<8x8xf32>
    %cst_17 = arith.constant 0.353553385 : f32
    %45 = vector.broadcast %cst_17 : f32 to vector<8x8xf32>
    %46 = arith.mulf %44, %45 : vector<8x8xf32>
    %cst_18 = arith.constant dense<0xFF800000> : vector<8xf32>
    %47 = vector.multi_reduction <maximumf>, %46, %cst_18 [1] : vector<8x8xf32> to vector<8xf32>
    %48 = vector.shape_cast %47 : vector<8xf32> to vector<8x1xf32>
    %49 = vector.broadcast %48 : vector<8x1xf32> to vector<8x8xf32>
    %50 = arith.subf %46, %49 : vector<8x8xf32>
    %51 = math.exp %50 : vector<8x8xf32>
    %cst_19 = arith.constant dense<0.000000e+00> : vector<8xf32>
    %52 = vector.multi_reduction <add>, %51, %cst_19 [1] : vector<8x8xf32> to vector<8xf32>
    %53 = vector.shape_cast %52 : vector<8xf32> to vector<8x1xf32>
    %54 = tpu.reciprocal %53 {approx = true} : vector<8x1xf32> -> vector<8x1xf32>
    %55 = vector.broadcast %54 : vector<8x1xf32> to vector<8x8xf32>
    %56 = arith.mulf %51, %55 : vector<8x8xf32>
    %57 = arith.truncf %56 : vector<8x8xf32> to vector<8x8xbf16>
    %58 = arith.truncf %41 : vector<8x8xf32> to vector<8x8xbf16>
    %cst_20 = arith.constant dense<0.000000e+00> : vector<8x8xf32>
    %59 = tpu.matmul %57, %58, %cst_20 {dimension_numbers = #tpu.dot_dimension_numbers<[1], [0], [0], [1], [0, 0, 1, 1], [], []>} : vector<8x8xbf16>, vector<8x8xbf16>, vector<8x8xf32> -> vector<8x8xf32>
    %60 = vector.extract_strided_slice %15 {offsets = [0, 16], sizes = [8, 8], strides = [1, 1]} : vector<8x32xf32> to vector<8x8xf32>
    %61 = vector.extract_strided_slice %16 {offsets = [0, 16], sizes = [8, 8], strides = [1, 1]} : vector<8x32xf32> to vector<8x8xf32>
    %62 = vector.extract_strided_slice %17 {offsets = [0, 16], sizes = [8, 8], strides = [1, 1]} : vector<8x32xf32> to vector<8x8xf32>
    %63 = arith.truncf %60 : vector<8x8xf32> to vector<8x8xbf16>
    %64 = arith.truncf %61 : vector<8x8xf32> to vector<8x8xbf16>
    %cst_21 = arith.constant dense<0.000000e+00> : vector<8x8xf32>
    %65 = tpu.matmul %63, %64, %cst_21 {dimension_numbers = #tpu.dot_dimension_numbers<[1], [1], [0], [0], [0, 0, 1, 0], [], []>} : vector<8x8xbf16>, vector<8x8xbf16>, vector<8x8xf32> -> vector<8x8xf32>
    %cst_22 = arith.constant 0.353553385 : f32
    %66 = vector.broadcast %cst_22 : f32 to vector<8x8xf32>
    %67 = arith.mulf %65, %66 : vector<8x8xf32>
    %cst_23 = arith.constant dense<0xFF800000> : vector<8xf32>
    %68 = vector.multi_reduction <maximumf>, %67, %cst_23 [1] : vector<8x8xf32> to vector<8xf32>
    %69 = vector.shape_cast %68 : vector<8xf32> to vector<8x1xf32>
    %70 = vector.broadcast %69 : vector<8x1xf32> to vector<8x8xf32>
    %71 = arith.subf %67, %70 : vector<8x8xf32>
    %72 = math.exp %71 : vector<8x8xf32>
    %cst_24 = arith.constant dense<0.000000e+00> : vector<8xf32>
    %73 = vector.multi_reduction <add>, %72, %cst_24 [1] : vector<8x8xf32> to vector<8xf32>
    %74 = vector.shape_cast %73 : vector<8xf32> to vector<8x1xf32>
    %75 = tpu.reciprocal %74 {approx = true} : vector<8x1xf32> -> vector<8x1xf32>
    %76 = vector.broadcast %75 : vector<8x1xf32> to vector<8x8xf32>
    %77 = arith.mulf %72, %76 : vector<8x8xf32>
    %78 = arith.truncf %77 : vector<8x8xf32> to vector<8x8xbf16>
    %79 = arith.truncf %62 : vector<8x8xf32> to vector<8x8xbf16>
    %cst_25 = arith.constant dense<0.000000e+00> : vector<8x8xf32>
    %80 = tpu.matmul %78, %79, %cst_25 {dimension_numbers = #tpu.dot_dimension_numbers<[1], [0], [0], [1], [0, 0, 1, 1], [], []>} : vector<8x8xbf16>, vector<8x8xbf16>, vector<8x8xf32> -> vector<8x8xf32>
    %81 = vector.extract_strided_slice %15 {offsets = [0, 24], sizes = [8, 8], strides = [1, 1]} : vector<8x32xf32> to vector<8x8xf32>
    %82 = vector.extract_strided_slice %16 {offsets = [0, 24], sizes = [8, 8], strides = [1, 1]} : vector<8x32xf32> to vector<8x8xf32>
    %83 = vector.extract_strided_slice %17 {offsets = [0, 24], sizes = [8, 8], strides = [1, 1]} : vector<8x32xf32> to vector<8x8xf32>
    %84 = arith.truncf %81 : vector<8x8xf32> to vector<8x8xbf16>
    %85 = arith.truncf %82 : vector<8x8xf32> to vector<8x8xbf16>
    %cst_26 = arith.constant dense<0.000000e+00> : vector<8x8xf32>
    %86 = tpu.matmul %84, %85, %cst_26 {dimension_numbers = #tpu.dot_dimension_numbers<[1], [1], [0], [0], [0, 0, 1, 0], [], []>} : vector<8x8xbf16>, vector<8x8xbf16>, vector<8x8xf32> -> vector<8x8xf32>
    %cst_27 = arith.constant 0.353553385 : f32
    %87 = vector.broadcast %cst_27 : f32 to vector<8x8xf32>
    %88 = arith.mulf %86, %87 : vector<8x8xf32>
    %cst_28 = arith.constant dense<0xFF800000> : vector<8xf32>
    %89 = vector.multi_reduction <maximumf>, %88, %cst_28 [1] : vector<8x8xf32> to vector<8xf32>
    %90 = vector.shape_cast %89 : vector<8xf32> to vector<8x1xf32>
    %91 = vector.broadcast %90 : vector<8x1xf32> to vector<8x8xf32>
    %92 = arith.subf %88, %91 : vector<8x8xf32>
    %93 = math.exp %92 : vector<8x8xf32>
    %cst_29 = arith.constant dense<0.000000e+00> : vector<8xf32>
    %94 = vector.multi_reduction <add>, %93, %cst_29 [1] : vector<8x8xf32> to vector<8xf32>
    %95 = vector.shape_cast %94 : vector<8xf32> to vector<8x1xf32>
    %96 = tpu.reciprocal %95 {approx = true} : vector<8x1xf32> -> vector<8x1xf32>
    %97 = vector.broadcast %96 : vector<8x1xf32> to vector<8x8xf32>
    %98 = arith.mulf %93, %97 : vector<8x8xf32>
    %99 = arith.truncf %98 : vector<8x8xf32> to vector<8x8xbf16>
    %100 = arith.truncf %83 : vector<8x8xf32> to vector<8x8xbf16>
    %cst_30 = arith.constant dense<0.000000e+00> : vector<8x8xf32>
    %101 = tpu.matmul %99, %100, %cst_30 {dimension_numbers = #tpu.dot_dimension_numbers<[1], [0], [0], [1], [0, 0, 1, 1], [], []>} : vector<8x8xbf16>, vector<8x8xbf16>, vector<8x8xf32> -> vector<8x8xf32>
    %102 = tpu.concatenate %38, %59, %80, %101 in 1 : vector<8x8xf32>, vector<8x8xf32>, vector<8x8xf32>, vector<8x8xf32> -> vector<8x32xf32>
    %c0_31 = arith.constant 0 : index
    %c0_32 = arith.constant 0 : index
    %c0_33 = arith.constant 0 : index
    %103 = vector.load %arg6[%c0_31, %c0_32, %c0_33] : memref<1x32x32xf32, #tpu.memory_space<vmem>>, vector<1x32x32xf32>
    %104 = vector.shape_cast %103 : vector<1x32x32xf32> to vector<32x32xf32>
    %105 = arith.truncf %102 : vector<8x32xf32> to vector<8x32xbf16>
    %106 = arith.truncf %104 : vector<32x32xf32> to vector<32x32xbf16>
    %cst_34 = arith.constant dense<0.000000e+00> : vector<8x32xf32>
    %107 = tpu.matmul %105, %106, %cst_34 {dimension_numbers = #tpu.dot_dimension_numbers<[1], [0], [0], [1], [0, 0, 1, 1], [], []>} : vector<8x32xbf16>, vector<32x32xbf16>, vector<8x32xf32> -> vector<8x32xf32>
    %c0_35 = arith.constant 0 : index
    %c0_36 = arith.constant 0 : index
    %c0_37 = arith.constant 0 : index
    %108 = vector.load %arg7[%c0_35, %c0_36, %c0_37] : memref<1x1x32xf32, #tpu.memory_space<vmem>>, vector<1x1x32xf32>
    %109 = vector.shape_cast %108 : vector<1x1x32xf32> to vector<1x32xf32>
    %110 = vector.broadcast %109 : vector<1x32xf32> to vector<8x32xf32>
    %111 = arith.addf %107, %110 : vector<8x32xf32>
    %112 = arith.addf %111, %3 : vector<8x32xf32>
    %c0_38 = arith.constant 0 : index
    %c0_39 = arith.constant 0 : index
    %c0_40 = arith.constant 0 : index
    %113 = vector.load %arg8[%c0_38, %c0_39, %c0_40] : memref<1x1x32xf32, #tpu.memory_space<vmem>>, vector<1x1x32xf32>
    %114 = vector.shape_cast %113 : vector<1x1x32xf32> to vector<1x32xf32>
    %c0_41 = arith.constant 0 : index
    %c0_42 = arith.constant 0 : index
    %c0_43 = arith.constant 0 : index
    %115 = vector.load %arg9[%c0_41, %c0_42, %c0_43] : memref<1x1x32xf32, #tpu.memory_space<vmem>>, vector<1x1x32xf32>
    %116 = vector.shape_cast %115 : vector<1x1x32xf32> to vector<1x32xf32>
    %cst_44 = arith.constant dense<0.000000e+00> : vector<8xf32>
    %117 = vector.multi_reduction <add>, %112, %cst_44 [1] : vector<8x32xf32> to vector<8xf32>
    %118 = vector.shape_cast %117 : vector<8xf32> to vector<8x1xf32>
    %cst_45 = arith.constant 3.200000e+01 : f32
    %119 = vector.broadcast %cst_45 : f32 to vector<8x1xf32>
    %120 = arith.divf %118, %119 : vector<8x1xf32>
    %121 = vector.broadcast %120 : vector<8x1xf32> to vector<8x32xf32>
    %122 = arith.subf %112, %121 : vector<8x32xf32>
    %123 = arith.mulf %122, %122 : vector<8x32xf32>
    %cst_46 = arith.constant dense<0.000000e+00> : vector<8xf32>
    %124 = vector.multi_reduction <add>, %123, %cst_46 [1] : vector<8x32xf32> to vector<8xf32>
    %125 = vector.shape_cast %124 : vector<8xf32> to vector<8x1xf32>
    %cst_47 = arith.constant 3.200000e+01 : f32
    %126 = vector.broadcast %cst_47 : f32 to vector<8x1xf32>
    %127 = arith.divf %125, %126 : vector<8x1xf32>
    %128 = vector.broadcast %120 : vector<8x1xf32> to vector<8x32xf32>
    %129 = arith.subf %112, %128 : vector<8x32xf32>
    %cst_48 = arith.constant 9.99999974E-6 : f32
    %130 = vector.broadcast %cst_48 : f32 to vector<8x1xf32>
    %131 = arith.addf %127, %130 : vector<8x1xf32>
    %132 = math.rsqrt %131 : vector<8x1xf32>
    %133 = vector.broadcast %132 : vector<8x1xf32> to vector<8x32xf32>
    %134 = arith.mulf %129, %133 : vector<8x32xf32>
    %135 = vector.broadcast %114 : vector<1x32xf32> to vector<8x32xf32>
    %136 = arith.mulf %135, %134 : vector<8x32xf32>
    %137 = vector.broadcast %116 : vector<1x32xf32> to vector<8x32xf32>
    %138 = arith.addf %136, %137 : vector<8x32xf32>
    %c0_49 = arith.constant 0 : index
    %c0_50 = arith.constant 0 : index
    %c0_51 = arith.constant 0 : index
    %139 = vector.load %arg10[%c0_49, %c0_50, %c0_51] : memref<1x32x64xf32, #tpu.memory_space<vmem>>, vector<1x32x64xf32>
    %140 = vector.shape_cast %139 : vector<1x32x64xf32> to vector<32x64xf32>
    %141 = arith.truncf %5 : vector<8x32xf32> to vector<8x32xbf16>
    %142 = arith.truncf %140 : vector<32x64xf32> to vector<32x64xbf16>
    %cst_52 = arith.constant dense<0.000000e+00> : vector<8x64xf32>
    %143 = tpu.matmul %141, %142, %cst_52 {dimension_numbers = #tpu.dot_dimension_numbers<[1], [0], [0], [1], [0, 0, 1, 1], [], []>} : vector<8x32xbf16>, vector<32x64xbf16>, vector<8x64xf32> -> vector<8x64xf32>
    %c0_53 = arith.constant 0 : index
    %c0_54 = arith.constant 0 : index
    %c0_55 = arith.constant 0 : index
    %144 = vector.load %arg11[%c0_53, %c0_54, %c0_55] : memref<1x1x64xf32, #tpu.memory_space<vmem>>, vector<1x1x64xf32>
    %145 = vector.shape_cast %144 : vector<1x1x64xf32> to vector<1x64xf32>
    %146 = vector.broadcast %145 : vector<1x64xf32> to vector<8x64xf32>
    %147 = arith.addf %143, %146 : vector<8x64xf32>
    %c0_56 = arith.constant 0 : index
    %c0_57 = arith.constant 0 : index
    %c0_58 = arith.constant 0 : index
    %148 = vector.load %arg12[%c0_56, %c0_57, %c0_58] : memref<1x32x32xf32, #tpu.memory_space<vmem>>, vector<1x32x32xf32>
    %149 = vector.shape_cast %148 : vector<1x32x32xf32> to vector<32x32xf32>
    %150 = arith.truncf %138 : vector<8x32xf32> to vector<8x32xbf16>
    %151 = arith.truncf %149 : vector<32x32xf32> to vector<32x32xbf16>
    %cst_59 = arith.constant dense<0.000000e+00> : vector<8x32xf32>
    %152 = tpu.matmul %150, %151, %cst_59 {dimension_numbers = #tpu.dot_dimension_numbers<[1], [0], [0], [1], [0, 0, 1, 1], [], []>} : vector<8x32xbf16>, vector<32x32xbf16>, vector<8x32xf32> -> vector<8x32xf32>
    %c0_60 = arith.constant 0 : index
    %c0_61 = arith.constant 0 : index
    %c0_62 = arith.constant 0 : index
    %153 = vector.load %arg13[%c0_60, %c0_61, %c0_62] : memref<1x1x32xf32, #tpu.memory_space<vmem>>, vector<1x1x32xf32>
    %154 = vector.shape_cast %153 : vector<1x1x32xf32> to vector<1x32xf32>
    %155 = vector.broadcast %154 : vector<1x32xf32> to vector<8x32xf32>
    %156 = arith.addf %152, %155 : vector<8x32xf32>
    %157 = vector.extract_strided_slice %147 {offsets = [0, 0], sizes = [8, 32], strides = [1, 1]} : vector<8x64xf32> to vector<8x32xf32>
    %158 = vector.extract_strided_slice %147 {offsets = [0, 32], sizes = [8, 32], strides = [1, 1]} : vector<8x64xf32> to vector<8x32xf32>
    %159 = vector.extract_strided_slice %156 {offsets = [0, 0], sizes = [8, 8], strides = [1, 1]} : vector<8x32xf32> to vector<8x8xf32>
    %160 = vector.extract_strided_slice %157 {offsets = [0, 0], sizes = [8, 8], strides = [1, 1]} : vector<8x32xf32> to vector<8x8xf32>
    %161 = vector.extract_strided_slice %158 {offsets = [0, 0], sizes = [8, 8], strides = [1, 1]} : vector<8x32xf32> to vector<8x8xf32>
    %162 = arith.truncf %159 : vector<8x8xf32> to vector<8x8xbf16>
    %163 = arith.truncf %160 : vector<8x8xf32> to vector<8x8xbf16>
    %cst_63 = arith.constant dense<0.000000e+00> : vector<8x8xf32>
    %164 = tpu.matmul %162, %163, %cst_63 {dimension_numbers = #tpu.dot_dimension_numbers<[1], [1], [0], [0], [0, 0, 1, 0], [], []>} : vector<8x8xbf16>, vector<8x8xbf16>, vector<8x8xf32> -> vector<8x8xf32>
    %cst_64 = arith.constant 0.353553385 : f32
    %165 = vector.broadcast %cst_64 : f32 to vector<8x8xf32>
    %166 = arith.mulf %164, %165 : vector<8x8xf32>
    %cst_65 = arith.constant dense<0xFF800000> : vector<8xf32>
    %167 = vector.multi_reduction <maximumf>, %166, %cst_65 [1] : vector<8x8xf32> to vector<8xf32>
    %168 = vector.shape_cast %167 : vector<8xf32> to vector<8x1xf32>
    %169 = vector.broadcast %168 : vector<8x1xf32> to vector<8x8xf32>
    %170 = arith.subf %166, %169 : vector<8x8xf32>
    %171 = math.exp %170 : vector<8x8xf32>
    %cst_66 = arith.constant dense<0.000000e+00> : vector<8xf32>
    %172 = vector.multi_reduction <add>, %171, %cst_66 [1] : vector<8x8xf32> to vector<8xf32>
    %173 = vector.shape_cast %172 : vector<8xf32> to vector<8x1xf32>
    %174 = tpu.reciprocal %173 {approx = true} : vector<8x1xf32> -> vector<8x1xf32>
    %175 = vector.broadcast %174 : vector<8x1xf32> to vector<8x8xf32>
    %176 = arith.mulf %171, %175 : vector<8x8xf32>
    %177 = arith.truncf %176 : vector<8x8xf32> to vector<8x8xbf16>
    %178 = arith.truncf %161 : vector<8x8xf32> to vector<8x8xbf16>
    %cst_67 = arith.constant dense<0.000000e+00> : vector<8x8xf32>
    %179 = tpu.matmul %177, %178, %cst_67 {dimension_numbers = #tpu.dot_dimension_numbers<[1], [0], [0], [1], [0, 0, 1, 1], [], []>} : vector<8x8xbf16>, vector<8x8xbf16>, vector<8x8xf32> -> vector<8x8xf32>
    %180 = vector.extract_strided_slice %156 {offsets = [0, 8], sizes = [8, 8], strides = [1, 1]} : vector<8x32xf32> to vector<8x8xf32>
    %181 = vector.extract_strided_slice %157 {offsets = [0, 8], sizes = [8, 8], strides = [1, 1]} : vector<8x32xf32> to vector<8x8xf32>
    %182 = vector.extract_strided_slice %158 {offsets = [0, 8], sizes = [8, 8], strides = [1, 1]} : vector<8x32xf32> to vector<8x8xf32>
    %183 = arith.truncf %180 : vector<8x8xf32> to vector<8x8xbf16>
    %184 = arith.truncf %181 : vector<8x8xf32> to vector<8x8xbf16>
    %cst_68 = arith.constant dense<0.000000e+00> : vector<8x8xf32>
    %185 = tpu.matmul %183, %184, %cst_68 {dimension_numbers = #tpu.dot_dimension_numbers<[1], [1], [0], [0], [0, 0, 1, 0], [], []>} : vector<8x8xbf16>, vector<8x8xbf16>, vector<8x8xf32> -> vector<8x8xf32>
    %cst_69 = arith.constant 0.353553385 : f32
    %186 = vector.broadcast %cst_69 : f32 to vector<8x8xf32>
    %187 = arith.mulf %185, %186 : vector<8x8xf32>
    %cst_70 = arith.constant dense<0xFF800000> : vector<8xf32>
    %188 = vector.multi_reduction <maximumf>, %187, %cst_70 [1] : vector<8x8xf32> to vector<8xf32>
    %189 = vector.shape_cast %188 : vector<8xf32> to vector<8x1xf32>
    %190 = vector.broadcast %189 : vector<8x1xf32> to vector<8x8xf32>
    %191 = arith.subf %187, %190 : vector<8x8xf32>
    %192 = math.exp %191 : vector<8x8xf32>
    %cst_71 = arith.constant dense<0.000000e+00> : vector<8xf32>
    %193 = vector.multi_reduction <add>, %192, %cst_71 [1] : vector<8x8xf32> to vector<8xf32>
    %194 = vector.shape_cast %193 : vector<8xf32> to vector<8x1xf32>
    %195 = tpu.reciprocal %194 {approx = true} : vector<8x1xf32> -> vector<8x1xf32>
    %196 = vector.broadcast %195 : vector<8x1xf32> to vector<8x8xf32>
    %197 = arith.mulf %192, %196 : vector<8x8xf32>
    %198 = arith.truncf %197 : vector<8x8xf32> to vector<8x8xbf16>
    %199 = arith.truncf %182 : vector<8x8xf32> to vector<8x8xbf16>
    %cst_72 = arith.constant dense<0.000000e+00> : vector<8x8xf32>
    %200 = tpu.matmul %198, %199, %cst_72 {dimension_numbers = #tpu.dot_dimension_numbers<[1], [0], [0], [1], [0, 0, 1, 1], [], []>} : vector<8x8xbf16>, vector<8x8xbf16>, vector<8x8xf32> -> vector<8x8xf32>
    %201 = vector.extract_strided_slice %156 {offsets = [0, 16], sizes = [8, 8], strides = [1, 1]} : vector<8x32xf32> to vector<8x8xf32>
    %202 = vector.extract_strided_slice %157 {offsets = [0, 16], sizes = [8, 8], strides = [1, 1]} : vector<8x32xf32> to vector<8x8xf32>
    %203 = vector.extract_strided_slice %158 {offsets = [0, 16], sizes = [8, 8], strides = [1, 1]} : vector<8x32xf32> to vector<8x8xf32>
    %204 = arith.truncf %201 : vector<8x8xf32> to vector<8x8xbf16>
    %205 = arith.truncf %202 : vector<8x8xf32> to vector<8x8xbf16>
    %cst_73 = arith.constant dense<0.000000e+00> : vector<8x8xf32>
    %206 = tpu.matmul %204, %205, %cst_73 {dimension_numbers = #tpu.dot_dimension_numbers<[1], [1], [0], [0], [0, 0, 1, 0], [], []>} : vector<8x8xbf16>, vector<8x8xbf16>, vector<8x8xf32> -> vector<8x8xf32>
    %cst_74 = arith.constant 0.353553385 : f32
    %207 = vector.broadcast %cst_74 : f32 to vector<8x8xf32>
    %208 = arith.mulf %206, %207 : vector<8x8xf32>
    %cst_75 = arith.constant dense<0xFF800000> : vector<8xf32>
    %209 = vector.multi_reduction <maximumf>, %208, %cst_75 [1] : vector<8x8xf32> to vector<8xf32>
    %210 = vector.shape_cast %209 : vector<8xf32> to vector<8x1xf32>
    %211 = vector.broadcast %210 : vector<8x1xf32> to vector<8x8xf32>
    %212 = arith.subf %208, %211 : vector<8x8xf32>
    %213 = math.exp %212 : vector<8x8xf32>
    %cst_76 = arith.constant dense<0.000000e+00> : vector<8xf32>
    %214 = vector.multi_reduction <add>, %213, %cst_76 [1] : vector<8x8xf32> to vector<8xf32>
    %215 = vector.shape_cast %214 : vector<8xf32> to vector<8x1xf32>
    %216 = tpu.reciprocal %215 {approx = true} : vector<8x1xf32> -> vector<8x1xf32>
    %217 = vector.broadcast %216 : vector<8x1xf32> to vector<8x8xf32>
    %218 = arith.mulf %213, %217 : vector<8x8xf32>
    %219 = arith.truncf %218 : vector<8x8xf32> to vector<8x8xbf16>
    %220 = arith.truncf %203 : vector<8x8xf32> to vector<8x8xbf16>
    %cst_77 = arith.constant dense<0.000000e+00> : vector<8x8xf32>
    %221 = tpu.matmul %219, %220, %cst_77 {dimension_numbers = #tpu.dot_dimension_numbers<[1], [0], [0], [1], [0, 0, 1, 1], [], []>} : vector<8x8xbf16>, vector<8x8xbf16>, vector<8x8xf32> -> vector<8x8xf32>
    %222 = vector.extract_strided_slice %156 {offsets = [0, 24], sizes = [8, 8], strides = [1, 1]} : vector<8x32xf32> to vector<8x8xf32>
    %223 = vector.extract_strided_slice %157 {offsets = [0, 24], sizes = [8, 8], strides = [1, 1]} : vector<8x32xf32> to vector<8x8xf32>
    %224 = vector.extract_strided_slice %158 {offsets = [0, 24], sizes = [8, 8], strides = [1, 1]} : vector<8x32xf32> to vector<8x8xf32>
    %225 = arith.truncf %222 : vector<8x8xf32> to vector<8x8xbf16>
    %226 = arith.truncf %223 : vector<8x8xf32> to vector<8x8xbf16>
    %cst_78 = arith.constant dense<0.000000e+00> : vector<8x8xf32>
    %227 = tpu.matmul %225, %226, %cst_78 {dimension_numbers = #tpu.dot_dimension_numbers<[1], [1], [0], [0], [0, 0, 1, 0], [], []>} : vector<8x8xbf16>, vector<8x8xbf16>, vector<8x8xf32> -> vector<8x8xf32>
    %cst_79 = arith.constant 0.353553385 : f32
    %228 = vector.broadcast %cst_79 : f32 to vector<8x8xf32>
    %229 = arith.mulf %227, %228 : vector<8x8xf32>
    %cst_80 = arith.constant dense<0xFF800000> : vector<8xf32>
    %230 = vector.multi_reduction <maximumf>, %229, %cst_80 [1] : vector<8x8xf32> to vector<8xf32>
    %231 = vector.shape_cast %230 : vector<8xf32> to vector<8x1xf32>
    %232 = vector.broadcast %231 : vector<8x1xf32> to vector<8x8xf32>
    %233 = arith.subf %229, %232 : vector<8x8xf32>
    %234 = math.exp %233 : vector<8x8xf32>
    %cst_81 = arith.constant dense<0.000000e+00> : vector<8xf32>
    %235 = vector.multi_reduction <add>, %234, %cst_81 [1] : vector<8x8xf32> to vector<8xf32>
    %236 = vector.shape_cast %235 : vector<8xf32> to vector<8x1xf32>
    %237 = tpu.reciprocal %236 {approx = true} : vector<8x1xf32> -> vector<8x1xf32>
    %238 = vector.broadcast %237 : vector<8x1xf32> to vector<8x8xf32>
    %239 = arith.mulf %234, %238 : vector<8x8xf32>
    %240 = arith.truncf %239 : vector<8x8xf32> to vector<8x8xbf16>
    %241 = arith.truncf %224 : vector<8x8xf32> to vector<8x8xbf16>
    %cst_82 = arith.constant dense<0.000000e+00> : vector<8x8xf32>
    %242 = tpu.matmul %240, %241, %cst_82 {dimension_numbers = #tpu.dot_dimension_numbers<[1], [0], [0], [1], [0, 0, 1, 1], [], []>} : vector<8x8xbf16>, vector<8x8xbf16>, vector<8x8xf32> -> vector<8x8xf32>
    %243 = tpu.concatenate %179, %200, %221, %242 in 1 : vector<8x8xf32>, vector<8x8xf32>, vector<8x8xf32>, vector<8x8xf32> -> vector<8x32xf32>
    %c0_83 = arith.constant 0 : index
    %c0_84 = arith.constant 0 : index
    %c0_85 = arith.constant 0 : index
    %244 = vector.load %arg14[%c0_83, %c0_84, %c0_85] : memref<1x32x32xf32, #tpu.memory_space<vmem>>, vector<1x32x32xf32>
    %245 = vector.shape_cast %244 : vector<1x32x32xf32> to vector<32x32xf32>
    %246 = arith.truncf %243 : vector<8x32xf32> to vector<8x32xbf16>
    %247 = arith.truncf %245 : vector<32x32xf32> to vector<32x32xbf16>
    %cst_86 = arith.constant dense<0.000000e+00> : vector<8x32xf32>
    %248 = tpu.matmul %246, %247, %cst_86 {dimension_numbers = #tpu.dot_dimension_numbers<[1], [0], [0], [1], [0, 0, 1, 1], [], []>} : vector<8x32xbf16>, vector<32x32xbf16>, vector<8x32xf32> -> vector<8x32xf32>
    %c0_87 = arith.constant 0 : index
    %c0_88 = arith.constant 0 : index
    %c0_89 = arith.constant 0 : index
    %249 = vector.load %arg15[%c0_87, %c0_88, %c0_89] : memref<1x1x32xf32, #tpu.memory_space<vmem>>, vector<1x1x32xf32>
    %250 = vector.shape_cast %249 : vector<1x1x32xf32> to vector<1x32xf32>
    %251 = vector.broadcast %250 : vector<1x32xf32> to vector<8x32xf32>
    %252 = arith.addf %248, %251 : vector<8x32xf32>
    %253 = arith.addf %252, %138 : vector<8x32xf32>
    %c0_90 = arith.constant 0 : index
    %c0_91 = arith.constant 0 : index
    %c0_92 = arith.constant 0 : index
    %254 = vector.load %arg16[%c0_90, %c0_91, %c0_92] : memref<1x1x32xf32, #tpu.memory_space<vmem>>, vector<1x1x32xf32>
    %255 = vector.shape_cast %254 : vector<1x1x32xf32> to vector<1x32xf32>
    %c0_93 = arith.constant 0 : index
    %c0_94 = arith.constant 0 : index
    %c0_95 = arith.constant 0 : index
    %256 = vector.load %arg17[%c0_93, %c0_94, %c0_95] : memref<1x1x32xf32, #tpu.memory_space<vmem>>, vector<1x1x32xf32>
    %257 = vector.shape_cast %256 : vector<1x1x32xf32> to vector<1x32xf32>
    %cst_96 = arith.constant dense<0.000000e+00> : vector<8xf32>
    %258 = vector.multi_reduction <add>, %253, %cst_96 [1] : vector<8x32xf32> to vector<8xf32>
    %259 = vector.shape_cast %258 : vector<8xf32> to vector<8x1xf32>
    %cst_97 = arith.constant 3.200000e+01 : f32
    %260 = vector.broadcast %cst_97 : f32 to vector<8x1xf32>
    %261 = arith.divf %259, %260 : vector<8x1xf32>
    %262 = vector.broadcast %261 : vector<8x1xf32> to vector<8x32xf32>
    %263 = arith.subf %253, %262 : vector<8x32xf32>
    %264 = arith.mulf %263, %263 : vector<8x32xf32>
    %cst_98 = arith.constant dense<0.000000e+00> : vector<8xf32>
    %265 = vector.multi_reduction <add>, %264, %cst_98 [1] : vector<8x32xf32> to vector<8xf32>
    %266 = vector.shape_cast %265 : vector<8xf32> to vector<8x1xf32>
    %cst_99 = arith.constant 3.200000e+01 : f32
    %267 = vector.broadcast %cst_99 : f32 to vector<8x1xf32>
    %268 = arith.divf %266, %267 : vector<8x1xf32>
    %269 = vector.broadcast %261 : vector<8x1xf32> to vector<8x32xf32>
    %270 = arith.subf %253, %269 : vector<8x32xf32>
    %cst_100 = arith.constant 9.99999974E-6 : f32
    %271 = vector.broadcast %cst_100 : f32 to vector<8x1xf32>
    %272 = arith.addf %268, %271 : vector<8x1xf32>
    %273 = math.rsqrt %272 : vector<8x1xf32>
    %274 = vector.broadcast %273 : vector<8x1xf32> to vector<8x32xf32>
    %275 = arith.mulf %270, %274 : vector<8x32xf32>
    %276 = vector.broadcast %255 : vector<1x32xf32> to vector<8x32xf32>
    %277 = arith.mulf %276, %275 : vector<8x32xf32>
    %278 = vector.broadcast %257 : vector<1x32xf32> to vector<8x32xf32>
    %279 = arith.addf %277, %278 : vector<8x32xf32>
    %c0_101 = arith.constant 0 : index
    %c0_102 = arith.constant 0 : index
    %c0_103 = arith.constant 0 : index
    %280 = vector.load %arg18[%c0_101, %c0_102, %c0_103] : memref<1x32x64xf32, #tpu.memory_space<vmem>>, vector<1x32x64xf32>
    %281 = vector.shape_cast %280 : vector<1x32x64xf32> to vector<32x64xf32>
    %282 = arith.truncf %279 : vector<8x32xf32> to vector<8x32xbf16>
    %283 = arith.truncf %281 : vector<32x64xf32> to vector<32x64xbf16>
    %cst_104 = arith.constant dense<0.000000e+00> : vector<8x64xf32>
    %284 = tpu.matmul %282, %283, %cst_104 {dimension_numbers = #tpu.dot_dimension_numbers<[1], [0], [0], [1], [0, 0, 1, 1], [], []>} : vector<8x32xbf16>, vector<32x64xbf16>, vector<8x64xf32> -> vector<8x64xf32>
    %c0_105 = arith.constant 0 : index
    %c0_106 = arith.constant 0 : index
    %c0_107 = arith.constant 0 : index
    %285 = vector.load %arg19[%c0_105, %c0_106, %c0_107] : memref<1x1x64xf32, #tpu.memory_space<vmem>>, vector<1x1x64xf32>
    %286 = vector.shape_cast %285 : vector<1x1x64xf32> to vector<1x64xf32>
    %287 = vector.broadcast %286 : vector<1x64xf32> to vector<8x64xf32>
    %288 = arith.addf %284, %287 : vector<8x64xf32>
    %cst_108 = arith.constant 0.000000e+00 : f32
    %289 = vector.broadcast %cst_108 : f32 to vector<8x64xf32>
    %290 = arith.maximumf %288, %289 : vector<8x64xf32>
    %c0_109 = arith.constant 0 : index
    %c0_110 = arith.constant 0 : index
    %c0_111 = arith.constant 0 : index
    %291 = vector.load %arg20[%c0_109, %c0_110, %c0_111] : memref<1x64x32xf32, #tpu.memory_space<vmem>>, vector<1x64x32xf32>
    %292 = vector.shape_cast %291 : vector<1x64x32xf32> to vector<64x32xf32>
    %293 = arith.truncf %290 : vector<8x64xf32> to vector<8x64xbf16>
    %294 = arith.truncf %292 : vector<64x32xf32> to vector<64x32xbf16>
    %cst_112 = arith.constant dense<0.000000e+00> : vector<8x32xf32>
    %295 = tpu.matmul %293, %294, %cst_112 {dimension_numbers = #tpu.dot_dimension_numbers<[1], [0], [0], [1], [0, 0, 1, 1], [], []>} : vector<8x64xbf16>, vector<64x32xbf16>, vector<8x32xf32> -> vector<8x32xf32>
    %c0_113 = arith.constant 0 : index
    %c0_114 = arith.constant 0 : index
    %c0_115 = arith.constant 0 : index
    %296 = vector.load %arg21[%c0_113, %c0_114, %c0_115] : memref<1x1x32xf32, #tpu.memory_space<vmem>>, vector<1x1x32xf32>
    %297 = vector.shape_cast %296 : vector<1x1x32xf32> to vector<1x32xf32>
    %298 = vector.broadcast %297 : vector<1x32xf32> to vector<8x32xf32>
    %299 = arith.addf %295, %298 : vector<8x32xf32>
    %300 = arith.addf %299, %279 : vector<8x32xf32>
    %c0_116 = arith.constant 0 : index
    %c0_117 = arith.constant 0 : index
    %c0_118 = arith.constant 0 : index
    %301 = vector.load %arg22[%c0_116, %c0_117, %c0_118] : memref<1x1x32xf32, #tpu.memory_space<vmem>>, vector<1x1x32xf32>
    %302 = vector.shape_cast %301 : vector<1x1x32xf32> to vector<1x32xf32>
    %c0_119 = arith.constant 0 : index
    %c0_120 = arith.constant 0 : index
    %c0_121 = arith.constant 0 : index
    %303 = vector.load %arg23[%c0_119, %c0_120, %c0_121] : memref<1x1x32xf32, #tpu.memory_space<vmem>>, vector<1x1x32xf32>
    %304 = vector.shape_cast %303 : vector<1x1x32xf32> to vector<1x32xf32>
    %cst_122 = arith.constant dense<0.000000e+00> : vector<8xf32>
    %305 = vector.multi_reduction <add>, %300, %cst_122 [1] : vector<8x32xf32> to vector<8xf32>
    %306 = vector.shape_cast %305 : vector<8xf32> to vector<8x1xf32>
    %cst_123 = arith.constant 3.200000e+01 : f32
    %307 = vector.broadcast %cst_123 : f32 to vector<8x1xf32>
    %308 = arith.divf %306, %307 : vector<8x1xf32>
    %309 = vector.broadcast %308 : vector<8x1xf32> to vector<8x32xf32>
    %310 = arith.subf %300, %309 : vector<8x32xf32>
    %311 = arith.mulf %310, %310 : vector<8x32xf32>
    %cst_124 = arith.constant dense<0.000000e+00> : vector<8xf32>
    %312 = vector.multi_reduction <add>, %311, %cst_124 [1] : vector<8x32xf32> to vector<8xf32>
    %313 = vector.shape_cast %312 : vector<8xf32> to vector<8x1xf32>
    %cst_125 = arith.constant 3.200000e+01 : f32
    %314 = vector.broadcast %cst_125 : f32 to vector<8x1xf32>
    %315 = arith.divf %313, %314 : vector<8x1xf32>
    %316 = vector.broadcast %308 : vector<8x1xf32> to vector<8x32xf32>
    %317 = arith.subf %300, %316 : vector<8x32xf32>
    %cst_126 = arith.constant 9.99999974E-6 : f32
    %318 = vector.broadcast %cst_126 : f32 to vector<8x1xf32>
    %319 = arith.addf %315, %318 : vector<8x1xf32>
    %320 = math.rsqrt %319 : vector<8x1xf32>
    %321 = vector.broadcast %320 : vector<8x1xf32> to vector<8x32xf32>
    %322 = arith.mulf %317, %321 : vector<8x32xf32>
    %323 = vector.broadcast %302 : vector<1x32xf32> to vector<8x32xf32>
    %324 = arith.mulf %323, %322 : vector<8x32xf32>
    %325 = vector.broadcast %304 : vector<1x32xf32> to vector<8x32xf32>
    %326 = arith.addf %324, %325 : vector<8x32xf32>
    %c0_127 = arith.constant 0 : index
    %c0_128 = arith.constant 0 : index
    %327 = vector.load %arg27[%c0_127, %c0_128] : memref<8x32xf32, #tpu.memory_space<vmem>>, vector<8x32xf32>
    tpu.vector_store %arg27[%c0_127, %c0_128], %326 {strides = array<i32>} : memref<8x32xf32, #tpu.memory_space<vmem>>, vector<8x32xf32>,
    %c1_i32 = arith.constant 1 : i32
    %328 = arith.cmpi eq, %arg1, %c1_i32 : i32
    %329 = arith.extui %328 : i1 to i32
    %c0_i32_129 = arith.constant 0 : i32
    %330 = arith.cmpi ne, %329, %c0_i32_129 : i32
    scf.if %330 {
      %c0_130 = arith.constant 0 : index
      %c0_131 = arith.constant 0 : index
      %331 = vector.load %arg24[%c0_130, %c0_131] : memref<32x128xf32, #tpu.memory_space<vmem>>, vector<32x128xf32>
      %332 = arith.truncf %326 : vector<8x32xf32> to vector<8x32xbf16>
      %333 = arith.truncf %331 : vector<32x128xf32> to vector<32x128xbf16>
      %cst_132 = arith.constant dense<0.000000e+00> : vector<8x128xf32>
      %334 = tpu.matmul %332, %333, %cst_132 {dimension_numbers = #tpu.dot_dimension_numbers<[1], [0], [0], [1], [0, 0, 1, 1], [], []>} : vector<8x32xbf16>, vector<32x128xbf16>, vector<8x128xf32> -> vector<8x128xf32>
      %c0_133 = arith.constant 0 : index
      %c0_134 = arith.constant 0 : index
      %335 = vector.load %arg25[%c0_133, %c0_134] : memref<1x128xf32, #tpu.memory_space<vmem>>, vector<1x128xf32>
      %336 = vector.broadcast %335 : vector<1x128xf32> to vector<8x128xf32>
      %337 = arith.addf %334, %336 : vector<8x128xf32>
      %c0_135 = arith.constant 0 : index
      %c0_136 = arith.constant 0 : index
      %c0_137 = arith.constant 0 : index
      %338 = vector.load %arg26[%c0_135, %c0_136, %c0_137] : memref<1x8x128xf32, #tpu.memory_space<vmem>>, vector<1x8x128xf32>
      %339 = vector.shape_cast %338 : vector<1x8x128xf32> to vector<8x128xf32>
      %340 = vector.shape_cast %337 : vector<8x128xf32> to vector<1x8x128xf32>
      tpu.vector_store %arg26[%c0_135, %c0_136, %c0_137], %340 {strides = array<i32>} : memref<1x8x128xf32, #tpu.memory_space<vmem>>, vector<1x8x128xf32>,
    } else {
    }
    return
  }
  func.func @transform_0(%arg0: i32, %arg1: i32) -> (i32, i32, i32) {
    %c0_i32 = arith.constant 0 : i32
    %c0_i32_0 = arith.constant 0 : i32
    %c0_i32_1 = arith.constant 0 : i32
    return %arg0, %c0_i32, %c0_i32_0 : i32, i32, i32
  }
  func.func @transform_1(%arg0: i32, %arg1: i32) -> (i32, i32, i32) {
    %c0_i32 = arith.constant 0 : i32
    %c0_i32_0 = arith.constant 0 : i32
    %c0_i32_1 = arith.constant 0 : i32
    return %arg0, %c0_i32, %c0_i32_0 : i32, i32, i32
  }
  func.func @transform_2(%arg0: i32, %arg1: i32) -> (i32, i32, i32) {
    %c0_i32 = arith.constant 0 : i32
    %c0_i32_0 = arith.constant 0 : i32
    %c0_i32_1 = arith.constant 0 : i32
    return %arg1, %c0_i32, %c0_i32_0 : i32, i32, i32
  }
  func.func @transform_3(%arg0: i32, %arg1: i32) -> (i32, i32, i32) {
    %c0_i32 = arith.constant 0 : i32
    %c0_i32_0 = arith.constant 0 : i32
    %c0_i32_1 = arith.constant 0 : i32
    return %arg1, %c0_i32, %c0_i32_0 : i32, i32, i32
  }
  func.func @transform_4(%arg0: i32, %arg1: i32) -> (i32, i32, i32) {
    %c0_i32 = arith.constant 0 : i32
    %c0_i32_0 = arith.constant 0 : i32
    %c0_i32_1 = arith.constant 0 : i32
    return %arg1, %c0_i32, %c0_i32_0 : i32, i32, i32
  }
  func.func @transform_5(%arg0: i32, %arg1: i32) -> (i32, i32, i32) {
    %c0_i32 = arith.constant 0 : i32
    %c0_i32_0 = arith.constant 0 : i32
    %c0_i32_1 = arith.constant 0 : i32
    return %arg1, %c0_i32, %c0_i32_0 : i32, i32, i32
  }
  func.func @transform_6(%arg0: i32, %arg1: i32) -> (i32, i32, i32) {
    %c0_i32 = arith.constant 0 : i32
    %c0_i32_0 = arith.constant 0 : i32
    %c0_i32_1 = arith.constant 0 : i32
    return %arg1, %c0_i32, %c0_i32_0 : i32, i32, i32
  }
  func.func @transform_7(%arg0: i32, %arg1: i32) -> (i32, i32, i32) {
    %c0_i32 = arith.constant 0 : i32
    %c0_i32_0 = arith.constant 0 : i32
    %c0_i32_1 = arith.constant 0 : i32
    return %arg1, %c0_i32, %c0_i32_0 : i32, i32, i32
  }
  func.func @transform_8(%arg0: i32, %arg1: i32) -> (i32, i32, i32) {
    %c0_i32 = arith.constant 0 : i32
    %c0_i32_0 = arith.constant 0 : i32
    %c0_i32_1 = arith.constant 0 : i32
    return %arg1, %c0_i32, %c0_i32_0 : i32, i32, i32
  }
  func.func @transform_9(%arg0: i32, %arg1: i32) -> (i32, i32, i32) {
    %c0_i32 = arith.constant 0 : i32
    %c0_i32_0 = arith.constant 0 : i32
    %c0_i32_1 = arith.constant 0 : i32
    return %arg1, %c0_i32, %c0_i32_0 : i32, i32, i32
  }
  func.func @transform_10(%arg0: i32, %arg1: i32) -> (i32, i32, i32) {
    %c0_i32 = arith.constant 0 : i32
    %c0_i32_0 = arith.constant 0 : i32
    %c0_i32_1 = arith.constant 0 : i32
    return %arg1, %c0_i32, %c0_i32_0 : i32, i32, i32
  }
  func.func @transform_11(%arg0: i32, %arg1: i32) -> (i32, i32, i32) {
    %c0_i32 = arith.constant 0 : i32
    %c0_i32_0 = arith.constant 0 : i32
    %c0_i32_1 = arith.constant 0 : i32
    return %arg1, %c0_i32, %c0_i32_0 : i32, i32, i32
  }
  func.func @transform_12(%arg0: i32, %arg1: i32) -> (i32, i32, i32) {
    %c0_i32 = arith.constant 0 : i32
    %c0_i32_0 = arith.constant 0 : i32
    %c0_i32_1 = arith.constant 0 : i32
    return %arg1, %c0_i32, %c0_i32_0 : i32, i32, i32
  }
  func.func @transform_13(%arg0: i32, %arg1: i32) -> (i32, i32, i32) {
    %c0_i32 = arith.constant 0 : i32
    %c0_i32_0 = arith.constant 0 : i32
    %c0_i32_1 = arith.constant 0 : i32
    return %arg1, %c0_i32, %c0_i32_0 : i32, i32, i32
  }
  func.func @transform_14(%arg0: i32, %arg1: i32) -> (i32, i32, i32) {
    %c0_i32 = arith.constant 0 : i32
    %c0_i32_0 = arith.constant 0 : i32
    %c0_i32_1 = arith.constant 0 : i32
    return %arg1, %c0_i32, %c0_i32_0 : i32, i32, i32
  }
  func.func @transform_15(%arg0: i32, %arg1: i32) -> (i32, i32, i32) {
    %c0_i32 = arith.constant 0 : i32
    %c0_i32_0 = arith.constant 0 : i32
    %c0_i32_1 = arith.constant 0 : i32
    return %arg1, %c0_i32, %c0_i32_0 : i32, i32, i32
  }
  func.func @transform_16(%arg0: i32, %arg1: i32) -> (i32, i32, i32) {
    %c0_i32 = arith.constant 0 : i32
    %c0_i32_0 = arith.constant 0 : i32
    %c0_i32_1 = arith.constant 0 : i32
    return %arg1, %c0_i32, %c0_i32_0 : i32, i32, i32
  }
  func.func @transform_17(%arg0: i32, %arg1: i32) -> (i32, i32, i32) {
    %c0_i32 = arith.constant 0 : i32
    %c0_i32_0 = arith.constant 0 : i32
    %c0_i32_1 = arith.constant 0 : i32
    return %arg1, %c0_i32, %c0_i32_0 : i32, i32, i32
  }
  func.func @transform_18(%arg0: i32, %arg1: i32) -> (i32, i32, i32) {
    %c0_i32 = arith.constant 0 : i32
    %c0_i32_0 = arith.constant 0 : i32
    %c0_i32_1 = arith.constant 0 : i32
    return %arg1, %c0_i32, %c0_i32_0 : i32, i32, i32
  }
  func.func @transform_19(%arg0: i32, %arg1: i32) -> (i32, i32, i32) {
    %c0_i32 = arith.constant 0 : i32
    %c0_i32_0 = arith.constant 0 : i32
    %c0_i32_1 = arith.constant 0 : i32
    return %arg1, %c0_i32, %c0_i32_0 : i32, i32, i32
  }
  func.func @transform_20(%arg0: i32, %arg1: i32) -> (i32, i32, i32) {
    %c0_i32 = arith.constant 0 : i32
    %c0_i32_0 = arith.constant 0 : i32
    %c0_i32_1 = arith.constant 0 : i32
    return %arg1, %c0_i32, %c0_i32_0 : i32, i32, i32
  }
  func.func @transform_21(%arg0: i32, %arg1: i32) -> (i32, i32, i32) {
    %c0_i32 = arith.constant 0 : i32
    %c0_i32_0 = arith.constant 0 : i32
    %c0_i32_1 = arith.constant 0 : i32
    return %arg1, %c0_i32, %c0_i32_0 : i32, i32, i32
  }
  func.func @transform_22(%arg0: i32, %arg1: i32) -> (i32, i32) {
    %c0_i32 = arith.constant 0 : i32
    %c0_i32_0 = arith.constant 0 : i32
    %c0_i32_1 = arith.constant 0 : i32
    return %c0_i32, %c0_i32_0 : i32, i32
  }
  func.func @transform_23(%arg0: i32, %arg1: i32) -> (i32, i32) {
    %c0_i32 = arith.constant 0 : i32
    %c0_i32_0 = arith.constant 0 : i32
    %c0_i32_1 = arith.constant 0 : i32
    return %c0_i32, %c0_i32_0 : i32, i32
  }
  func.func @transform_24(%arg0: i32, %arg1: i32) -> (i32, i32, i32) {
    %c0_i32 = arith.constant 0 : i32
    %c0_i32_0 = arith.constant 0 : i32
    %c0_i32_1 = arith.constant 0 : i32
    return %arg0, %c0_i32, %c0_i32_0 : i32, i32, i32
  }
}

</mosaic_0001>

<llo_original>
// kernel: transformer_forward.2
$region0: #{transformer_forward.2}
  #allocation0 [shape = 'u32[]', space=smem, size = 0x4, offset = 0x4, fixed_abs, tag = 'smem constant byte address 0x4 - core index']
  #allocation1 [shape = 'u32[144,128]{1,0:T(1,128)}', space=vmem, size = 0x12000, scoped, tag = 'internal scratch']
  %s0 = inlined_call_operand.vmem [shape: f32[2,8,32], index: 0, kind: input, shape index: {}]
  %s1 = inlined_call_operand.vmem [shape: f32[2,32,96], index: 1, kind: input, shape index: {}]
  %s2 = inlined_call_operand.vmem [shape: f32[2,1,96], index: 2, kind: input, shape index: {}]
  %s3 = inlined_call_operand.vmem [shape: f32[2,32,32], index: 3, kind: input, shape index: {}]
  %s4 = inlined_call_operand.vmem [shape: f32[2,1,32], index: 4, kind: input, shape index: {}]
  %s5 = inlined_call_operand.vmem [shape: f32[2,1,32], index: 5, kind: input, shape index: {}]
  %s6 = inlined_call_operand.vmem [shape: f32[2,1,32], index: 6, kind: input, shape index: {}]
  %s7 = inlined_call_operand.vmem [shape: f32[2,32,64], index: 7, kind: input, shape index: {}]
  %s8 = inlined_call_operand.vmem [shape: f32[2,1,64], index: 8, kind: input, shape index: {}]
  %s9 = inlined_call_operand.vmem [shape: f32[2,64,32], index: 9, kind: input, shape index: {}]
  %s10 = inlined_call_operand.vmem [shape: f32[2,1,32], index: 10, kind: input, shape index: {}]
  %s11 = inlined_call_operand.vmem [shape: f32[2,1,32], index: 11, kind: input, shape index: {}]
  %s12 = inlined_call_operand.vmem [shape: f32[2,1,32], index: 12, kind: input, shape index: {}]
  %s13 = inlined_call_operand.vmem [shape: f32[2,8,32], index: 13, kind: output, shape index: {}]
  %s14 = sld [smem:[#allocation0]]
  $region89: #{transformer_forward.2} parent=0
    _
  %s16 = ssub.s32 1, %s14
  %s17 = scalar_select 0, %s16, %s14
  loop: start=0, step=1, limit=6
  $region2: #{transformer_forward.2} parent=0 // loop_pre_header
    _
  $region3: #{transformer_forward.2} parent=0 // loop_header
    %s19 = sphi 0, %s23
    %p20 = scmp.ge.s32.totalorder %s19, 6
    %s26 = sphi 0, %s38
    %s27 = sphi 0, %s34
    %s28 = sphi 0, %s26
    %s29 = sphi 0, %s27
    %s30 = sphi 0, %s28
    %s31 = sphi 0, %s29
    %s41 = sphi 0, %s43
    %s44 = sphi 0, %s41
    %s45 = sphi 0, %s44
    %s61 = sphi 0, %s45
    %s67 = sphi 0, %s69
    %s70 = sphi 0, %s67
    %s71 = sphi 0, %s70
    %s87 = sphi 0, %s71
    %s93 = sphi 0, %s95
    %s96 = sphi 0, %s93
    %s97 = sphi 0, %s96
    %s113 = sphi 0, %s97
    %s119 = sphi 0, %s121
    %s122 = sphi 0, %s119
    %s123 = sphi 0, %s122
    %s139 = sphi 0, %s123
    %s145 = sphi 0, %s147
    %s148 = sphi 0, %s145
    %s149 = sphi 0, %s148
    %s165 = sphi 0, %s149
    %s171 = sphi 0, %s173
    %s174 = sphi 0, %s171
    %s175 = sphi 0, %s174
    %s191 = sphi 0, %s175
    %s197 = sphi 0, %s199
    %s200 = sphi 0, %s197
    %s201 = sphi 0, %s200
    %s217 = sphi 0, %s201
    %s223 = sphi 0, %s225
    %s226 = sphi 0, %s223
    %s227 = sphi 0, %s226
    %s243 = sphi 0, %s227
    %s249 = sphi 0, %s251
    %s252 = sphi 0, %s249
    %s253 = sphi 0, %s252
    %s269 = sphi 0, %s253
    %s275 = sphi 0, %s277
    %s278 = sphi 0, %s275
    %s279 = sphi 0, %s278
    %s295 = sphi 0, %s279
    %s301 = sphi 0, %s303
    %s304 = sphi 0, %s301
    %s305 = sphi 0, %s304
    %s321 = sphi 0, %s305
    %s327 = sphi 0, %s329
    %s330 = sphi 0, %s327
    %s331 = sphi 0, %s330
    %s347 = sphi 0, %s331
    %s353 = sphi 0, %s355
    %s356 = sphi 0, %s353
    %s357 = sphi 0, %s356
    %s373 = sphi 0, %s357
    %s379 = sphi 0, %s381
    %s382 = sphi 0, %s379
    %s383 = sphi 0, %s382
    %s399 = sphi 0, %s383
  $region4: #{transformer_forward.2} parent=0 // loop_header_branch
    %22 = sbr.rel (%p20) target = $region8
  $region5: #{transformer_forward.2} parent=0 // loop_body
    %s24 = ssub.s32 %s19, 1
    %s25 = ssub.s32 %s19, 2
    %s32 = sadd.s32 1, %s27
    %p33 = scmp.ge.s32.totalorder %s32, 2
    %s34 = scalar_select %p33, 0, %s32
    %s35 = sadd.s32 1, %s26
    %s36 = scalar_select %p33, %s35, %s26
    %p37 = scmp.ge.s32.totalorder %s36, 2
    %s38 = scalar_select %p37, 0, %s36
    %s39 = ssub.s32 %s26, %s38
    %p40 = scmp.eq.s32.totalorder %s39, 0
    %s42 = sadd.s32 %s41, 1
    %s43 = scalar_select %p40, %s41, %s42
    %p46 = pneg %p40
    %p47 = scmp.eq.s32.totalorder %s19, 3
    %p48 = por %p46, %p47
    %p49 = scmp.ne.s32.totalorder %s41, %s44
    %p50 = scmp.eq.s32.totalorder %s19, 0
    %p51 = por %p49, %p50
    %p52 = scmp.ne.s32.totalorder %s41, %s44
    %p53 = scmp.eq.s32.totalorder %s24, 3
    %p54 = por %p52, %p53
    %p55 = scmp.ne.s32.totalorder %s44, %s45
    %p56 = scmp.eq.s32.totalorder %s24, 0
    %p57 = por %p55, %p56
    %p58 = scmp.ne.s32.totalorder %s44, %s45
    %p59 = scmp.eq.s32.totalorder %s25, 3
    %p60 = por %p58, %p59
    %p62 = scmp.ne.s32.totalorder %s45, %s61
    %p63 = scmp.eq.s32.totalorder %s25, 0
    %p64 = por %p62, %p63
    %s65 = ssub.s32 %s27, %s34
    %p66 = scmp.eq.s32.totalorder %s65, 0
    %s68 = sadd.s32 %s67, 1
    %s69 = scalar_select %p66, %s67, %s68
    %p72 = pneg %p66
    %p73 = scmp.eq.s32.totalorder %s19, 3
    %p74 = por %p72, %p73
    %p75 = scmp.ne.s32.totalorder %s67, %s70
    %p76 = scmp.eq.s32.totalorder %s19, 0
    %p77 = por %p75, %p76
    %p78 = scmp.ne.s32.totalorder %s67, %s70
    %p79 = scmp.eq.s32.totalorder %s24, 3
    %p80 = por %p78, %p79
    %p81 = scmp.ne.s32.totalorder %s70, %s71
    %p82 = scmp.eq.s32.totalorder %s24, 0
    %p83 = por %p81, %p82
    %p84 = scmp.ne.s32.totalorder %s70, %s71
    %p85 = scmp.eq.s32.totalorder %s25, 3
    %p86 = por %p84, %p85
    %p88 = scmp.ne.s32.totalorder %s71, %s87
    %p89 = scmp.eq.s32.totalorder %s25, 0
    %p90 = por %p88, %p89
    %s91 = ssub.s32 %s27, %s34
    %p92 = scmp.eq.s32.totalorder %s91, 0
    %s94 = sadd.s32 %s93, 1
    %s95 = scalar_select %p92, %s93, %s94
    %p98 = pneg %p92
    %p99 = scmp.eq.s32.totalorder %s19, 3
    %p100 = por %p98, %p99
    %p101 = scmp.ne.s32.totalorder %s93, %s96
    %p102 = scmp.eq.s32.totalorder %s19, 0
    %p103 = por %p101, %p102
    %p104 = scmp.ne.s32.totalorder %s93, %s96
    %p105 = scmp.eq.s32.totalorder %s24, 3
    %p106 = por %p104, %p105
    %p107 = scmp.ne.s32.totalorder %s96, %s97
    %p108 = scmp.eq.s32.totalorder %s24, 0
    %p109 = por %p107, %p108
    %p110 = scmp.ne.s32.totalorder %s96, %s97
    %p111 = scmp.eq.s32.totalorder %s25, 3
    %p112 = por %p110, %p111
    %p114 = scmp.ne.s32.totalorder %s97, %s113
    %p115 = scmp.eq.s32.totalorder %s25, 0
    %p116 = por %p114, %p115
    %s117 = ssub.s32 %s27, %s34
    %p118 = scmp.eq.s32.totalorder %s117, 0
    %s120 = sadd.s32 %s119, 1
    %s121 = scalar_select %p118, %s119, %s120
    %p124 = pneg %p118
    %p125 = scmp.eq.s32.totalorder %s19, 3
    %p126 = por %p124, %p125
    %p127 = scmp.ne.s32.totalorder %s119, %s122
    %p128 = scmp.eq.s32.totalorder %s19, 0
    %p129 = por %p127, %p128
    %p130 = scmp.ne.s32.totalorder %s119, %s122
    %p131 = scmp.eq.s32.totalorder %s24, 3
    %p132 = por %p130, %p131
    %p133 = scmp.ne.s32.totalorder %s122, %s123
    %p134 = scmp.eq.s32.totalorder %s24, 0
    %p135 = por %p133, %p134
    %p136 = scmp.ne.s32.totalorder %s122, %s123
    %p137 = scmp.eq.s32.totalorder %s25, 3
    %p138 = por %p136, %p137
    %p140 = scmp.ne.s32.totalorder %s123, %s139
    %p141 = scmp.eq.s32.totalorder %s25, 0
    %p142 = por %p140, %p141
    %s143 = ssub.s32 %s27, %s34
    %p144 = scmp.eq.s32.totalorder %s143, 0
    %s146 = sadd.s32 %s145, 1
    %s147 = scalar_select %p144, %s145, %s146
    %p150 = pneg %p144
    %p151 = scmp.eq.s32.totalorder %s19, 3
    %p152 = por %p150, %p151
    %p153 = scmp.ne.s32.totalorder %s145, %s148
    %p154 = scmp.eq.s32.totalorder %s19, 0
    %p155 = por %p153, %p154
    %p156 = scmp.ne.s32.totalorder %s145, %s148
    %p157 = scmp.eq.s32.totalorder %s24, 3
    %p158 = por %p156, %p157
    %p159 = scmp.ne.s32.totalorder %s148, %s149
    %p160 = scmp.eq.s32.totalorder %s24, 0
    %p161 = por %p159, %p160
    %p162 = scmp.ne.s32.totalorder %s148, %s149
    %p163 = scmp.eq.s32.totalorder %s25, 3
    %p164 = por %p162, %p163
    %p166 = scmp.ne.s32.totalorder %s149, %s165
    %p167 = scmp.eq.s32.totalorder %s25, 0
    %p168 = por %p166, %p167
    %s169 = ssub.s32 %s27, %s34
    %p170 = scmp.eq.s32.totalorder %s169, 0
    %s172 = sadd.s32 %s171, 1
    %s173 = scalar_select %p170, %s171, %s172
    %p176 = pneg %p170
    %p177 = scmp.eq.s32.totalorder %s19, 3
    %p178 = por %p176, %p177
    %p179 = scmp.ne.s32.totalorder %s171, %s174
    %p180 = scmp.eq.s32.totalorder %s19, 0
    %p181 = por %p179, %p180
    %p182 = scmp.ne.s32.totalorder %s171, %s174
    %p183 = scmp.eq.s32.totalorder %s24, 3
    %p184 = por %p182, %p183
    %p185 = scmp.ne.s32.totalorder %s174, %s175
    %p186 = scmp.eq.s32.totalorder %s24, 0
    %p187 = por %p185, %p186
    %p188 = scmp.ne.s32.totalorder %s174, %s175
    %p189 = scmp.eq.s32.totalorder %s25, 3
    %p190 = por %p188, %p189
    %p192 = scmp.ne.s32.totalorder %s175, %s191
    %p193 = scmp.eq.s32.totalorder %s25, 0
    %p194 = por %p192, %p193
    %s195 = ssub.s32 %s27, %s34
    %p196 = scmp.eq.s32.totalorder %s195, 0
    %s198 = sadd.s32 %s197, 1
    %s199 = scalar_select %p196, %s197, %s198
    %p202 = pneg %p196
    %p203 = scmp.eq.s32.totalorder %s19, 3
    %p204 = por %p202, %p203
    %p205 = scmp.ne.s32.totalorder %s197, %s200
    %p206 = scmp.eq.s32.totalorder %s19, 0
    %p207 = por %p205, %p206
    %p208 = scmp.ne.s32.totalorder %s197, %s200
    %p209 = scmp.eq.s32.totalorder %s24, 3
    %p210 = por %p208, %p209
    %p211 = scmp.ne.s32.totalorder %s200, %s201
    %p212 = scmp.eq.s32.totalorder %s24, 0
    %p213 = por %p211, %p212
    %p214 = scmp.ne.s32.totalorder %s200, %s201
    %p215 = scmp.eq.s32.totalorder %s25, 3
    %p216 = por %p214, %p215
    %p218 = scmp.ne.s32.totalorder %s201, %s217
    %p219 = scmp.eq.s32.totalorder %s25, 0
    %p220 = por %p218, %p219
    %s221 = ssub.s32 %s27, %s34
    %p222 = scmp.eq.s32.totalorder %s221, 0
    %s224 = sadd.s32 %s223, 1
    %s225 = scalar_select %p222, %s223, %s224
    %p228 = pneg %p222
    %p229 = scmp.eq.s32.totalorder %s19, 3
    %p230 = por %p228, %p229
    %p231 = scmp.ne.s32.totalorder %s223, %s226
    %p232 = scmp.eq.s32.totalorder %s19, 0
    %p233 = por %p231, %p232
    %p234 = scmp.ne.s32.totalorder %s223, %s226
    %p235 = scmp.eq.s32.totalorder %s24, 3
    %p236 = por %p234, %p235
    %p237 = scmp.ne.s32.totalorder %s226, %s227
    %p238 = scmp.eq.s32.totalorder %s24, 0
    %p239 = por %p237, %p238
    %p240 = scmp.ne.s32.totalorder %s226, %s227
    %p241 = scmp.eq.s32.totalorder %s25, 3
    %p242 = por %p240, %p241
    %p244 = scmp.ne.s32.totalorder %s227, %s243
    %p245 = scmp.eq.s32.totalorder %s25, 0
    %p246 = por %p244, %p245
    %s247 = ssub.s32 %s27, %s34
    %p248 = scmp.eq.s32.totalorder %s247, 0
    %s250 = sadd.s32 %s249, 1
    %s251 = scalar_select %p248, %s249, %s250
    %p254 = pneg %p248
    %p255 = scmp.eq.s32.totalorder %s19, 3
    %p256 = por %p254, %p255
    %p257 = scmp.ne.s32.totalorder %s249, %s252
    %p258 = scmp.eq.s32.totalorder %s19, 0
    %p259 = por %p257, %p258
    %p260 = scmp.ne.s32.totalorder %s249, %s252
    %p261 = scmp.eq.s32.totalorder %s24, 3
    %p262 = por %p260, %p261
    %p263 = scmp.ne.s32.totalorder %s252, %s253
    %p264 = scmp.eq.s32.totalorder %s24, 0
    %p265 = por %p263, %p264
    %p266 = scmp.ne.s32.totalorder %s252, %s253
    %p267 = scmp.eq.s32.totalorder %s25, 3
    %p268 = por %p266, %p267
    %p270 = scmp.ne.s32.totalorder %s253, %s269
    %p271 = scmp.eq.s32.totalorder %s25, 0
    %p272 = por %p270, %p271
    %s273 = ssub.s32 %s27, %s34
    %p274 = scmp.eq.s32.totalorder %s273, 0
    %s276 = sadd.s32 %s275, 1
    %s277 = scalar_select %p274, %s275, %s276
    %p280 = pneg %p274
    %p281 = scmp.eq.s32.totalorder %s19, 3
    %p282 = por %p280, %p281
    %p283 = scmp.ne.s32.totalorder %s275, %s278
    %p284 = scmp.eq.s32.totalorder %s19, 0
    %p285 = por %p283, %p284
    %p286 = scmp.ne.s32.totalorder %s275, %s278
    %p287 = scmp.eq.s32.totalorder %s24, 3
    %p288 = por %p286, %p287
    %p289 = scmp.ne.s32.totalorder %s278, %s279
    %p290 = scmp.eq.s32.totalorder %s24, 0
    %p291 = por %p289, %p290
    %p292 = scmp.ne.s32.totalorder %s278, %s279
    %p293 = scmp.eq.s32.totalorder %s25, 3
    %p294 = por %p292, %p293
    %p296 = scmp.ne.s32.totalorder %s279, %s295
    %p297 = scmp.eq.s32.totalorder %s25, 0
    %p298 = por %p296, %p297
    %s299 = ssub.s32 %s27, %s34
    %p300 = scmp.eq.s32.totalorder %s299, 0
    %s302 = sadd.s32 %s301, 1
    %s303 = scalar_select %p300, %s301, %s302
    %p306 = pneg %p300
    %p307 = scmp.eq.s32.totalorder %s19, 3
    %p308 = por %p306, %p307
    %p309 = scmp.ne.s32.totalorder %s301, %s304
    %p310 = scmp.eq.s32.totalorder %s19, 0
    %p311 = por %p309, %p310
    %p312 = scmp.ne.s32.totalorder %s301, %s304
    %p313 = scmp.eq.s32.totalorder %s24, 3
    %p314 = por %p312, %p313
    %p315 = scmp.ne.s32.totalorder %s304, %s305
    %p316 = scmp.eq.s32.totalorder %s24, 0
    %p317 = por %p315, %p316
    %p318 = scmp.ne.s32.totalorder %s304, %s305
    %p319 = scmp.eq.s32.totalorder %s25, 3
    %p320 = por %p318, %p319
    %p322 = scmp.ne.s32.totalorder %s305, %s321
    %p323 = scmp.eq.s32.totalorder %s25, 0
    %p324 = por %p322, %p323
    %s325 = ssub.s32 %s27, %s34
    %p326 = scmp.eq.s32.totalorder %s325, 0
    %s328 = sadd.s32 %s327, 1
    %s329 = scalar_select %p326, %s327, %s328
    %p332 = pneg %p326
    %p333 = scmp.eq.s32.totalorder %s19, 3
    %p334 = por %p332, %p333
    %p335 = scmp.ne.s32.totalorder %s327, %s330
    %p336 = scmp.eq.s32.totalorder %s19, 0
    %p337 = por %p335, %p336
    %p338 = scmp.ne.s32.totalorder %s327, %s330
    %p339 = scmp.eq.s32.totalorder %s24, 3
    %p340 = por %p338, %p339
    %p341 = scmp.ne.s32.totalorder %s330, %s331
    %p342 = scmp.eq.s32.totalorder %s24, 0
    %p343 = por %p341, %p342
    %p344 = scmp.ne.s32.totalorder %s330, %s331
    %p345 = scmp.eq.s32.totalorder %s25, 3
    %p346 = por %p344, %p345
    %p348 = scmp.ne.s32.totalorder %s331, %s347
    %p349 = scmp.eq.s32.totalorder %s25, 0
    %p350 = por %p348, %p349
    %s351 = ssub.s32 %s27, %s34
    %p352 = scmp.eq.s32.totalorder %s351, 0
    %s354 = sadd.s32 %s353, 1
    %s355 = scalar_select %p352, %s353, %s354
    %p358 = pneg %p352
    %p359 = scmp.eq.s32.totalorder %s19, 3
    %p360 = por %p358, %p359
    %p361 = scmp.ne.s32.totalorder %s353, %s356
    %p362 = scmp.eq.s32.totalorder %s19, 0
    %p363 = por %p361, %p362
    %p364 = scmp.ne.s32.totalorder %s353, %s356
    %p365 = scmp.eq.s32.totalorder %s24, 3
    %p366 = por %p364, %p365
    %p367 = scmp.ne.s32.totalorder %s356, %s357
    %p368 = scmp.eq.s32.totalorder %s24, 0
    %p369 = por %p367, %p368
    %p370 = scmp.ne.s32.totalorder %s356, %s357
    %p371 = scmp.eq.s32.totalorder %s25, 3
    %p372 = por %p370, %p371
    %p374 = scmp.ne.s32.totalorder %s357, %s373
    %p375 = scmp.eq.s32.totalorder %s25, 0
    %p376 = por %p374, %p375
    %s377 = ssub.s32 %s26, %s38
    %p378 = scmp.eq.s32.totalorder %s377, 0
    %s380 = sadd.s32 %s379, 1
    %s381 = scalar_select %p378, %s379, %s380
    %p384 = pneg %p378
    %p385 = scmp.eq.s32.totalorder %s19, 3
    %p386 = por %p384, %p385
    %p387 = scmp.ne.s32.totalorder %s379, %s382
    %p388 = scmp.eq.s32.totalorder %s19, 0
    %p389 = por %p387, %p388
    %p390 = scmp.ne.s32.totalorder %s379, %s382
    %p391 = scmp.eq.s32.totalorder %s24, 3
    %p392 = por %p390, %p391
    %p393 = scmp.ne.s32.totalorder %s382, %s383
    %p394 = scmp.eq.s32.totalorder %s24, 0
    %p395 = por %p393, %p394
    %p396 = scmp.ne.s32.totalorder %s382, %s383
    %p397 = scmp.eq.s32.totalorder %s25, 3
    %p398 = por %p396, %p397
    %p400 = scmp.ne.s32.totalorder %s383, %s399
    %p401 = scmp.eq.s32.totalorder %s25, 0
    %p402 = por %p400, %p401
    %p403 = scmp.le.s32.totalorder 1, %s19
    %p404 = scmp.lt.s32.totalorder %s19, 5
    %p405 = pnand %p403, %p404
    %p406 = pneg %p405
    // Predicated region
    $region9: #{transformer_forward.2} parent=5 // pred_check
      _
    $region10: #{transformer_forward.2} parent=5 // pred_check_branch
      %408 = sbr.rel (%p405) target = $region12
    $region11: #{transformer_forward.2} parent=5 // pred_region
      %s409 = ssub.s32 %s19, 1
    $region12: #{transformer_forward.2} parent=5 // pred_fallthru
      _
    %p410 = scmp.lt.s32.totalorder %s19, 4
    // Predicated region
    $region13: #{transformer_forward.2} parent=5 // pred_check
      %p411 = pneg %p410
    $region14: #{transformer_forward.2} parent=5 // pred_check_branch
      %413 = sbr.rel (%p411) target = $region16
    $region15: #{transformer_forward.2} parent=5 // pred_region
      // Predicated region
      $region17: #{transformer_forward.2} parent=15 // pred_check
        %p414 = pneg %p51
      $region18: #{transformer_forward.2} parent=15 // pred_check_branch
        %416 = sbr.rel (%p414) target = $region20
      $region19: #{transformer_forward.2} parent=15 // pred_region
        %p417 = scmp.lt.s32.totalorder %s26, 1
        %s418 = scalar_select %p417, %s26, 1
        %s419 = smul.addr %s418, 8
        %s420 = scalar_lea.vmem %s0, %s419
      $region20: #{transformer_forward.2} parent=15 // pred_fallthru
        _
      // Predicated region
      $region21: #{transformer_forward.2} parent=15 // pred_check
        %p421 = pneg %p77
      $region22: #{transformer_forward.2} parent=15 // pred_check_branch
        %423 = sbr.rel (%p421) target = $region24
      $region23: #{transformer_forward.2} parent=15 // pred_region
        %p424 = scmp.lt.s32.totalorder %s27, 1
        %s425 = scalar_select %p424, %s27, 1
        %s426 = smul.addr %s425, 4
        %s427 = smul.addr %s426, 8
        %s428 = scalar_lea.vmem %s1, %s427
      $region24: #{transformer_forward.2} parent=15 // pred_fallthru
        _
      // Predicated region
      $region25: #{transformer_forward.2} parent=15 // pred_check
        %p429 = pneg %p103
      $region26: #{transformer_forward.2} parent=15 // pred_check_branch
        %431 = sbr.rel (%p429) target = $region28
      $region27: #{transformer_forward.2} parent=15 // pred_region
        %p432 = scmp.lt.s32.totalorder %s27, 1
        %s433 = scalar_select %p432, %s27, 1
        %s434 = scalar_lea.vmem %s2, %s433
      $region28: #{transformer_forward.2} parent=15 // pred_fallthru
        _
      // Predicated region
      $region29: #{transformer_forward.2} parent=15 // pred_check
        %p435 = pneg %p129
      $region30: #{transformer_forward.2} parent=15 // pred_check_branch
        %437 = sbr.rel (%p435) target = $region32
      $region31: #{transformer_forward.2} parent=15 // pred_region
        %p438 = scmp.lt.s32.totalorder %s27, 1
        %s439 = scalar_select %p438, %s27, 1
        %s440 = smul.addr %s439, 4
        %s441 = smul.addr %s440, 8
        %s442 = scalar_lea.vmem %s3, %s441
      $region32: #{transformer_forward.2} parent=15 // pred_fallthru
        _
      // Predicated region
      $region33: #{transformer_forward.2} parent=15 // pred_check
        %p443 = pneg %p155
      $region34: #{transformer_forward.2} parent=15 // pred_check_branch
        %445 = sbr.rel (%p443) target = $region36
      $region35: #{transformer_forward.2} parent=15 // pred_region
        %p446 = scmp.lt.s32.totalorder %s27, 1
        %s447 = scalar_select %p446, %s27, 1
        %s448 = scalar_lea.vmem %s4, %s447
      $region36: #{transformer_forward.2} parent=15 // pred_fallthru
        _
      // Predicated region
      $region37: #{transformer_forward.2} parent=15 // pred_check
        %p449 = pneg %p181
      $region38: #{transformer_forward.2} parent=15 // pred_check_branch
        %451 = sbr.rel (%p449) target = $region40
      $region39: #{transformer_forward.2} parent=15 // pred_region
        %p452 = scmp.lt.s32.totalorder %s27, 1
        %s453 = scalar_select %p452, %s27, 1
        %s454 = scalar_lea.vmem %s5, %s453
      $region40: #{transformer_forward.2} parent=15 // pred_fallthru
        _
      // Predicated region
      $region41: #{transformer_forward.2} parent=15 // pred_check
        %p455 = pneg %p207
      $region42: #{transformer_forward.2} parent=15 // pred_check_branch
        %457 = sbr.rel (%p455) target = $region44
      $region43: #{transformer_forward.2} parent=15 // pred_region
        %p458 = scmp.lt.s32.totalorder %s27, 1
        %s459 = scalar_select %p458, %s27, 1
        %s460 = scalar_lea.vmem %s6, %s459
      $region44: #{transformer_forward.2} parent=15 // pred_fallthru
        _
      // Predicated region
      $region45: #{transformer_forward.2} parent=15 // pred_check
        %p461 = pneg %p233
      $region46: #{transformer_forward.2} parent=15 // pred_check_branch
        %463 = sbr.rel (%p461) target = $region48
      $region47: #{transformer_forward.2} parent=15 // pred_region
        %p464 = scmp.lt.s32.totalorder %s27, 1
        %s465 = scalar_select %p464, %s27, 1
        %s466 = smul.addr %s465, 4
        %s467 = smul.addr %s466, 8
        %s468 = scalar_lea.vmem %s7, %s467
      $region48: #{transformer_forward.2} parent=15 // pred_fallthru
        _
      // Predicated region
      $region49: #{transformer_forward.2} parent=15 // pred_check
        %p469 = pneg %p259
      $region50: #{transformer_forward.2} parent=15 // pred_check_branch
        %471 = sbr.rel (%p469) target = $region52
      $region51: #{transformer_forward.2} parent=15 // pred_region
        %p472 = scmp.lt.s32.totalorder %s27, 1
        %s473 = scalar_select %p472, %s27, 1
        %s474 = scalar_lea.vmem %s8, %s473
      $region52: #{transformer_forward.2} parent=15 // pred_fallthru
        _
      // Predicated region
      $region53: #{transformer_forward.2} parent=15 // pred_check
        %p475 = pneg %p285
      $region54: #{transformer_forward.2} parent=15 // pred_check_branch
        %477 = sbr.rel (%p475) target = $region56
      $region55: #{transformer_forward.2} parent=15 // pred_region
        %p478 = scmp.lt.s32.totalorder %s27, 1
        %s479 = scalar_select %p478, %s27, 1
        %s480 = smul.addr %s479, 8
        %s481 = smul.addr %s480, 8
        %s482 = scalar_lea.vmem %s9, %s481
      $region56: #{transformer_forward.2} parent=15 // pred_fallthru
        _
      // Predicated region
      $region57: #{transformer_forward.2} parent=15 // pred_check
        %p483 = pneg %p311
      $region58: #{transformer_forward.2} parent=15 // pred_check_branch
        %485 = sbr.rel (%p483) target = $region60
      $region59: #{transformer_forward.2} parent=15 // pred_region
        %p486 = scmp.lt.s32.totalorder %s27, 1
        %s487 = scalar_select %p486, %s27, 1
        %s488 = scalar_lea.vmem %s10, %s487
      $region60: #{transformer_forward.2} parent=15 // pred_fallthru
        _
      // Predicated region
      $region61: #{transformer_forward.2} parent=15 // pred_check
        %p489 = pneg %p337
      $region62: #{transformer_forward.2} parent=15 // pred_check_branch
        %491 = sbr.rel (%p489) target = $region64
      $region63: #{transformer_forward.2} parent=15 // pred_region
        %p492 = scmp.lt.s32.totalorder %s27, 1
        %s493 = scalar_select %p492, %s27, 1
        %s494 = scalar_lea.vmem %s11, %s493
      $region64: #{transformer_forward.2} parent=15 // pred_fallthru
        _
      // Predicated region
      $region65: #{transformer_forward.2} parent=15 // pred_check
        %p495 = pneg %p363
      $region66: #{transformer_forward.2} parent=15 // pred_check_branch
        %497 = sbr.rel (%p495) target = $region68
      $region67: #{transformer_forward.2} parent=15 // pred_region
        %p498 = scmp.lt.s32.totalorder %s27, 1
        %s499 = scalar_select %p498, %s27, 1
        %s500 = scalar_lea.vmem %s12, %s499
      $region68: #{transformer_forward.2} parent=15 // pred_fallthru
        _
    $region16: #{transformer_forward.2} parent=5 // pred_fallthru
      _
    %p501 = scmp.le.s32.totalorder 1, %s19
    %p502 = scmp.lt.s32.totalorder %s19, 5
    %p503 = pnand %p501, %p502
    %p504 = pneg %p503
    // Predicated region
    $region69: #{transformer_forward.2} parent=5 // pred_check
      _
    $region70: #{transformer_forward.2} parent=5 // pred_check_branch
      %506 = sbr.rel (%p503) target = $region72
    $region71: #{transformer_forward.2} parent=5 // pred_region
      %s507 = ssub.s32 %s19, 1
      %p508 = scmp.lt.s32.totalorder %s28, 1
      %s509 = scalar_select %p508, %s28, 1
      %s510 = smul.addr %s509, 8
      %s511 = scalar_lea.vmem %s0, %s510
      %p512 = pneg %p57
      %p513 = pneg %p54
      %p514 = scmp.lt.s32.totalorder %s29, 1
      %s515 = scalar_select %p514, %s29, 1
      %s516 = smul.addr %s515, 4
      %s517 = smul.addr %s516, 8
      %s518 = scalar_lea.vmem %s1, %s517
      %p519 = pneg %p83
      %p520 = pneg %p80
      %p521 = scmp.lt.s32.totalorder %s29, 1
      %s522 = scalar_select %p521, %s29, 1
      %s523 = scalar_lea.vmem %s2, %s522
      %p524 = pneg %p109
      %p525 = pneg %p106
      %p526 = scmp.lt.s32.totalorder %s29, 1
      %s527 = scalar_select %p526, %s29, 1
      %s528 = smul.addr %s527, 4
      %s529 = smul.addr %s528, 8
      %s530 = scalar_lea.vmem %s3, %s529
      %p531 = pneg %p135
      %p532 = pneg %p132
      %p533 = scmp.lt.s32.totalorder %s29, 1
      %s534 = scalar_select %p533, %s29, 1
      %s535 = scalar_lea.vmem %s4, %s534
      %p536 = pneg %p161
      %p537 = pneg %p158
      %p538 = scmp.lt.s32.totalorder %s29, 1
      %s539 = scalar_select %p538, %s29, 1
      %s540 = scalar_lea.vmem %s5, %s539
      %p541 = pneg %p187
      %p542 = pneg %p184
      %p543 = scmp.lt.s32.totalorder %s29, 1
      %s544 = scalar_select %p543, %s29, 1
      %s545 = scalar_lea.vmem %s6, %s544
      %p546 = pneg %p213
      %p547 = pneg %p210
      %p548 = scmp.lt.s32.totalorder %s29, 1
      %s549 = scalar_select %p548, %s29, 1
      %s550 = smul.addr %s549, 4
      %s551 = smul.addr %s550, 8
      %s552 = scalar_lea.vmem %s7, %s551
      %p553 = pneg %p239
      %p554 = pneg %p236
      %p555 = scmp.lt.s32.totalorder %s29, 1
      %s556 = scalar_select %p555, %s29, 1
      %s557 = scalar_lea.vmem %s8, %s556
      %p558 = pneg %p265
      %p559 = pneg %p262
      %p560 = scmp.lt.s32.totalorder %s29, 1
      %s561 = scalar_select %p560, %s29, 1
      %s562 = smul.addr %s561, 8
      %s563 = smul.addr %s562, 8
      %s564 = scalar_lea.vmem %s9, %s563
      %p565 = pneg %p291
      %p566 = pneg %p288
      %p567 = scmp.lt.s32.totalorder %s29, 1
      %s568 = scalar_select %p567, %s29, 1
      %s569 = scalar_lea.vmem %s10, %s568
      %p570 = pneg %p317
      %p571 = pneg %p314
      %p572 = scmp.lt.s32.totalorder %s29, 1
      %s573 = scalar_select %p572, %s29, 1
      %s574 = scalar_lea.vmem %s11, %s573
      %p575 = pneg %p343
      %p576 = pneg %p340
      %p577 = scmp.lt.s32.totalorder %s29, 1
      %s578 = scalar_select %p577, %s29, 1
      %s579 = scalar_lea.vmem %s12, %s578
      %p580 = pneg %p369
      %p581 = pneg %p366
      %p582 = pneg %p395
      %p583 = pneg %p392
      %p584 = scmp.lt.s32.totalorder %s28, 1
      %s585 = scalar_select %p584, %s28, 1
      %s586 = smul.addr %s585, 8
      %s587 = scalar_lea.vmem %s13, %s586
      %p588 = scmp.lt.s32.totalorder %s28, 1
      %s589 = scalar_select %p588, %s28, 1
      %s590 = smul.addr %s589, 8
      %s591 = scalar_lea.vmem %s0, %s590
      %p592 = scmp.lt.s32.totalorder %s29, 1
      %s593 = scalar_select %p592, %s29, 1
      %s594 = smul.addr %s593, 4
      %s595 = smul.addr %s594, 8
      %s596 = scalar_lea.vmem %s1, %s595
      %p597 = scmp.lt.s32.totalorder %s29, 1
      %s598 = scalar_select %p597, %s29, 1
      %s599 = scalar_lea.vmem %s2, %s598
      %p600 = scmp.lt.s32.totalorder %s29, 1
      %s601 = scalar_select %p600, %s29, 1
      %s602 = smul.addr %s601, 4
      %s603 = smul.addr %s602, 8
      %s604 = scalar_lea.vmem %s3, %s603
      %p605 = scmp.lt.s32.totalorder %s29, 1
      %s606 = scalar_select %p605, %s29, 1
      %s607 = scalar_lea.vmem %s4, %s606
      %p608 = scmp.lt.s32.totalorder %s29, 1
      %s609 = scalar_select %p608, %s29, 1
      %s610 = scalar_lea.vmem %s5, %s609
      %p611 = scmp.lt.s32.totalorder %s29, 1
      %s612 = scalar_select %p611, %s29, 1
      %s613 = scalar_lea.vmem %s6, %s612
      %p614 = scmp.lt.s32.totalorder %s29, 1
      %s615 = scalar_select %p614, %s29, 1
      %s616 = smul.addr %s615, 4
      %s617 = smul.addr %s616, 8
      %s618 = scalar_lea.vmem %s7, %s617
      %p619 = scmp.lt.s32.totalorder %s29, 1
      %s620 = scalar_select %p619, %s29, 1
      %s621 = scalar_lea.vmem %s8, %s620
      %p622 = scmp.lt.s32.totalorder %s29, 1
      %s623 = scalar_select %p622, %s29, 1
      %s624 = smul.addr %s623, 8
      %s625 = smul.addr %s624, 8
      %s626 = scalar_lea.vmem %s9, %s625
      %p627 = scmp.lt.s32.totalorder %s29, 1
      %s628 = scalar_select %p627, %s29, 1
      %s629 = scalar_lea.vmem %s10, %s628
      %p630 = scmp.lt.s32.totalorder %s29, 1
      %s631 = scalar_select %p630, %s29, 1
      %s632 = scalar_lea.vmem %s11, %s631
      %p633 = scmp.lt.s32.totalorder %s29, 1
      %s634 = scalar_select %p633, %s29, 1
      %s635 = scalar_lea.vmem %s12, %s634
      %p636 = scmp.lt.s32.totalorder %s28, 1
      %s637 = scalar_select %p636, %s28, 1
      %s638 = smul.addr %s637, 8
      %s639 = scalar_lea.vmem %s13, %s638
      %p641 = scmp.eq.s32.totalorder %s29, 0
      // Predicated region
      $region73: #{transformer_forward.2} parent=71 // pred_check
        %p642 = pneg %p641
      $region74: #{transformer_forward.2} parent=71 // pred_check_branch
        %644 = sbr.rel (%p642) target = $region76
      $region75: #{transformer_forward.2} parent=71 // pred_region
        %v645 = vld [vmem:[%s591] sm:$0xff]
        %vm646 = vcmask 261120
        %647 = vst.msk [vmem:[%s639] sm:$0xff] %vm646, %v645
      $region76: #{transformer_forward.2} parent=71 // pred_fallthru
        _
      %v648 = vld [vmem:[%s639] sm:$0xff]
      %v649 = vld [vmem:[%s596] sm:$0xff]
      %v650 = vld [vmem:[%s596 + $0x8] sm:$0xff]
      %v651 = vld [vmem:[%s596 + $0x10] sm:$0xff]
      %v652 = vld [vmem:[%s596 + $0x18] sm:$0xff]
      %v653 = vpack.c.bf16 %v648, %v648
      %v654 = vpack.c.bf16 %v650, %v649
      %v655 = vpack.c.bf16 %v652, %v651
      %v656 = vld [vmem:[%s599] sm:$0x1]
      %v658 = vlaneseq
      %v659 = vshrl.u32 %v658, 7
      %v660 = vsub.s32 0, %v659
      %v661 = vrot.slane %v656, %v660
      %vm663 = vcmask 261120
      %v665 = vsel %vm663, %v653, 0
      %667 = vmatprep.subr.bf16.mxu0 0
      %668 = vmatpush1.bf16.msra.mxu0 %v654
      %669 = vmatprep.subr.bf16.mxu0 0
      %670 = vmatpush1.bf16.msra.mxu0 %v655
      %671 = vmatprep.subr.bf16.mxu0 0
      %672 = vmatpush1.bf16.msra.mxu0 0
      %673 = vmatprep.subr.bf16.mxu0 0
      %674 = vmatpush1.bf16.msra.mxu0 0
      %675 = vmatprep.subr.bf16.mxu0 0
      %676 = vmatpush1.bf16.msra.mxu0 0
      %677 = vmatprep.subr.bf16.mxu0 0
      %678 = vmatpush1.bf16.msra.mxu0 0
      %679 = vmatprep.subr.bf16.mxu0 0
      %680 = vmatpush1.bf16.msra.mxu0 0
      %681 = vmatprep.subr.bf16.mxu0 0
      %682 = vmatpush1.bf16.msra.mxu0 0
      %683 = vmatprep.subr.bf16.mxu0 0
      %684 = vmatpush1.bf16.msra.mxu0 0
      %685 = vmatprep.subr.bf16.mxu0 0
      %686 = vmatpush1.bf16.msra.mxu0 0
      %687 = vmatprep.subr.bf16.mxu0 0
      %688 = vmatpush1.bf16.msra.mxu0 0
      %689 = vmatprep.subr.bf16.mxu0 0
      %690 = vmatpush1.bf16.msra.mxu0 0
      %691 = vmatprep.subr.bf16.mxu0 0
      %692 = vmatpush1.bf16.msra.mxu0 0
      %693 = vmatprep.subr.bf16.mxu0 0
      %694 = vmatpush1.bf16.msra.mxu0 0
      %695 = vmatprep.subr.bf16.mxu0 0
      %696 = vmatpush1.bf16.msra.mxu0 0
      %697 = vmatprep.subr.bf16.mxu0 0
      %698 = vmatpush1.bf16.msra.mxu0 0
      %699 = vmatprep.mubr.bf16.mxu0 0
      %700 = vmatmul.mubr.bf16.gmra.mrb[0].mxu0 %v665
      %v701 = vpop.f32.mrb[0].mxu0
      %v702 = vadd.f32 %v661, %v701
      %v703 = vpop.f32.mrb[0].mxu0
      %v704 = vpop.f32.mrb[0].mxu0
      %v705 = vpop.f32.mrb[0].mxu0
      %706 = vdwg.mxu0
      %v707 = vpack.c.bf16 %v702, %v702
      %709 = vrot.lane.b32.xlu0 %v707, 96
      %v710 = vpop.permute.xlu0 %709
      %vm711 = vcmask 64512
      %v713 = vsel %vm711, %v707, 0
      %v716 = vsel %vm711, %v710, 0
      %718 = vmatprep.subr.bf16.mxu0 0
      %719 = vmatpush1.bf16.xpose.msra.mxu0 %v716
      %720 = vmatprep.subr.bf16.mxu0 0
      %721 = vmatpush1.bf16.xpose.msra.mxu0 0
      %722 = vmatprep.subr.bf16.mxu0 0
      %723 = vmatpush1.bf16.xpose.msra.mxu0 0
      %724 = vmatprep.subr.bf16.mxu0 0
      %725 = vmatpush1.bf16.xpose.msra.mxu0 0
      %726 = vmatprep.subr.bf16.mxu0 0
      %727 = vmatpush1.bf16.xpose.msra.mxu0 0
      %728 = vmatprep.subr.bf16.mxu0 0
      %729 = vmatpush1.bf16.xpose.msra.mxu0 0
      %730 = vmatprep.subr.bf16.mxu0 0
      %731 = vmatpush1.bf16.xpose.msra.mxu0 0
      %732 = vmatprep.subr.bf16.mxu0 0
      %733 = vmatpush1.bf16.xpose.msra.mxu0 0
      %734 = vmatprep.subr.bf16.mxu0 0
      %735 = vmatpush1.bf16.xpose.msra.mxu0 0
      %736 = vmatprep.subr.bf16.mxu0 0
      %737 = vmatpush1.bf16.xpose.msra.mxu0 0
      %738 = vmatprep.subr.bf16.mxu0 0
      %739 = vmatpush1.bf16.xpose.msra.mxu0 0
      %740 = vmatprep.subr.bf16.mxu0 0
      %741 = vmatpush1.bf16.xpose.msra.mxu0 0
      %742 = vmatprep.subr.bf16.mxu0 0
      %743 = vmatpush1.bf16.xpose.msra.mxu0 0
      %744 = vmatprep.subr.bf16.mxu0 0
      %745 = vmatpush1.bf16.xpose.msra.mxu0 0
      %746 = vmatprep.subr.bf16.mxu0 0
      %747 = vmatpush1.bf16.xpose.msra.mxu0 0
      %748 = vmatprep.subr.bf16.mxu0 0
      %749 = vmatpush1.bf16.xpose.msra.mxu0 0
      %750 = vmatprep.mubr.bf16.mxu0 0
      %751 = vmatmul.mubr.bf16.gmra.mrb[0].mxu0 %v713
      %v752 = vpop.f32.mrb[0].mxu0
      %v753 = vadd.f32 0.0, %v752
      %v754 = vpop.f32.mrb[0].mxu0
      %v755 = vpop.f32.mrb[0].mxu0
      %v756 = vpop.f32.mrb[0].mxu0
      %757 = vdwg.mxu0
      %v758 = vmul.f32 %v753, 0.35355338
      %v759 = vsel %vm711, %v758, -inf
      %760 = vmax.xlane.f32.xlu0 %v759
      %v761 = vpop.xlane.xlu0 %760
      %v762 = vsub.f32 %v758, %v761
      %v763 = vmul.f32 %v762, 1.442695
      %v764 = vpow.pop %v763
      %v765 = vsel %vm711, %v764, 0.0
      %766 = vadd.xlane.f32.xlu0 %v765
      %v767 = vpop.xlane.xlu0 %766
      %v768 = vrcp.pop %v767
      %v769 = vmul.f32 %v764, %v768
      %v770 = vpack.c.bf16 %v769, %v769
      %771 = vrot.lane.b32.xlu0 %v707, 64
      %v772 = vpop.permute.xlu0 %771
      %v774 = vsel %vm711, %v770, 0
      %vm776 = vcmask 1043456
      %v778 = vsel %vm776, %v772, 0
      %780 = vmatprep.subr.bf16.mxu0 0
      %781 = vmatpush1.bf16.msra.mxu0 %v778
      %782 = vmatprep.subr.bf16.mxu0 0
      %783 = vmatpush1.bf16.msra.mxu0 0
      %784 = vmatprep.subr.bf16.mxu0 0
      %785 = vmatpush1.bf16.msra.mxu0 0
      %786 = vmatprep.subr.bf16.mxu0 0
      %787 = vmatpush1.bf16.msra.mxu0 0
      %788 = vmatprep.subr.bf16.mxu0 0
      %789 = vmatpush1.bf16.msra.mxu0 0
      %790 = vmatprep.subr.bf16.mxu0 0
      %791 = vmatpush1.bf16.msra.mxu0 0
      %792 = vmatprep.subr.bf16.mxu0 0
      %793 = vmatpush1.bf16.msra.mxu0 0
      %794 = vmatprep.subr.bf16.mxu0 0
      %795 = vmatpush1.bf16.msra.mxu0 0
      %796 = vmatprep.subr.bf16.mxu0 0
      %797 = vmatpush1.bf16.msra.mxu0 0
      %798 = vmatprep.subr.bf16.mxu0 0
      %799 = vmatpush1.bf16.msra.mxu0 0
      %800 = vmatprep.subr.bf16.mxu0 0
      %801 = vmatpush1.bf16.msra.mxu0 0
      %802 = vmatprep.subr.bf16.mxu0 0
      %803 = vmatpush1.bf16.msra.mxu0 0
      %804 = vmatprep.subr.bf16.mxu0 0
      %805 = vmatpush1.bf16.msra.mxu0 0
      %806 = vmatprep.subr.bf16.mxu0 0
      %807 = vmatpush1.bf16.msra.mxu0 0
      %808 = vmatprep.subr.bf16.mxu0 0
      %809 = vmatpush1.bf16.msra.mxu0 0
      %810 = vmatprep.subr.bf16.mxu0 0
      %811 = vmatpush1.bf16.msra.mxu0 0
      %812 = vmatprep.mubr.bf16.mxu0 0
      %813 = vmatmul.mubr.bf16.gmra.mrb[0].mxu0 %v774
      %v814 = vpop.f32.mrb[0].mxu0
      %v815 = vadd.f32 0.0, %v814
      %v816 = vpop.f32.mrb[0].mxu0
      %v817 = vpop.f32.mrb[0].mxu0
      %v818 = vpop.f32.mrb[0].mxu0
      %819 = vdwg.mxu0
      %820 = vrot.lane.b32.xlu0 %v707, 120
      %v821 = vpop.permute.xlu0 %820
      %822 = vrot.lane.b32.xlu0 %v707, 88
      %v823 = vpop.permute.xlu0 %822
      %v825 = vsel %vm711, %v821, 0
      %v828 = vsel %vm711, %v823, 0
      %830 = vmatprep.subr.bf16.mxu0 0
      %831 = vmatpush1.bf16.xpose.msra.mxu0 %v828
      %832 = vmatprep.subr.bf16.mxu0 0
      %833 = vmatpush1.bf16.xpose.msra.mxu0 0
      %834 = vmatprep.subr.bf16.mxu0 0
      %835 = vmatpush1.bf16.xpose.msra.mxu0 0
      %836 = vmatprep.subr.bf16.mxu0 0
      %837 = vmatpush1.bf16.xpose.msra.mxu0 0
      %838 = vmatprep.subr.bf16.mxu0 0
      %839 = vmatpush1.bf16.xpose.msra.mxu0 0
      %840 = vmatprep.subr.bf16.mxu0 0
      %841 = vmatpush1.bf16.xpose.msra.mxu0 0
      %842 = vmatprep.subr.bf16.mxu0 0
      %843 = vmatpush1.bf16.xpose.msra.mxu0 0
      %844 = vmatprep.subr.bf16.mxu0 0
      %845 = vmatpush1.bf16.xpose.msra.mxu0 0
      %846 = vmatprep.subr.bf16.mxu0 0
      %847 = vmatpush1.bf16.xpose.msra.mxu0 0
      %848 = vmatprep.subr.bf16.mxu0 0
      %849 = vmatpush1.bf16.xpose.msra.mxu0 0
      %850 = vmatprep.subr.bf16.mxu0 0
      %851 = vmatpush1.bf16.xpose.msra.mxu0 0
      %852 = vmatprep.subr.bf16.mxu0 0
      %853 = vmatpush1.bf16.xpose.msra.mxu0 0
      %854 = vmatprep.subr.bf16.mxu0 0
      %855 = vmatpush1.bf16.xpose.msra.mxu0 0
      %856 = vmatprep.subr.bf16.mxu0 0
      %857 = vmatpush1.bf16.xpose.msra.mxu0 0
      %858 = vmatprep.subr.bf16.mxu0 0
      %859 = vmatpush1.bf16.xpose.msra.mxu0 0
      %860 = vmatprep.subr.bf16.mxu0 0
      %861 = vmatpush1.bf16.xpose.msra.mxu0 0
      %862 = vmatprep.mubr.bf16.mxu0 0
      %863 = vmatmul.mubr.bf16.gmra.mrb[0].mxu0 %v825
      %v864 = vpop.f32.mrb[0].mxu0
      %v865 = vadd.f32 0.0, %v864
      %v866 = vpop.f32.mrb[0].mxu0
      %v867 = vpop.f32.mrb[0].mxu0
      %v868 = vpop.f32.mrb[0].mxu0
      %869 = vdwg.mxu0
      %v870 = vmul.f32 %v865, 0.35355338
      %v871 = vsel %vm711, %v870, -inf
      %872 = vmax.xlane.f32.xlu0 %v871
      %v873 = vpop.xlane.xlu0 %872
      %v874 = vsub.f32 %v870, %v873
      %v875 = vmul.f32 %v874, 1.442695
      %v876 = vpow.pop %v875
      %v877 = vsel %vm711, %v876, 0.0
      %878 = vadd.xlane.f32.xlu0 %v877
      %v879 = vpop.xlane.xlu0 %878
      %v880 = vrcp.pop %v879
      %v881 = vmul.f32 %v876, %v880
      %v882 = vpack.c.bf16 %v881, %v881
      %883 = vrot.lane.b32.xlu0 %v707, 56
      %v884 = vpop.permute.xlu0 %883
      %v886 = vsel %vm711, %v882, 0
      %v889 = vsel %vm776, %v884, 0
      %891 = vmatprep.subr.bf16.mxu0 0
      %892 = vmatpush1.bf16.msra.mxu0 %v889
      %893 = vmatprep.subr.bf16.mxu0 0
      %894 = vmatpush1.bf16.msra.mxu0 0
      %895 = vmatprep.subr.bf16.mxu0 0
      %896 = vmatpush1.bf16.msra.mxu0 0
      %897 = vmatprep.subr.bf16.mxu0 0
      %898 = vmatpush1.bf16.msra.mxu0 0
      %899 = vmatprep.subr.bf16.mxu0 0
      %900 = vmatpush1.bf16.msra.mxu0 0
      %901 = vmatprep.subr.bf16.mxu0 0
      %902 = vmatpush1.bf16.msra.mxu0 0
      %903 = vmatprep.subr.bf16.mxu0 0
      %904 = vmatpush1.bf16.msra.mxu0 0
      %905 = vmatprep.subr.bf16.mxu0 0
      %906 = vmatpush1.bf16.msra.mxu0 0
      %907 = vmatprep.subr.bf16.mxu0 0
      %908 = vmatpush1.bf16.msra.mxu0 0
      %909 = vmatprep.subr.bf16.mxu0 0
      %910 = vmatpush1.bf16.msra.mxu0 0
      %911 = vmatprep.subr.bf16.mxu0 0
      %912 = vmatpush1.bf16.msra.mxu0 0
      %913 = vmatprep.subr.bf16.mxu0 0
      %914 = vmatpush1.bf16.msra.mxu0 0
      %915 = vmatprep.subr.bf16.mxu0 0
      %916 = vmatpush1.bf16.msra.mxu0 0
      %917 = vmatprep.subr.bf16.mxu0 0
      %918 = vmatpush1.bf16.msra.mxu0 0
      %919 = vmatprep.subr.bf16.mxu0 0
      %920 = vmatpush1.bf16.msra.mxu0 0
      %921 = vmatprep.subr.bf16.mxu0 0
      %922 = vmatpush1.bf16.msra.mxu0 0
      %923 = vmatprep.mubr.bf16.mxu0 0
      %924 = vmatmul.mubr.bf16.gmra.mrb[0].mxu0 %v886
      %v925 = vpop.f32.mrb[0].mxu0
      %v926 = vadd.f32 0.0, %v925
      %v927 = vpop.f32.mrb[0].mxu0
      %v928 = vpop.f32.mrb[0].mxu0
      %v929 = vpop.f32.mrb[0].mxu0
      %930 = vdwg.mxu0
      %931 = vrot.lane.b32.xlu0 %v707, 112
      %v932 = vpop.permute.xlu0 %931
      %933 = vrot.lane.b32.xlu0 %v707, 80
      %v934 = vpop.permute.xlu0 %933
      %v936 = vsel %vm711, %v932, 0
      %v939 = vsel %vm711, %v934, 0
      %941 = vmatprep.subr.bf16.mxu0 0
      %942 = vmatpush1.bf16.xpose.msra.mxu0 %v939
      %943 = vmatprep.subr.bf16.mxu0 0
      %944 = vmatpush1.bf16.xpose.msra.mxu0 0
      %945 = vmatprep.subr.bf16.mxu0 0
      %946 = vmatpush1.bf16.xpose.msra.mxu0 0
      %947 = vmatprep.subr.bf16.mxu0 0
      %948 = vmatpush1.bf16.xpose.msra.mxu0 0
      %949 = vmatprep.subr.bf16.mxu0 0
      %950 = vmatpush1.bf16.xpose.msra.mxu0 0
      %951 = vmatprep.subr.bf16.mxu0 0
      %952 = vmatpush1.bf16.xpose.msra.mxu0 0
      %953 = vmatprep.subr.bf16.mxu0 0
      %954 = vmatpush1.bf16.xpose.msra.mxu0 0
      %955 = vmatprep.subr.bf16.mxu0 0
      %956 = vmatpush1.bf16.xpose.msra.mxu0 0
      %957 = vmatprep.subr.bf16.mxu0 0
      %958 = vmatpush1.bf16.xpose.msra.mxu0 0
      %959 = vmatprep.subr.bf16.mxu0 0
      %960 = vmatpush1.bf16.xpose.msra.mxu0 0
      %961 = vmatprep.subr.bf16.mxu0 0
      %962 = vmatpush1.bf16.xpose.msra.mxu0 0
      %963 = vmatprep.subr.bf16.mxu0 0
      %964 = vmatpush1.bf16.xpose.msra.mxu0 0
      %965 = vmatprep.subr.bf16.mxu0 0
      %966 = vmatpush1.bf16.xpose.msra.mxu0 0
      %967 = vmatprep.subr.bf16.mxu0 0
      %968 = vmatpush1.bf16.xpose.msra.mxu0 0
      %969 = vmatprep.subr.bf16.mxu0 0
      %970 = vmatpush1.bf16.xpose.msra.mxu0 0
      %971 = vmatprep.subr.bf16.mxu0 0
      %972 = vmatpush1.bf16.xpose.msra.mxu0 0
      %973 = vmatprep.mubr.bf16.mxu0 0
      %974 = vmatmul.mubr.bf16.gmra.mrb[0].mxu0 %v936
      %v975 = vpop.f32.mrb[0].mxu0
      %v976 = vadd.f32 0.0, %v975
      %v977 = vpop.f32.mrb[0].mxu0
      %v978 = vpop.f32.mrb[0].mxu0
      %v979 = vpop.f32.mrb[0].mxu0
      %980 = vdwg.mxu0
      %v981 = vmul.f32 %v976, 0.35355338
      %v982 = vsel %vm711, %v981, -inf
      %983 = vmax.xlane.f32.xlu0 %v982
      %v984 = vpop.xlane.xlu0 %983
      %v985 = vsub.f32 %v981, %v984
      %v986 = vmul.f32 %v985, 1.442695
      %v987 = vpow.pop %v986
      %v988 = vsel %vm711, %v987, 0.0
      %989 = vadd.xlane.f32.xlu0 %v988
      %v990 = vpop.xlane.xlu0 %989
      %v991 = vrcp.pop %v990
      %v992 = vmul.f32 %v987, %v991
      %v993 = vpack.c.bf16 %v992, %v992
      %994 = vrot.lane.b32.xlu0 %v707, 48
      %v995 = vpop.permute.xlu0 %994
      %v997 = vsel %vm711, %v993, 0
      %v1000 = vsel %vm776, %v995, 0
      %1002 = vmatprep.subr.bf16.mxu0 0
      %1003 = vmatpush1.bf16.msra.mxu0 %v1000
      %1004 = vmatprep.subr.bf16.mxu0 0
      %1005 = vmatpush1.bf16.msra.mxu0 0
      %1006 = vmatprep.subr.bf16.mxu0 0
      %1007 = vmatpush1.bf16.msra.mxu0 0
      %1008 = vmatprep.subr.bf16.mxu0 0
      %1009 = vmatpush1.bf16.msra.mxu0 0
      %1010 = vmatprep.subr.bf16.mxu0 0
      %1011 = vmatpush1.bf16.msra.mxu0 0
      %1012 = vmatprep.subr.bf16.mxu0 0
      %1013 = vmatpush1.bf16.msra.mxu0 0
      %1014 = vmatprep.subr.bf16.mxu0 0
      %1015 = vmatpush1.bf16.msra.mxu0 0
      %1016 = vmatprep.subr.bf16.mxu0 0
      %1017 = vmatpush1.bf16.msra.mxu0 0
      %1018 = vmatprep.subr.bf16.mxu0 0
      %1019 = vmatpush1.bf16.msra.mxu0 0
      %1020 = vmatprep.subr.bf16.mxu0 0
      %1021 = vmatpush1.bf16.msra.mxu0 0
      %1022 = vmatprep.subr.bf16.mxu0 0
      %1023 = vmatpush1.bf16.msra.mxu0 0
      %1024 = vmatprep.subr.bf16.mxu0 0
      %1025 = vmatpush1.bf16.msra.mxu0 0
      %1026 = vmatprep.subr.bf16.mxu0 0
      %1027 = vmatpush1.bf16.msra.mxu0 0
      %1028 = vmatprep.subr.bf16.mxu0 0
      %1029 = vmatpush1.bf16.msra.mxu0 0
      %1030 = vmatprep.subr.bf16.mxu0 0
      %1031 = vmatpush1.bf16.msra.mxu0 0
      %1032 = vmatprep.subr.bf16.mxu0 0
      %1033 = vmatpush1.bf16.msra.mxu0 0
      %1034 = vmatprep.mubr.bf16.mxu0 0
      %1035 = vmatmul.mubr.bf16.gmra.mrb[0].mxu0 %v997
      %v1036 = vpop.f32.mrb[0].mxu0
      %v1037 = vadd.f32 0.0, %v1036
      %v1038 = vpop.f32.mrb[0].mxu0
      %v1039 = vpop.f32.mrb[0].mxu0
      %v1040 = vpop.f32.mrb[0].mxu0
      %1041 = vdwg.mxu0
      %1042 = vrot.lane.b32.xlu0 %v707, 104
      %v1043 = vpop.permute.xlu0 %1042
      %1044 = vrot.lane.b32.xlu0 %v707, 72
      %v1045 = vpop.permute.xlu0 %1044
      %v1047 = vsel %vm711, %v1043, 0
      %v1050 = vsel %vm711, %v1045, 0
      %1052 = vmatprep.subr.bf16.mxu0 0
      %1053 = vmatpush1.bf16.xpose.msra.mxu0 %v1050
      %1054 = vmatprep.subr.bf16.mxu0 0
      %1055 = vmatpush1.bf16.xpose.msra.mxu0 0
      %1056 = vmatprep.subr.bf16.mxu0 0
      %1057 = vmatpush1.bf16.xpose.msra.mxu0 0
      %1058 = vmatprep.subr.bf16.mxu0 0
      %1059 = vmatpush1.bf16.xpose.msra.mxu0 0
      %1060 = vmatprep.subr.bf16.mxu0 0
      %1061 = vmatpush1.bf16.xpose.msra.mxu0 0
      %1062 = vmatprep.subr.bf16.mxu0 0
      %1063 = vmatpush1.bf16.xpose.msra.mxu0 0
      %1064 = vmatprep.subr.bf16.mxu0 0
      %1065 = vmatpush1.bf16.xpose.msra.mxu0 0
      %1066 = vmatprep.subr.bf16.mxu0 0
      %1067 = vmatpush1.bf16.xpose.msra.mxu0 0
      %1068 = vmatprep.subr.bf16.mxu0 0
      %1069 = vmatpush1.bf16.xpose.msra.mxu0 0
      %1070 = vmatprep.subr.bf16.mxu0 0
      %1071 = vmatpush1.bf16.xpose.msra.mxu0 0
      %1072 = vmatprep.subr.bf16.mxu0 0
      %1073 = vmatpush1.bf16.xpose.msra.mxu0 0
      %1074 = vmatprep.subr.bf16.mxu0 0
      %1075 = vmatpush1.bf16.xpose.msra.mxu0 0
      %1076 = vmatprep.subr.bf16.mxu0 0
      %1077 = vmatpush1.bf16.xpose.msra.mxu0 0
      %1078 = vmatprep.subr.bf16.mxu0 0
      %1079 = vmatpush1.bf16.xpose.msra.mxu0 0
      %1080 = vmatprep.subr.bf16.mxu0 0
      %1081 = vmatpush1.bf16.xpose.msra.mxu0 0
      %1082 = vmatprep.subr.bf16.mxu0 0
      %1083 = vmatpush1.bf16.xpose.msra.mxu0 0
      %1084 = vmatprep.mubr.bf16.mxu0 0
      %1085 = vmatmul.mubr.bf16.gmra.mrb[0].mxu0 %v1047
      %v1086 = vpop.f32.mrb[0].mxu0
      %v1087 = vadd.f32 0.0, %v1086
      %v1088 = vpop.f32.mrb[0].mxu0
      %v1089 = vpop.f32.mrb[0].mxu0
      %v1090 = vpop.f32.mrb[0].mxu0
      %1091 = vdwg.mxu0
      %v1092 = vmul.f32 %v1087, 0.35355338
      %v1093 = vsel %vm711, %v1092, -inf
      %1094 = vmax.xlane.f32.xlu0 %v1093
      %v1095 = vpop.xlane.xlu0 %1094
      %v1096 = vsub.f32 %v1092, %v1095
      %v1097 = vmul.f32 %v1096, 1.442695
      %v1098 = vpow.pop %v1097
      %v1099 = vsel %vm711, %v1098, 0.0
      %1100 = vadd.xlane.f32.xlu0 %v1099
      %v1101 = vpop.xlane.xlu0 %1100
      %v1102 = vrcp.pop %v1101
      %v1103 = vmul.f32 %v1098, %v1102
      %v1104 = vpack.c.bf16 %v1103, %v1103
      %1105 = vrot.lane.b32.xlu0 %v707, 40
      %v1106 = vpop.permute.xlu0 %1105
      %v1108 = vsel %vm711, %v1104, 0
      %v1111 = vsel %vm776, %v1106, 0
      %1113 = vmatprep.subr.bf16.mxu0 0
      %1114 = vmatpush1.bf16.msra.mxu0 %v1111
      %1115 = vmatprep.subr.bf16.mxu0 0
      %1116 = vmatpush1.bf16.msra.mxu0 0
      %1117 = vmatprep.subr.bf16.mxu0 0
      %1118 = vmatpush1.bf16.msra.mxu0 0
      %1119 = vmatprep.subr.bf16.mxu0 0
      %1120 = vmatpush1.bf16.msra.mxu0 0
      %1121 = vmatprep.subr.bf16.mxu0 0
      %1122 = vmatpush1.bf16.msra.mxu0 0
      %1123 = vmatprep.subr.bf16.mxu0 0
      %1124 = vmatpush1.bf16.msra.mxu0 0
      %1125 = vmatprep.subr.bf16.mxu0 0
      %1126 = vmatpush1.bf16.msra.mxu0 0
      %1127 = vmatprep.subr.bf16.mxu0 0
      %1128 = vmatpush1.bf16.msra.mxu0 0
      %1129 = vmatprep.subr.bf16.mxu0 0
      %1130 = vmatpush1.bf16.msra.mxu0 0
      %1131 = vmatprep.subr.bf16.mxu0 0
      %1132 = vmatpush1.bf16.msra.mxu0 0
      %1133 = vmatprep.subr.bf16.mxu0 0
      %1134 = vmatpush1.bf16.msra.mxu0 0
      %1135 = vmatprep.subr.bf16.mxu0 0
      %1136 = vmatpush1.bf16.msra.mxu0 0
      %1137 = vmatprep.subr.bf16.mxu0 0
      %1138 = vmatpush1.bf16.msra.mxu0 0
      %1139 = vmatprep.subr.bf16.mxu0 0
      %1140 = vmatpush1.bf16.msra.mxu0 0
      %1141 = vmatprep.subr.bf16.mxu0 0
      %1142 = vmatpush1.bf16.msra.mxu0 0
      %1143 = vmatprep.subr.bf16.mxu0 0
      %1144 = vmatpush1.bf16.msra.mxu0 0
      %1145 = vmatprep.mubr.bf16.mxu0 0
      %1146 = vmatmul.mubr.bf16.gmra.mrb[0].mxu0 %v1108
      %v1147 = vpop.f32.mrb[0].mxu0
      %v1148 = vadd.f32 0.0, %v1147
      %v1149 = vpop.f32.mrb[0].mxu0
      %v1150 = vpop.f32.mrb[0].mxu0
      %v1151 = vpop.f32.mrb[0].mxu0
      %1152 = vdwg.mxu0
      %1154 = vrot.lane.b32.xlu0 %v926, 8
      %v1155 = vpop.permute.xlu0 %1154
      %1158 = vrot.lane.b32.xlu0 %v1037, 16
      %v1159 = vpop.permute.xlu0 %1158
      %1162 = vrot.lane.b32.xlu0 %v1148, 24
      %v1163 = vpop.permute.xlu0 %1162
      %v1165 = vsel %vm711, %v815, %v1155
      %vm1166 = vcmask 130048
      %v1167 = vsel %vm1166, %v1165, %v1159
      %vm1168 = vcmask 195584
      %v1169 = vsel %vm1168, %v1167, %v1163
      %v1170 = vld [vmem:[%s604] sm:$0xff]
      %v1171 = vld [vmem:[%s604 + $0x8] sm:$0xff]
      %v1172 = vld [vmem:[%s604 + $0x10] sm:$0xff]
      %v1173 = vld [vmem:[%s604 + $0x18] sm:$0xff]
      %v1174 = vpack.c.bf16 %v1169, %v1169
      %v1175 = vpack.c.bf16 %v1171, %v1170
      %v1176 = vpack.c.bf16 %v1173, %v1172
      %v1177 = vld [vmem:[%s607] sm:$0x1]
      %v1179 = vlaneseq
      %v1180 = vshrl.u32 %v1179, 7
      %v1181 = vsub.s32 0, %v1180
      %v1182 = vrot.slane %v1177, %v1181
      %v1185 = vsel %vm663, %v1174, 0
      %1187 = vmatprep.subr.bf16.mxu0 0
      %1188 = vmatpush1.bf16.msra.mxu0 %v1175
      %1189 = vmatprep.subr.bf16.mxu0 0
      %1190 = vmatpush1.bf16.msra.mxu0 %v1176
      %1191 = vmatprep.subr.bf16.mxu0 0
      %1192 = vmatpush1.bf16.msra.mxu0 0
      %1193 = vmatprep.subr.bf16.mxu0 0
      %1194 = vmatpush1.bf16.msra.mxu0 0
      %1195 = vmatprep.subr.bf16.mxu0 0
      %1196 = vmatpush1.bf16.msra.mxu0 0
      %1197 = vmatprep.subr.bf16.mxu0 0
      %1198 = vmatpush1.bf16.msra.mxu0 0
      %1199 = vmatprep.subr.bf16.mxu0 0
      %1200 = vmatpush1.bf16.msra.mxu0 0
      %1201 = vmatprep.subr.bf16.mxu0 0
      %1202 = vmatpush1.bf16.msra.mxu0 0
      %1203 = vmatprep.subr.bf16.mxu0 0
      %1204 = vmatpush1.bf16.msra.mxu0 0
      %1205 = vmatprep.subr.bf16.mxu0 0
      %1206 = vmatpush1.bf16.msra.mxu0 0
      %1207 = vmatprep.subr.bf16.mxu0 0
      %1208 = vmatpush1.bf16.msra.mxu0 0
      %1209 = vmatprep.subr.bf16.mxu0 0
      %1210 = vmatpush1.bf16.msra.mxu0 0
      %1211 = vmatprep.subr.bf16.mxu0 0
      %1212 = vmatpush1.bf16.msra.mxu0 0
      %1213 = vmatprep.subr.bf16.mxu0 0
      %1214 = vmatpush1.bf16.msra.mxu0 0
      %1215 = vmatprep.subr.bf16.mxu0 0
      %1216 = vmatpush1.bf16.msra.mxu0 0
      %1217 = vmatprep.subr.bf16.mxu0 0
      %1218 = vmatpush1.bf16.msra.mxu0 0
      %1219 = vmatprep.mubr.bf16.mxu0 0
      %1220 = vmatmul.mubr.bf16.gmra.mrb[0].mxu0 %v1185
      %v1221 = vpop.f32.mrb[0].mxu0
      %v1222 = vadd.f32 %v1182, %v1221
      %v1223 = vpop.f32.mrb[0].mxu0
      %v1224 = vpop.f32.mrb[0].mxu0
      %v1225 = vpop.f32.mrb[0].mxu0
      %1226 = vdwg.mxu0
      %v1227 = vadd.f32 %v1222, %v648
      %v1228 = vld [vmem:[%s610] sm:$0x1]
      %v1229 = vld [vmem:[%s613] sm:$0x1]
      %v1230 = vsel %vm663, %v1227, 0.0
      %1231 = vadd.xlane.f32.xlu0 %v1230
      %v1232 = vpop.xlane.xlu0 %1231
      %v1233 = vrcp.pop 32.0
      %v1234 = vmul.f32 %v1232, %v1233
      %v1235 = vsub.f32 %v1227, %v1234
      %v1236 = vmul.f32 %v1235, %v1235
      %v1237 = vsel %vm663, %v1236, 0.0
      %1238 = vadd.xlane.f32.xlu0 %v1237
      %v1239 = vpop.xlane.xlu0 %1238
      %v1240 = vmul.f32 %v1239, %v1233
      %v1241 = vadd.f32 %v1240, 1e-05
      %v1242 = vrsqrt.pop %v1241
      %v1243 = vmul.f32 %v1235, %v1242
      %v1245 = vlaneseq
      %v1246 = vshrl.u32 %v1245, 7
      %v1247 = vsub.s32 0, %v1246
      %v1248 = vrot.slane %v1228, %v1247
      %v1250 = vmul.f32 %v1248, %v1243
      %v1252 = vlaneseq
      %v1253 = vshrl.u32 %v1252, 7
      %v1254 = vsub.s32 0, %v1253
      %v1255 = vrot.slane %v1229, %v1254
      %v1257 = vadd.f32 %v1250, %v1255
      %v1258 = vld [vmem:[%s618] sm:$0xff]
      %v1259 = vld [vmem:[%s618 + $0x8] sm:$0xff]
      %v1260 = vld [vmem:[%s618 + $0x10] sm:$0xff]
      %v1261 = vld [vmem:[%s618 + $0x18] sm:$0xff]
      %v1262 = vpack.c.bf16 %v1257, %v1257
      %v1263 = vpack.c.bf16 %v1259, %v1258
      %v1264 = vpack.c.bf16 %v1261, %v1260
      %v1265 = vld [vmem:[%s621] sm:$0x1]
      %v1267 = vlaneseq
      %v1268 = vshrl.u32 %v1267, 7
      %v1269 = vsub.s32 0, %v1268
      %v1270 = vrot.slane %v1265, %v1269
      %v1273 = vsel %vm663, %v1262, 0
      %1275 = vmatprep.subr.bf16.mxu0 0
      %1276 = vmatpush1.bf16.msra.mxu0 %v1263
      %1277 = vmatprep.subr.bf16.mxu0 0
      %1278 = vmatpush1.bf16.msra.mxu0 %v1264
      %1279 = vmatprep.subr.bf16.mxu0 0
      %1280 = vmatpush1.bf16.msra.mxu0 0
      %1281 = vmatprep.subr.bf16.mxu0 0
      %1282 = vmatpush1.bf16.msra.mxu0 0
      %1283 = vmatprep.subr.bf16.mxu0 0
      %1284 = vmatpush1.bf16.msra.mxu0 0
      %1285 = vmatprep.subr.bf16.mxu0 0
      %1286 = vmatpush1.bf16.msra.mxu0 0
      %1287 = vmatprep.subr.bf16.mxu0 0
      %1288 = vmatpush1.bf16.msra.mxu0 0
      %1289 = vmatprep.subr.bf16.mxu0 0
      %1290 = vmatpush1.bf16.msra.mxu0 0
      %1291 = vmatprep.subr.bf16.mxu0 0
      %1292 = vmatpush1.bf16.msra.mxu0 0
      %1293 = vmatprep.subr.bf16.mxu0 0
      %1294 = vmatpush1.bf16.msra.mxu0 0
      %1295 = vmatprep.subr.bf16.mxu0 0
      %1296 = vmatpush1.bf16.msra.mxu0 0
      %1297 = vmatprep.subr.bf16.mxu0 0
      %1298 = vmatpush1.bf16.msra.mxu0 0
      %1299 = vmatprep.subr.bf16.mxu0 0
      %1300 = vmatpush1.bf16.msra.mxu0 0
      %1301 = vmatprep.subr.bf16.mxu0 0
      %1302 = vmatpush1.bf16.msra.mxu0 0
      %1303 = vmatprep.subr.bf16.mxu0 0
      %1304 = vmatpush1.bf16.msra.mxu0 0
      %1305 = vmatprep.subr.bf16.mxu0 0
      %1306 = vmatpush1.bf16.msra.mxu0 0
      %1307 = vmatprep.mubr.bf16.mxu0 0
      %1308 = vmatmul.mubr.bf16.gmra.mrb[0].mxu0 %v1273
      %v1309 = vpop.f32.mrb[0].mxu0
      %v1310 = vadd.f32 %v1270, %v1309
      %v1311 = vpop.f32.mrb[0].mxu0
      %v1312 = vpop.f32.mrb[0].mxu0
      %v1313 = vpop.f32.mrb[0].mxu0
      %1314 = vdwg.mxu0
      %v1315 = vmax.f32 %v1310, 0.0
      %v1316 = vld [vmem:[%s626] sm:$0xff]
      %v1317 = vld [vmem:[%s626 + $0x8] sm:$0xff]
      %v1318 = vld [vmem:[%s626 + $0x10] sm:$0xff]
      %v1319 = vld [vmem:[%s626 + $0x18] sm:$0xff]
      %v1320 = vld [vmem:[%s626 + $0x20] sm:$0xff]
      %v1321 = vld [vmem:[%s626 + $0x28] sm:$0xff]
      %v1322 = vld [vmem:[%s626 + $0x30] sm:$0xff]
      %v1323 = vld [vmem:[%s626 + $0x38] sm:$0xff]
      %v1324 = vpack.c.bf16 %v1315, %v1315
      %v1325 = vpack.c.bf16 %v1317, %v1316
      %v1326 = vpack.c.bf16 %v1319, %v1318
      %v1327 = vpack.c.bf16 %v1321, %v1320
      %v1328 = vpack.c.bf16 %v1323, %v1322
      %v1329 = vld [vmem:[%s629] sm:$0x1]
      %v1331 = vlaneseq
      %v1332 = vshrl.u32 %v1331, 7
      %v1333 = vsub.s32 0, %v1332
      %v1334 = vrot.slane %v1329, %v1333
      %vm1336 = vcmask 523264
      %v1338 = vsel %vm1336, %v1324, 0
      %1340 = vmatprep.subr.bf16.mxu0 0
      %1341 = vmatpush1.bf16.msra.mxu0 %v1325
      %1342 = vmatprep.subr.bf16.mxu0 0
      %1343 = vmatpush1.bf16.msra.mxu0 %v1326
      %1344 = vmatprep.subr.bf16.mxu0 0
      %1345 = vmatpush1.bf16.msra.mxu0 %v1327
      %1346 = vmatprep.subr.bf16.mxu0 0
      %1347 = vmatpush1.bf16.msra.mxu0 %v1328
      %1348 = vmatprep.subr.bf16.mxu0 0
      %1349 = vmatpush1.bf16.msra.mxu0 0
      %1350 = vmatprep.subr.bf16.mxu0 0
      %1351 = vmatpush1.bf16.msra.mxu0 0
      %1352 = vmatprep.subr.bf16.mxu0 0
      %1353 = vmatpush1.bf16.msra.mxu0 0
      %1354 = vmatprep.subr.bf16.mxu0 0
      %1355 = vmatpush1.bf16.msra.mxu0 0
      %1356 = vmatprep.subr.bf16.mxu0 0
      %1357 = vmatpush1.bf16.msra.mxu0 0
      %1358 = vmatprep.subr.bf16.mxu0 0
      %1359 = vmatpush1.bf16.msra.mxu0 0
      %1360 = vmatprep.subr.bf16.mxu0 0
      %1361 = vmatpush1.bf16.msra.mxu0 0
      %1362 = vmatprep.subr.bf16.mxu0 0
      %1363 = vmatpush1.bf16.msra.mxu0 0
      %1364 = vmatprep.subr.bf16.mxu0 0
      %1365 = vmatpush1.bf16.msra.mxu0 0
      %1366 = vmatprep.subr.bf16.mxu0 0
      %1367 = vmatpush1.bf16.msra.mxu0 0
      %1368 = vmatprep.subr.bf16.mxu0 0
      %1369 = vmatpush1.bf16.msra.mxu0 0
      %1370 = vmatprep.subr.bf16.mxu0 0
      %1371 = vmatpush1.bf16.msra.mxu0 0
      %1372 = vmatprep.mubr.bf16.mxu0 0
      %1373 = vmatmul.mubr.bf16.gmra.mrb[0].mxu0 %v1338
      %v1374 = vpop.f32.mrb[0].mxu0
      %v1375 = vadd.f32 %v1334, %v1374
      %v1376 = vpop.f32.mrb[0].mxu0
      %v1377 = vpop.f32.mrb[0].mxu0
      %v1378 = vpop.f32.mrb[0].mxu0
      %1379 = vdwg.mxu0
      %v1380 = vadd.f32 %v1375, %v1257
      %v1381 = vld [vmem:[%s632] sm:$0x1]
      %v1382 = vld [vmem:[%s635] sm:$0x1]
      %v1383 = vsel %vm663, %v1380, 0.0
      %1384 = vadd.xlane.f32.xlu0 %v1383
      %v1385 = vpop.xlane.xlu0 %1384
      %v1386 = vmul.f32 %v1385, %v1233
      %v1387 = vsub.f32 %v1380, %v1386
      %v1388 = vmul.f32 %v1387, %v1387
      %v1389 = vsel %vm663, %v1388, 0.0
      %1390 = vadd.xlane.f32.xlu0 %v1389
      %v1391 = vpop.xlane.xlu0 %1390
      %v1392 = vmul.f32 %v1391, %v1233
      %v1393 = vadd.f32 %v1392, 1e-05
      %v1394 = vrsqrt.pop %v1393
      %v1395 = vmul.f32 %v1387, %v1394
      %v1397 = vlaneseq
      %v1398 = vshrl.u32 %v1397, 7
      %v1399 = vsub.s32 0, %v1398
      %v1400 = vrot.slane %v1381, %v1399
      %v1402 = vmul.f32 %v1400, %v1395
      %v1404 = vlaneseq
      %v1405 = vshrl.u32 %v1404, 7
      %v1406 = vsub.s32 0, %v1405
      %v1407 = vrot.slane %v1382, %v1406
      %v1409 = vadd.f32 %v1402, %v1407
      %1410 = vst.msk [vmem:[%s639] sm:$0xff] %vm663, %v1409
      %p1411 = scmp.lt.s32.totalorder %s28, 1
      %s1412 = scalar_select %p1411, %s28, 1
      %s1413 = smul.addr %s1412, 8
      %s1414 = scalar_lea.vmem %s13, %s1413
      // Predicated region
      $region77: #{transformer_forward.2} parent=71 // pred_check
        %p1415 = pneg %p392
      $region78: #{transformer_forward.2} parent=71 // pred_check_branch
        %1417 = sbr.rel (%p1415) target = $region80
      $region79: #{transformer_forward.2} parent=71 // pred_region
        _
      $region80: #{transformer_forward.2} parent=71 // pred_fallthru
        _
    $region72: #{transformer_forward.2} parent=5 // pred_fallthru
      _
    %p1418 = scmp.le.s32.totalorder 2, %s19
    // Predicated region
    $region81: #{transformer_forward.2} parent=5 // pred_check
      %p1419 = pneg %p1418
    $region82: #{transformer_forward.2} parent=5 // pred_check_branch
      %1421 = sbr.rel (%p1419) target = $region84
    $region83: #{transformer_forward.2} parent=5 // pred_region
      %s1422 = ssub.s32 %s19, 2
      // Predicated region
      $region85: #{transformer_forward.2} parent=83 // pred_check
        %p1423 = pneg %p398
      $region86: #{transformer_forward.2} parent=83 // pred_check_branch
        %1425 = sbr.rel (%p1423) target = $region88
      $region87: #{transformer_forward.2} parent=83 // pred_region
        %p1426 = scmp.lt.s32.totalorder %s30, 1
        %s1427 = scalar_select %p1426, %s30, 1
        %s1428 = smul.addr %s1427, 8
        %s1429 = scalar_lea.vmem %s13, %s1428
      $region88: #{transformer_forward.2} parent=83 // pred_fallthru
        _
    $region84: #{transformer_forward.2} parent=5 // pred_fallthru
      _
  $region6: #{transformer_forward.2} parent=0 // loop_footer
    %s23 = sadd.s32 1, %s19
  $region7: #{transformer_forward.2} parent=0 // loop_footer_branch
    %18 = sbr.rel target = $region3
  $region8: #{transformer_forward.2} parent=0 // loop_exit
    _

// kernel: transformer_forward.3
$region0: #{transformer_forward.3}
  #allocation0 [shape = 'u32[]', space=smem, size = 0x4, offset = 0x4, fixed_abs, tag = 'smem constant byte address 0x4 - core index']
  #allocation1 [shape = 'u32[144,128]{1,0:T(1,128)}', space=vmem, size = 0x12000, scoped, tag = 'internal scratch']
  #allocation2 [shape = 'f32[8,32]{1,0:T(8,128)}', space=vmem, size = 0x1000, scoped, tag = 'scratch operand']
  %s0 = inlined_call_operand.vmem [shape: f32[2,8,32], index: 0, kind: input, shape index: {}]
  %s1 = inlined_call_operand.vmem [shape: f32[2,8,32], index: 1, kind: input, shape index: {}]
  %s2 = inlined_call_operand.vmem [shape: f32[2,32,96], index: 2, kind: input, shape index: {}]
  %s3 = inlined_call_operand.vmem [shape: f32[2,1,96], index: 3, kind: input, shape index: {}]
  %s4 = inlined_call_operand.vmem [shape: f32[2,32,32], index: 4, kind: input, shape index: {}]
  %s5 = inlined_call_operand.vmem [shape: f32[2,1,32], index: 5, kind: input, shape index: {}]
  %s6 = inlined_call_operand.vmem [shape: f32[2,1,32], index: 6, kind: input, shape index: {}]
  %s7 = inlined_call_operand.vmem [shape: f32[2,1,32], index: 7, kind: input, shape index: {}]
  %s8 = inlined_call_operand.vmem [shape: f32[2,32,64], index: 8, kind: input, shape index: {}]
  %s9 = inlined_call_operand.vmem [shape: f32[2,1,64], index: 9, kind: input, shape index: {}]
  %s10 = inlined_call_operand.vmem [shape: f32[2,32,32], index: 10, kind: input, shape index: {}]
  %s11 = inlined_call_operand.vmem [shape: f32[2,1,32], index: 11, kind: input, shape index: {}]
  %s12 = inlined_call_operand.vmem [shape: f32[2,32,32], index: 12, kind: input, shape index: {}]
  %s13 = inlined_call_operand.vmem [shape: f32[2,1,32], index: 13, kind: input, shape index: {}]
  %s14 = inlined_call_operand.vmem [shape: f32[2,1,32], index: 14, kind: input, shape index: {}]
  %s15 = inlined_call_operand.vmem [shape: f32[2,1,32], index: 15, kind: input, shape index: {}]
  %s16 = inlined_call_operand.vmem [shape: f32[2,32,64], index: 16, kind: input, shape index: {}]
  %s17 = inlined_call_operand.vmem [shape: f32[2,1,64], index: 17, kind: input, shape index: {}]
  %s18 = inlined_call_operand.vmem [shape: f32[2,64,32], index: 18, kind: input, shape index: {}]
  %s19 = inlined_call_operand.vmem [shape: f32[2,1,32], index: 19, kind: input, shape index: {}]
  %s20 = inlined_call_operand.vmem [shape: f32[2,1,32], index: 20, kind: input, shape index: {}]
  %s21 = inlined_call_operand.vmem [shape: f32[2,1,32], index: 21, kind: input, shape index: {}]
  %s22 = inlined_call_operand.vmem [shape: f32[32,128], index: 22, kind: input, shape index: {}]
  %s23 = inlined_call_operand.vmem [shape: f32[1,128], index: 23, kind: input, shape index: {}]
  %s24 = inlined_call_operand.hbm [shape: f32[2,8,128], index: 24, kind: output, shape index: {}]
  %s25 = sld [smem:[#allocation0]]
  $region137: #{transformer_forward.3} parent=0
    _
  %s27 = ssub.s32 1, %s25
  %s28 = scalar_select 0, %s27, %s25
  $region1: #{transformer_forward.3} parent=0
    #allocation3 [shape = 'u8[8192]{0}', space=vmem, size = 0x2000, scoped, tag = 'output window, operand 0']
    #allocation4 [shape = 's32[2]{0}', space=sflag, size = 0x8, scoped, tag = 'scoped memory for transformer_forward.3']
    %29 = vsyncpa [#allocation4], 0
    %s30 = scalar_lea.sflag [#allocation4], 1
    %31 = vsyncpa %s30, 0
    loop: start=0, step=1, limit=6
    $region2: #{transformer_forward.3} parent=1 // loop_pre_header
      _
    $region3: #{transformer_forward.3} parent=1 // loop_header
      %s33 = sphi 0, %s37
      %p34 = scmp.ge.s32.totalorder %s33, 6
      %s40 = sphi 0, %s52
      %s41 = sphi 0, %s48
      %s42 = sphi 0, %s40
      %s43 = sphi 0, %s41
      %s44 = sphi 0, %s42
      %s45 = sphi 0, %s43
      %s55 = sphi 0, %s57
      %s58 = sphi 0, %s55
      %s59 = sphi 0, %s58
      %s75 = sphi 0, %s59
      %s81 = sphi 0, %s83
      %s84 = sphi 0, %s81
      %s85 = sphi 0, %s84
      %s101 = sphi 0, %s85
      %s107 = sphi 0, %s109
      %s110 = sphi 0, %s107
      %s111 = sphi 0, %s110
      %s127 = sphi 0, %s111
      %s133 = sphi 0, %s135
      %s136 = sphi 0, %s133
      %s137 = sphi 0, %s136
      %s153 = sphi 0, %s137
      %s159 = sphi 0, %s161
      %s162 = sphi 0, %s159
      %s163 = sphi 0, %s162
      %s179 = sphi 0, %s163
      %s185 = sphi 0, %s187
      %s188 = sphi 0, %s185
      %s189 = sphi 0, %s188
      %s205 = sphi 0, %s189
      %s211 = sphi 0, %s213
      %s214 = sphi 0, %s211
      %s215 = sphi 0, %s214
      %s231 = sphi 0, %s215
      %s237 = sphi 0, %s239
      %s240 = sphi 0, %s237
      %s241 = sphi 0, %s240
      %s257 = sphi 0, %s241
      %s263 = sphi 0, %s265
      %s266 = sphi 0, %s263
      %s267 = sphi 0, %s266
      %s283 = sphi 0, %s267
      %s289 = sphi 0, %s291
      %s292 = sphi 0, %s289
      %s293 = sphi 0, %s292
      %s309 = sphi 0, %s293
      %s315 = sphi 0, %s317
      %s318 = sphi 0, %s315
      %s319 = sphi 0, %s318
      %s335 = sphi 0, %s319
      %s341 = sphi 0, %s343
      %s344 = sphi 0, %s341
      %s345 = sphi 0, %s344
      %s361 = sphi 0, %s345
      %s367 = sphi 0, %s369
      %s370 = sphi 0, %s367
      %s371 = sphi 0, %s370
      %s387 = sphi 0, %s371
      %s393 = sphi 0, %s395
      %s396 = sphi 0, %s393
      %s397 = sphi 0, %s396
      %s413 = sphi 0, %s397
      %s419 = sphi 0, %s421
      %s422 = sphi 0, %s419
      %s423 = sphi 0, %s422
      %s439 = sphi 0, %s423
      %s445 = sphi 0, %s447
      %s448 = sphi 0, %s445
      %s449 = sphi 0, %s448
      %s465 = sphi 0, %s449
      %s471 = sphi 0, %s473
      %s474 = sphi 0, %s471
      %s475 = sphi 0, %s474
      %s491 = sphi 0, %s475
      %s497 = sphi 0, %s499
      %s500 = sphi 0, %s497
      %s501 = sphi 0, %s500
      %s517 = sphi 0, %s501
      %s523 = sphi 0, %s525
      %s526 = sphi 0, %s523
      %s527 = sphi 0, %s526
      %s543 = sphi 0, %s527
      %s549 = sphi 0, %s551
      %s552 = sphi 0, %s549
      %s553 = sphi 0, %s552
      %s569 = sphi 0, %s553
      %s575 = sphi 0, %s577
      %s578 = sphi 0, %s575
      %s579 = sphi 0, %s578
      %s595 = sphi 0, %s579
      %s601 = sphi 0, %s603
      %s604 = sphi 0, %s601
      %s605 = sphi 0, %s604
      %s621 = sphi 0, %s605
      %s625 = sphi 0, %s625
      %s627 = sphi 0, %s625
      %s628 = sphi 0, %s627
      %s642 = sphi 0, %s628
      %s646 = sphi 0, %s646
      %s648 = sphi 0, %s646
      %s649 = sphi 0, %s648
      %s663 = sphi 0, %s649
      %s669 = sphi 0, %s671
      %s672 = sphi 0, %s669
      %s673 = sphi 0, %s672
      %s689 = sphi 0, %s673
    $region4: #{transformer_forward.3} parent=1 // loop_header_branch
      %36 = sbr.rel (%p34) target = $region8
    $region5: #{transformer_forward.3} parent=1 // loop_body
      %s38 = ssub.s32 %s33, 1
      %s39 = ssub.s32 %s33, 2
      %s46 = sadd.s32 1, %s41
      %p47 = scmp.ge.s32.totalorder %s46, 2
      %s48 = scalar_select %p47, 0, %s46
      %s49 = sadd.s32 1, %s40
      %s50 = scalar_select %p47, %s49, %s40
      %p51 = scmp.ge.s32.totalorder %s50, 2
      %s52 = scalar_select %p51, 0, %s50
      %s53 = ssub.s32 %s40, %s52
      %p54 = scmp.eq.s32.totalorder %s53, 0
      %s56 = sadd.s32 %s55, 1
      %s57 = scalar_select %p54, %s55, %s56
      %p60 = pneg %p54
      %p61 = scmp.eq.s32.totalorder %s33, 3
      %p62 = por %p60, %p61
      %p63 = scmp.ne.s32.totalorder %s55, %s58
      %p64 = scmp.eq.s32.totalorder %s33, 0
      %p65 = por %p63, %p64
      %p66 = scmp.ne.s32.totalorder %s55, %s58
      %p67 = scmp.eq.s32.totalorder %s38, 3
      %p68 = por %p66, %p67
      %p69 = scmp.ne.s32.totalorder %s58, %s59
      %p70 = scmp.eq.s32.totalorder %s38, 0
      %p71 = por %p69, %p70
      %p72 = scmp.ne.s32.totalorder %s58, %s59
      %p73 = scmp.eq.s32.totalorder %s39, 3
      %p74 = por %p72, %p73
      %p76 = scmp.ne.s32.totalorder %s59, %s75
      %p77 = scmp.eq.s32.totalorder %s39, 0
      %p78 = por %p76, %p77
      %s79 = ssub.s32 %s40, %s52
      %p80 = scmp.eq.s32.totalorder %s79, 0
      %s82 = sadd.s32 %s81, 1
      %s83 = scalar_select %p80, %s81, %s82
      %p86 = pneg %p80
      %p87 = scmp.eq.s32.totalorder %s33, 3
      %p88 = por %p86, %p87
      %p89 = scmp.ne.s32.totalorder %s81, %s84
      %p90 = scmp.eq.s32.totalorder %s33, 0
      %p91 = por %p89, %p90
      %p92 = scmp.ne.s32.totalorder %s81, %s84
      %p93 = scmp.eq.s32.totalorder %s38, 3
      %p94 = por %p92, %p93
      %p95 = scmp.ne.s32.totalorder %s84, %s85
      %p96 = scmp.eq.s32.totalorder %s38, 0
      %p97 = por %p95, %p96
      %p98 = scmp.ne.s32.totalorder %s84, %s85
      %p99 = scmp.eq.s32.totalorder %s39, 3
      %p100 = por %p98, %p99
      %p102 = scmp.ne.s32.totalorder %s85, %s101
      %p103 = scmp.eq.s32.totalorder %s39, 0
      %p104 = por %p102, %p103
      %s105 = ssub.s32 %s41, %s48
      %p106 = scmp.eq.s32.totalorder %s105, 0
      %s108 = sadd.s32 %s107, 1
      %s109 = scalar_select %p106, %s107, %s108
      %p112 = pneg %p106
      %p113 = scmp.eq.s32.totalorder %s33, 3
      %p114 = por %p112, %p113
      %p115 = scmp.ne.s32.totalorder %s107, %s110
      %p116 = scmp.eq.s32.totalorder %s33, 0
      %p117 = por %p115, %p116
      %p118 = scmp.ne.s32.totalorder %s107, %s110
      %p119 = scmp.eq.s32.totalorder %s38, 3
      %p120 = por %p118, %p119
      %p121 = scmp.ne.s32.totalorder %s110, %s111
      %p122 = scmp.eq.s32.totalorder %s38, 0
      %p123 = por %p121, %p122
      %p124 = scmp.ne.s32.totalorder %s110, %s111
      %p125 = scmp.eq.s32.totalorder %s39, 3
      %p126 = por %p124, %p125
      %p128 = scmp.ne.s32.totalorder %s111, %s127
      %p129 = scmp.eq.s32.totalorder %s39, 0
      %p130 = por %p128, %p129
      %s131 = ssub.s32 %s41, %s48
      %p132 = scmp.eq.s32.totalorder %s131, 0
      %s134 = sadd.s32 %s133, 1
      %s135 = scalar_select %p132, %s133, %s134
      %p138 = pneg %p132
      %p139 = scmp.eq.s32.totalorder %s33, 3
      %p140 = por %p138, %p139
      %p141 = scmp.ne.s32.totalorder %s133, %s136
      %p142 = scmp.eq.s32.totalorder %s33, 0
      %p143 = por %p141, %p142
      %p144 = scmp.ne.s32.totalorder %s133, %s136
      %p145 = scmp.eq.s32.totalorder %s38, 3
      %p146 = por %p144, %p145
      %p147 = scmp.ne.s32.totalorder %s136, %s137
      %p148 = scmp.eq.s32.totalorder %s38, 0
      %p149 = por %p147, %p148
      %p150 = scmp.ne.s32.totalorder %s136, %s137
      %p151 = scmp.eq.s32.totalorder %s39, 3
      %p152 = por %p150, %p151
      %p154 = scmp.ne.s32.totalorder %s137, %s153
      %p155 = scmp.eq.s32.totalorder %s39, 0
      %p156 = por %p154, %p155
      %s157 = ssub.s32 %s41, %s48
      %p158 = scmp.eq.s32.totalorder %s157, 0
      %s160 = sadd.s32 %s159, 1
      %s161 = scalar_select %p158, %s159, %s160
      %p164 = pneg %p158
      %p165 = scmp.eq.s32.totalorder %s33, 3
      %p166 = por %p164, %p165
      %p167 = scmp.ne.s32.totalorder %s159, %s162
      %p168 = scmp.eq.s32.totalorder %s33, 0
      %p169 = por %p167, %p168
      %p170 = scmp.ne.s32.totalorder %s159, %s162
      %p171 = scmp.eq.s32.totalorder %s38, 3
      %p172 = por %p170, %p171
      %p173 = scmp.ne.s32.totalorder %s162, %s163
      %p174 = scmp.eq.s32.totalorder %s38, 0
      %p175 = por %p173, %p174
      %p176 = scmp.ne.s32.totalorder %s162, %s163
      %p177 = scmp.eq.s32.totalorder %s39, 3
      %p178 = por %p176, %p177
      %p180 = scmp.ne.s32.totalorder %s163, %s179
      %p181 = scmp.eq.s32.totalorder %s39, 0
      %p182 = por %p180, %p181
      %s183 = ssub.s32 %s41, %s48
      %p184 = scmp.eq.s32.totalorder %s183, 0
      %s186 = sadd.s32 %s185, 1
      %s187 = scalar_select %p184, %s185, %s186
      %p190 = pneg %p184
      %p191 = scmp.eq.s32.totalorder %s33, 3
      %p192 = por %p190, %p191
      %p193 = scmp.ne.s32.totalorder %s185, %s188
      %p194 = scmp.eq.s32.totalorder %s33, 0
      %p195 = por %p193, %p194
      %p196 = scmp.ne.s32.totalorder %s185, %s188
      %p197 = scmp.eq.s32.totalorder %s38, 3
      %p198 = por %p196, %p197
      %p199 = scmp.ne.s32.totalorder %s188, %s189
      %p200 = scmp.eq.s32.totalorder %s38, 0
      %p201 = por %p199, %p200
      %p202 = scmp.ne.s32.totalorder %s188, %s189
      %p203 = scmp.eq.s32.totalorder %s39, 3
      %p204 = por %p202, %p203
      %p206 = scmp.ne.s32.totalorder %s189, %s205
      %p207 = scmp.eq.s32.totalorder %s39, 0
      %p208 = por %p206, %p207
      %s209 = ssub.s32 %s41, %s48
      %p210 = scmp.eq.s32.totalorder %s209, 0
      %s212 = sadd.s32 %s211, 1
      %s213 = scalar_select %p210, %s211, %s212
      %p216 = pneg %p210
      %p217 = scmp.eq.s32.totalorder %s33, 3
      %p218 = por %p216, %p217
      %p219 = scmp.ne.s32.totalorder %s211, %s214
      %p220 = scmp.eq.s32.totalorder %s33, 0
      %p221 = por %p219, %p220
      %p222 = scmp.ne.s32.totalorder %s211, %s214
      %p223 = scmp.eq.s32.totalorder %s38, 3
      %p224 = por %p222, %p223
      %p225 = scmp.ne.s32.totalorder %s214, %s215
      %p226 = scmp.eq.s32.totalorder %s38, 0
      %p227 = por %p225, %p226
      %p228 = scmp.ne.s32.totalorder %s214, %s215
      %p229 = scmp.eq.s32.totalorder %s39, 3
      %p230 = por %p228, %p229
      %p232 = scmp.ne.s32.totalorder %s215, %s231
      %p233 = scmp.eq.s32.totalorder %s39, 0
      %p234 = por %p232, %p233
      %s235 = ssub.s32 %s41, %s48
      %p236 = scmp.eq.s32.totalorder %s235, 0
      %s238 = sadd.s32 %s237, 1
      %s239 = scalar_select %p236, %s237, %s238
      %p242 = pneg %p236
      %p243 = scmp.eq.s32.totalorder %s33, 3
      %p244 = por %p242, %p243
      %p245 = scmp.ne.s32.totalorder %s237, %s240
      %p246 = scmp.eq.s32.totalorder %s33, 0
      %p247 = por %p245, %p246
      %p248 = scmp.ne.s32.totalorder %s237, %s240
      %p249 = scmp.eq.s32.totalorder %s38, 3
      %p250 = por %p248, %p249
      %p251 = scmp.ne.s32.totalorder %s240, %s241
      %p252 = scmp.eq.s32.totalorder %s38, 0
      %p253 = por %p251, %p252
      %p254 = scmp.ne.s32.totalorder %s240, %s241
      %p255 = scmp.eq.s32.totalorder %s39, 3
      %p256 = por %p254, %p255
      %p258 = scmp.ne.s32.totalorder %s241, %s257
      %p259 = scmp.eq.s32.totalorder %s39, 0
      %p260 = por %p258, %p259
      %s261 = ssub.s32 %s41, %s48
      %p262 = scmp.eq.s32.totalorder %s261, 0
      %s264 = sadd.s32 %s263, 1
      %s265 = scalar_select %p262, %s263, %s264
      %p268 = pneg %p262
      %p269 = scmp.eq.s32.totalorder %s33, 3
      %p270 = por %p268, %p269
      %p271 = scmp.ne.s32.totalorder %s263, %s266
      %p272 = scmp.eq.s32.totalorder %s33, 0
      %p273 = por %p271, %p272
      %p274 = scmp.ne.s32.totalorder %s263, %s266
      %p275 = scmp.eq.s32.totalorder %s38, 3
      %p276 = por %p274, %p275
      %p277 = scmp.ne.s32.totalorder %s266, %s267
      %p278 = scmp.eq.s32.totalorder %s38, 0
      %p279 = por %p277, %p278
      %p280 = scmp.ne.s32.totalorder %s266, %s267
      %p281 = scmp.eq.s32.totalorder %s39, 3
      %p282 = por %p280, %p281
      %p284 = scmp.ne.s32.totalorder %s267, %s283
      %p285 = scmp.eq.s32.totalorder %s39, 0
      %p286 = por %p284, %p285
      %s287 = ssub.s32 %s41, %s48
      %p288 = scmp.eq.s32.totalorder %s287, 0
      %s290 = sadd.s32 %s289, 1
      %s291 = scalar_select %p288, %s289, %s290
      %p294 = pneg %p288
      %p295 = scmp.eq.s32.totalorder %s33, 3
      %p296 = por %p294, %p295
      %p297 = scmp.ne.s32.totalorder %s289, %s292
      %p298 = scmp.eq.s32.totalorder %s33, 0
      %p299 = por %p297, %p298
      %p300 = scmp.ne.s32.totalorder %s289, %s292
      %p301 = scmp.eq.s32.totalorder %s38, 3
      %p302 = por %p300, %p301
      %p303 = scmp.ne.s32.totalorder %s292, %s293
      %p304 = scmp.eq.s32.totalorder %s38, 0
      %p305 = por %p303, %p304
      %p306 = scmp.ne.s32.totalorder %s292, %s293
      %p307 = scmp.eq.s32.totalorder %s39, 3
      %p308 = por %p306, %p307
      %p310 = scmp.ne.s32.totalorder %s293, %s309
      %p311 = scmp.eq.s32.totalorder %s39, 0
      %p312 = por %p310, %p311
      %s313 = ssub.s32 %s41, %s48
      %p314 = scmp.eq.s32.totalorder %s313, 0
      %s316 = sadd.s32 %s315, 1
      %s317 = scalar_select %p314, %s315, %s316
      %p320 = pneg %p314
      %p321 = scmp.eq.s32.totalorder %s33, 3
      %p322 = por %p320, %p321
      %p323 = scmp.ne.s32.totalorder %s315, %s318
      %p324 = scmp.eq.s32.totalorder %s33, 0
      %p325 = por %p323, %p324
      %p326 = scmp.ne.s32.totalorder %s315, %s318
      %p327 = scmp.eq.s32.totalorder %s38, 3
      %p328 = por %p326, %p327
      %p329 = scmp.ne.s32.totalorder %s318, %s319
      %p330 = scmp.eq.s32.totalorder %s38, 0
      %p331 = por %p329, %p330
      %p332 = scmp.ne.s32.totalorder %s318, %s319
      %p333 = scmp.eq.s32.totalorder %s39, 3
      %p334 = por %p332, %p333
      %p336 = scmp.ne.s32.totalorder %s319, %s335
      %p337 = scmp.eq.s32.totalorder %s39, 0
      %p338 = por %p336, %p337
      %s339 = ssub.s32 %s41, %s48
      %p340 = scmp.eq.s32.totalorder %s339, 0
      %s342 = sadd.s32 %s341, 1
      %s343 = scalar_select %p340, %s341, %s342
      %p346 = pneg %p340
      %p347 = scmp.eq.s32.totalorder %s33, 3
      %p348 = por %p346, %p347
      %p349 = scmp.ne.s32.totalorder %s341, %s344
      %p350 = scmp.eq.s32.totalorder %s33, 0
      %p351 = por %p349, %p350
      %p352 = scmp.ne.s32.totalorder %s341, %s344
      %p353 = scmp.eq.s32.totalorder %s38, 3
      %p354 = por %p352, %p353
      %p355 = scmp.ne.s32.totalorder %s344, %s345
      %p356 = scmp.eq.s32.totalorder %s38, 0
      %p357 = por %p355, %p356
      %p358 = scmp.ne.s32.totalorder %s344, %s345
      %p359 = scmp.eq.s32.totalorder %s39, 3
      %p360 = por %p358, %p359
      %p362 = scmp.ne.s32.totalorder %s345, %s361
      %p363 = scmp.eq.s32.totalorder %s39, 0
      %p364 = por %p362, %p363
      %s365 = ssub.s32 %s41, %s48
      %p366 = scmp.eq.s32.totalorder %s365, 0
      %s368 = sadd.s32 %s367, 1
      %s369 = scalar_select %p366, %s367, %s368
      %p372 = pneg %p366
      %p373 = scmp.eq.s32.totalorder %s33, 3
      %p374 = por %p372, %p373
      %p375 = scmp.ne.s32.totalorder %s367, %s370
      %p376 = scmp.eq.s32.totalorder %s33, 0
      %p377 = por %p375, %p376
      %p378 = scmp.ne.s32.totalorder %s367, %s370
      %p379 = scmp.eq.s32.totalorder %s38, 3
      %p380 = por %p378, %p379
      %p381 = scmp.ne.s32.totalorder %s370, %s371
      %p382 = scmp.eq.s32.totalorder %s38, 0
      %p383 = por %p381, %p382
      %p384 = scmp.ne.s32.totalorder %s370, %s371
      %p385 = scmp.eq.s32.totalorder %s39, 3
      %p386 = por %p384, %p385
      %p388 = scmp.ne.s32.totalorder %s371, %s387
      %p389 = scmp.eq.s32.totalorder %s39, 0
      %p390 = por %p388, %p389
      %s391 = ssub.s32 %s41, %s48
      %p392 = scmp.eq.s32.totalorder %s391, 0
      %s394 = sadd.s32 %s393, 1
      %s395 = scalar_select %p392, %s393, %s394
      %p398 = pneg %p392
      %p399 = scmp.eq.s32.totalorder %s33, 3
      %p400 = por %p398, %p399
      %p401 = scmp.ne.s32.totalorder %s393, %s396
      %p402 = scmp.eq.s32.totalorder %s33, 0
      %p403 = por %p401, %p402
      %p404 = scmp.ne.s32.totalorder %s393, %s396
      %p405 = scmp.eq.s32.totalorder %s38, 3
      %p406 = por %p404, %p405
      %p407 = scmp.ne.s32.totalorder %s396, %s397
      %p408 = scmp.eq.s32.totalorder %s38, 0
      %p409 = por %p407, %p408
      %p410 = scmp.ne.s32.totalorder %s396, %s397
      %p411 = scmp.eq.s32.totalorder %s39, 3
      %p412 = por %p410, %p411
      %p414 = scmp.ne.s32.totalorder %s397, %s413
      %p415 = scmp.eq.s32.totalorder %s39, 0
      %p416 = por %p414, %p415
      %s417 = ssub.s32 %s41, %s48
      %p418 = scmp.eq.s32.totalorder %s417, 0
      %s420 = sadd.s32 %s419, 1
      %s421 = scalar_select %p418, %s419, %s420
      %p424 = pneg %p418
      %p425 = scmp.eq.s32.totalorder %s33, 3
      %p426 = por %p424, %p425
      %p427 = scmp.ne.s32.totalorder %s419, %s422
      %p428 = scmp.eq.s32.totalorder %s33, 0
      %p429 = por %p427, %p428
      %p430 = scmp.ne.s32.totalorder %s419, %s422
      %p431 = scmp.eq.s32.totalorder %s38, 3
      %p432 = por %p430, %p431
      %p433 = scmp.ne.s32.totalorder %s422, %s423
      %p434 = scmp.eq.s32.totalorder %s38, 0
      %p435 = por %p433, %p434
      %p436 = scmp.ne.s32.totalorder %s422, %s423
      %p437 = scmp.eq.s32.totalorder %s39, 3
      %p438 = por %p436, %p437
      %p440 = scmp.ne.s32.totalorder %s423, %s439
      %p441 = scmp.eq.s32.totalorder %s39, 0
      %p442 = por %p440, %p441
      %s443 = ssub.s32 %s41, %s48
      %p444 = scmp.eq.s32.totalorder %s443, 0
      %s446 = sadd.s32 %s445, 1
      %s447 = scalar_select %p444, %s445, %s446
      %p450 = pneg %p444
      %p451 = scmp.eq.s32.totalorder %s33, 3
      %p452 = por %p450, %p451
      %p453 = scmp.ne.s32.totalorder %s445, %s448
      %p454 = scmp.eq.s32.totalorder %s33, 0
      %p455 = por %p453, %p454
      %p456 = scmp.ne.s32.totalorder %s445, %s448
      %p457 = scmp.eq.s32.totalorder %s38, 3
      %p458 = por %p456, %p457
      %p459 = scmp.ne.s32.totalorder %s448, %s449
      %p460 = scmp.eq.s32.totalorder %s38, 0
      %p461 = por %p459, %p460
      %p462 = scmp.ne.s32.totalorder %s448, %s449
      %p463 = scmp.eq.s32.totalorder %s39, 3
      %p464 = por %p462, %p463
      %p466 = scmp.ne.s32.totalorder %s449, %s465
      %p467 = scmp.eq.s32.totalorder %s39, 0
      %p468 = por %p466, %p467
      %s469 = ssub.s32 %s41, %s48
      %p470 = scmp.eq.s32.totalorder %s469, 0
      %s472 = sadd.s32 %s471, 1
      %s473 = scalar_select %p470, %s471, %s472
      %p476 = pneg %p470
      %p477 = scmp.eq.s32.totalorder %s33, 3
      %p478 = por %p476, %p477
      %p479 = scmp.ne.s32.totalorder %s471, %s474
      %p480 = scmp.eq.s32.totalorder %s33, 0
      %p481 = por %p479, %p480
      %p482 = scmp.ne.s32.totalorder %s471, %s474
      %p483 = scmp.eq.s32.totalorder %s38, 3
      %p484 = por %p482, %p483
      %p485 = scmp.ne.s32.totalorder %s474, %s475
      %p486 = scmp.eq.s32.totalorder %s38, 0
      %p487 = por %p485, %p486
      %p488 = scmp.ne.s32.totalorder %s474, %s475
      %p489 = scmp.eq.s32.totalorder %s39, 3
      %p490 = por %p488, %p489
      %p492 = scmp.ne.s32.totalorder %s475, %s491
      %p493 = scmp.eq.s32.totalorder %s39, 0
      %p494 = por %p492, %p493
      %s495 = ssub.s32 %s41, %s48
      %p496 = scmp.eq.s32.totalorder %s495, 0
      %s498 = sadd.s32 %s497, 1
      %s499 = scalar_select %p496, %s497, %s498
      %p502 = pneg %p496
      %p503 = scmp.eq.s32.totalorder %s33, 3
      %p504 = por %p502, %p503
      %p505 = scmp.ne.s32.totalorder %s497, %s500
      %p506 = scmp.eq.s32.totalorder %s33, 0
      %p507 = por %p505, %p506
      %p508 = scmp.ne.s32.totalorder %s497, %s500
      %p509 = scmp.eq.s32.totalorder %s38, 3
      %p510 = por %p508, %p509
      %p511 = scmp.ne.s32.totalorder %s500, %s501
      %p512 = scmp.eq.s32.totalorder %s38, 0
      %p513 = por %p511, %p512
      %p514 = scmp.ne.s32.totalorder %s500, %s501
      %p515 = scmp.eq.s32.totalorder %s39, 3
      %p516 = por %p514, %p515
      %p518 = scmp.ne.s32.totalorder %s501, %s517
      %p519 = scmp.eq.s32.totalorder %s39, 0
      %p520 = por %p518, %p519
      %s521 = ssub.s32 %s41, %s48
      %p522 = scmp.eq.s32.totalorder %s521, 0
      %s524 = sadd.s32 %s523, 1
      %s525 = scalar_select %p522, %s523, %s524
      %p528 = pneg %p522
      %p529 = scmp.eq.s32.totalorder %s33, 3
      %p530 = por %p528, %p529
      %p531 = scmp.ne.s32.totalorder %s523, %s526
      %p532 = scmp.eq.s32.totalorder %s33, 0
      %p533 = por %p531, %p532
      %p534 = scmp.ne.s32.totalorder %s523, %s526
      %p535 = scmp.eq.s32.totalorder %s38, 3
      %p536 = por %p534, %p535
      %p537 = scmp.ne.s32.totalorder %s526, %s527
      %p538 = scmp.eq.s32.totalorder %s38, 0
      %p539 = por %p537, %p538
      %p540 = scmp.ne.s32.totalorder %s526, %s527
      %p541 = scmp.eq.s32.totalorder %s39, 3
      %p542 = por %p540, %p541
      %p544 = scmp.ne.s32.totalorder %s527, %s543
      %p545 = scmp.eq.s32.totalorder %s39, 0
      %p546 = por %p544, %p545
      %s547 = ssub.s32 %s41, %s48
      %p548 = scmp.eq.s32.totalorder %s547, 0
      %s550 = sadd.s32 %s549, 1
      %s551 = scalar_select %p548, %s549, %s550
      %p554 = pneg %p548
      %p555 = scmp.eq.s32.totalorder %s33, 3
      %p556 = por %p554, %p555
      %p557 = scmp.ne.s32.totalorder %s549, %s552
      %p558 = scmp.eq.s32.totalorder %s33, 0
      %p559 = por %p557, %p558
      %p560 = scmp.ne.s32.totalorder %s549, %s552
      %p561 = scmp.eq.s32.totalorder %s38, 3
      %p562 = por %p560, %p561
      %p563 = scmp.ne.s32.totalorder %s552, %s553
      %p564 = scmp.eq.s32.totalorder %s38, 0
      %p565 = por %p563, %p564
      %p566 = scmp.ne.s32.totalorder %s552, %s553
      %p567 = scmp.eq.s32.totalorder %s39, 3
      %p568 = por %p566, %p567
      %p570 = scmp.ne.s32.totalorder %s553, %s569
      %p571 = scmp.eq.s32.totalorder %s39, 0
      %p572 = por %p570, %p571
      %s573 = ssub.s32 %s41, %s48
      %p574 = scmp.eq.s32.totalorder %s573, 0
      %s576 = sadd.s32 %s575, 1
      %s577 = scalar_select %p574, %s575, %s576
      %p580 = pneg %p574
      %p581 = scmp.eq.s32.totalorder %s33, 3
      %p582 = por %p580, %p581
      %p583 = scmp.ne.s32.totalorder %s575, %s578
      %p584 = scmp.eq.s32.totalorder %s33, 0
      %p585 = por %p583, %p584
      %p586 = scmp.ne.s32.totalorder %s575, %s578
      %p587 = scmp.eq.s32.totalorder %s38, 3
      %p588 = por %p586, %p587
      %p589 = scmp.ne.s32.totalorder %s578, %s579
      %p590 = scmp.eq.s32.totalorder %s38, 0
      %p591 = por %p589, %p590
      %p592 = scmp.ne.s32.totalorder %s578, %s579
      %p593 = scmp.eq.s32.totalorder %s39, 3
      %p594 = por %p592, %p593
      %p596 = scmp.ne.s32.totalorder %s579, %s595
      %p597 = scmp.eq.s32.totalorder %s39, 0
      %p598 = por %p596, %p597
      %s599 = ssub.s32 %s41, %s48
      %p600 = scmp.eq.s32.totalorder %s599, 0
      %s602 = sadd.s32 %s601, 1
      %s603 = scalar_select %p600, %s601, %s602
      %p606 = pneg %p600
      %p607 = scmp.eq.s32.totalorder %s33, 3
      %p608 = por %p606, %p607
      %p609 = scmp.ne.s32.totalorder %s601, %s604
      %p610 = scmp.eq.s32.totalorder %s33, 0
      %p611 = por %p609, %p610
      %p612 = scmp.ne.s32.totalorder %s601, %s604
      %p613 = scmp.eq.s32.totalorder %s38, 3
      %p614 = por %p612, %p613
      %p615 = scmp.ne.s32.totalorder %s604, %s605
      %p616 = scmp.eq.s32.totalorder %s38, 0
      %p617 = por %p615, %p616
      %p618 = scmp.ne.s32.totalorder %s604, %s605
      %p619 = scmp.eq.s32.totalorder %s39, 3
      %p620 = por %p618, %p619
      %p622 = scmp.ne.s32.totalorder %s605, %s621
      %p623 = scmp.eq.s32.totalorder %s39, 0
      %p624 = por %p622, %p623
      %s626 = sadd.s32 %s625, 1
      %p629 = scmp.eq.s32.totalorder %s33, 3
      %p630 = scmp.ne.s32.totalorder %s625, %s627
      %p631 = scmp.eq.s32.totalorder %s33, 0
      %p632 = por %p630, %p631
      %p633 = scmp.ne.s32.totalorder %s625, %s627
      %p634 = scmp.eq.s32.totalorder %s38, 3
      %p635 = por %p633, %p634
      %p636 = scmp.ne.s32.totalorder %s627, %s628
      %p637 = scmp.eq.s32.totalorder %s38, 0
      %p638 = por %p636, %p637
      %p639 = scmp.ne.s32.totalorder %s627, %s628
      %p640 = scmp.eq.s32.totalorder %s39, 3
      %p641 = por %p639, %p640
      %p643 = scmp.ne.s32.totalorder %s628, %s642
      %p644 = scmp.eq.s32.totalorder %s39, 0
      %p645 = por %p643, %p644
      %s647 = sadd.s32 %s646, 1
      %p650 = scmp.eq.s32.totalorder %s33, 3
      %p651 = scmp.ne.s32.totalorder %s646, %s648
      %p652 = scmp.eq.s32.totalorder %s33, 0
      %p653 = por %p651, %p652
      %p654 = scmp.ne.s32.totalorder %s646, %s648
      %p655 = scmp.eq.s32.totalorder %s38, 3
      %p656 = por %p654, %p655
      %p657 = scmp.ne.s32.totalorder %s648, %s649
      %p658 = scmp.eq.s32.totalorder %s38, 0
      %p659 = por %p657, %p658
      %p660 = scmp.ne.s32.totalorder %s648, %s649
      %p661 = scmp.eq.s32.totalorder %s39, 3
      %p662 = por %p660, %p661
      %p664 = scmp.ne.s32.totalorder %s649, %s663
      %p665 = scmp.eq.s32.totalorder %s39, 0
      %p666 = por %p664, %p665
      %s667 = ssub.s32 %s40, %s52
      %p668 = scmp.eq.s32.totalorder %s667, 0
      %s670 = sadd.s32 %s669, 1
      %s671 = scalar_select %p668, %s669, %s670
      %p674 = pneg %p668
      %p675 = scmp.eq.s32.totalorder %s33, 3
      %p676 = por %p674, %p675
      %p677 = scmp.ne.s32.totalorder %s669, %s672
      %p678 = scmp.eq.s32.totalorder %s33, 0
      %p679 = por %p677, %p678
      %p680 = scmp.ne.s32.totalorder %s669, %s672
      %p681 = scmp.eq.s32.totalorder %s38, 3
      %p682 = por %p680, %p681
      %p683 = scmp.ne.s32.totalorder %s672, %s673
      %p684 = scmp.eq.s32.totalorder %s38, 0
      %p685 = por %p683, %p684
      %p686 = scmp.ne.s32.totalorder %s672, %s673
      %p687 = scmp.eq.s32.totalorder %s39, 3
      %p688 = por %p686, %p687
      %p690 = scmp.ne.s32.totalorder %s673, %s689
      %p691 = scmp.eq.s32.totalorder %s39, 0
      %p692 = por %p690, %p691
      %p693 = scmp.le.s32.totalorder 1, %s33
      %p694 = scmp.lt.s32.totalorder %s33, 5
      %p695 = pnand %p693, %p694
      %p696 = pneg %p695
      // Predicated region
      $region9: #{transformer_forward.3} parent=5 // pred_check
        _
      $region10: #{transformer_forward.3} parent=5 // pred_check_branch
        %698 = sbr.rel (%p695) target = $region12
      $region11: #{transformer_forward.3} parent=5 // pred_region
        %s699 = ssub.s32 %s33, 1
        // Predicated region
        $region13: #{transformer_forward.3} parent=11 // pred_check
          %p700 = pneg %p638
        $region14: #{transformer_forward.3} parent=11 // pred_check_branch
          %702 = sbr.rel (%p700) target = $region16
        $region15: #{transformer_forward.3} parent=11 // pred_region
          _
        $region16: #{transformer_forward.3} parent=11 // pred_fallthru
          _
        // Predicated region
        $region17: #{transformer_forward.3} parent=11 // pred_check
          %p703 = pneg %p659
        $region18: #{transformer_forward.3} parent=11 // pred_check_branch
          %705 = sbr.rel (%p703) target = $region20
        $region19: #{transformer_forward.3} parent=11 // pred_region
          _
        $region20: #{transformer_forward.3} parent=11 // pred_fallthru
          _
      $region12: #{transformer_forward.3} parent=5 // pred_fallthru
        _
      %p706 = scmp.lt.s32.totalorder %s33, 4
      // Predicated region
      $region21: #{transformer_forward.3} parent=5 // pred_check
        %p707 = pneg %p706
      $region22: #{transformer_forward.3} parent=5 // pred_check_branch
        %709 = sbr.rel (%p707) target = $region24
      $region23: #{transformer_forward.3} parent=5 // pred_region
        // Predicated region
        $region25: #{transformer_forward.3} parent=23 // pred_check
          %p710 = pneg %p65
        $region26: #{transformer_forward.3} parent=23 // pred_check_branch
          %712 = sbr.rel (%p710) target = $region28
        $region27: #{transformer_forward.3} parent=23 // pred_region
          %p713 = scmp.lt.s32.totalorder %s40, 1
          %s714 = scalar_select %p713, %s40, 1
          %s715 = smul.addr %s714, 8
          %s716 = scalar_lea.vmem %s0, %s715
        $region28: #{transformer_forward.3} parent=23 // pred_fallthru
          _
        // Predicated region
        $region29: #{transformer_forward.3} parent=23 // pred_check
          %p717 = pneg %p91
        $region30: #{transformer_forward.3} parent=23 // pred_check_branch
          %719 = sbr.rel (%p717) target = $region32
        $region31: #{transformer_forward.3} parent=23 // pred_region
          %p720 = scmp.lt.s32.totalorder %s40, 1
          %s721 = scalar_select %p720, %s40, 1
          %s722 = smul.addr %s721, 8
          %s723 = scalar_lea.vmem %s1, %s722
        $region32: #{transformer_forward.3} parent=23 // pred_fallthru
          _
        // Predicated region
        $region33: #{transformer_forward.3} parent=23 // pred_check
          %p724 = pneg %p117
        $region34: #{transformer_forward.3} parent=23 // pred_check_branch
          %726 = sbr.rel (%p724) target = $region36
        $region35: #{transformer_forward.3} parent=23 // pred_region
          %p727 = scmp.lt.s32.totalorder %s41, 1
          %s728 = scalar_select %p727, %s41, 1
          %s729 = smul.addr %s728, 4
          %s730 = smul.addr %s729, 8
          %s731 = scalar_lea.vmem %s2, %s730
        $region36: #{transformer_forward.3} parent=23 // pred_fallthru
          _
        // Predicated region
        $region37: #{transformer_forward.3} parent=23 // pred_check
          %p732 = pneg %p143
        $region38: #{transformer_forward.3} parent=23 // pred_check_branch
          %734 = sbr.rel (%p732) target = $region40
        $region39: #{transformer_forward.3} parent=23 // pred_region
          %p735 = scmp.lt.s32.totalorder %s41, 1
          %s736 = scalar_select %p735, %s41, 1
          %s737 = scalar_lea.vmem %s3, %s736
        $region40: #{transformer_forward.3} parent=23 // pred_fallthru
          _
        // Predicated region
        $region41: #{transformer_forward.3} parent=23 // pred_check
          %p738 = pneg %p169
        $region42: #{transformer_forward.3} parent=23 // pred_check_branch
          %740 = sbr.rel (%p738) target = $region44
        $region43: #{transformer_forward.3} parent=23 // pred_region
          %p741 = scmp.lt.s32.totalorder %s41, 1
          %s742 = scalar_select %p741, %s41, 1
          %s743 = smul.addr %s742, 4
          %s744 = smul.addr %s743, 8
          %s745 = scalar_lea.vmem %s4, %s744
        $region44: #{transformer_forward.3} parent=23 // pred_fallthru
          _
        // Predicated region
        $region45: #{transformer_forward.3} parent=23 // pred_check
          %p746 = pneg %p195
        $region46: #{transformer_forward.3} parent=23 // pred_check_branch
          %748 = sbr.rel (%p746) target = $region48
        $region47: #{transformer_forward.3} parent=23 // pred_region
          %p749 = scmp.lt.s32.totalorder %s41, 1
          %s750 = scalar_select %p749, %s41, 1
          %s751 = scalar_lea.vmem %s5, %s750
        $region48: #{transformer_forward.3} parent=23 // pred_fallthru
          _
        // Predicated region
        $region49: #{transformer_forward.3} parent=23 // pred_check
          %p752 = pneg %p221
        $region50: #{transformer_forward.3} parent=23 // pred_check_branch
          %754 = sbr.rel (%p752) target = $region52
        $region51: #{transformer_forward.3} parent=23 // pred_region
          %p755 = scmp.lt.s32.totalorder %s41, 1
          %s756 = scalar_select %p755, %s41, 1
          %s757 = scalar_lea.vmem %s6, %s756
        $region52: #{transformer_forward.3} parent=23 // pred_fallthru
          _
        // Predicated region
        $region53: #{transformer_forward.3} parent=23 // pred_check
          %p758 = pneg %p247
        $region54: #{transformer_forward.3} parent=23 // pred_check_branch
          %760 = sbr.rel (%p758) target = $region56
        $region55: #{transformer_forward.3} parent=23 // pred_region
          %p761 = scmp.lt.s32.totalorder %s41, 1
          %s762 = scalar_select %p761, %s41, 1
          %s763 = scalar_lea.vmem %s7, %s762
        $region56: #{transformer_forward.3} parent=23 // pred_fallthru
          _
        // Predicated region
        $region57: #{transformer_forward.3} parent=23 // pred_check
          %p764 = pneg %p273
        $region58: #{transformer_forward.3} parent=23 // pred_check_branch
          %766 = sbr.rel (%p764) target = $region60
        $region59: #{transformer_forward.3} parent=23 // pred_region
          %p767 = scmp.lt.s32.totalorder %s41, 1
          %s768 = scalar_select %p767, %s41, 1
          %s769 = smul.addr %s768, 4
          %s770 = smul.addr %s769, 8
          %s771 = scalar_lea.vmem %s8, %s770
        $region60: #{transformer_forward.3} parent=23 // pred_fallthru
          _
        // Predicated region
        $region61: #{transformer_forward.3} parent=23 // pred_check
          %p772 = pneg %p299
        $region62: #{transformer_forward.3} parent=23 // pred_check_branch
          %774 = sbr.rel (%p772) target = $region64
        $region63: #{transformer_forward.3} parent=23 // pred_region
          %p775 = scmp.lt.s32.totalorder %s41, 1
          %s776 = scalar_select %p775, %s41, 1
          %s777 = scalar_lea.vmem %s9, %s776
        $region64: #{transformer_forward.3} parent=23 // pred_fallthru
          _
        // Predicated region
        $region65: #{transformer_forward.3} parent=23 // pred_check
          %p778 = pneg %p325
        $region66: #{transformer_forward.3} parent=23 // pred_check_branch
          %780 = sbr.rel (%p778) target = $region68
        $region67: #{transformer_forward.3} parent=23 // pred_region
          %p781 = scmp.lt.s32.totalorder %s41, 1
          %s782 = scalar_select %p781, %s41, 1
          %s783 = smul.addr %s782, 4
          %s784 = smul.addr %s783, 8
          %s785 = scalar_lea.vmem %s10, %s784
        $region68: #{transformer_forward.3} parent=23 // pred_fallthru
          _
        // Predicated region
        $region69: #{transformer_forward.3} parent=23 // pred_check
          %p786 = pneg %p351
        $region70: #{transformer_forward.3} parent=23 // pred_check_branch
          %788 = sbr.rel (%p786) target = $region72
        $region71: #{transformer_forward.3} parent=23 // pred_region
          %p789 = scmp.lt.s32.totalorder %s41, 1
          %s790 = scalar_select %p789, %s41, 1
          %s791 = scalar_lea.vmem %s11, %s790
        $region72: #{transformer_forward.3} parent=23 // pred_fallthru
          _
        // Predicated region
        $region73: #{transformer_forward.3} parent=23 // pred_check
          %p792 = pneg %p377
        $region74: #{transformer_forward.3} parent=23 // pred_check_branch
          %794 = sbr.rel (%p792) target = $region76
        $region75: #{transformer_forward.3} parent=23 // pred_region
          %p795 = scmp.lt.s32.totalorder %s41, 1
          %s796 = scalar_select %p795, %s41, 1
          %s797 = smul.addr %s796, 4
          %s798 = smul.addr %s797, 8
          %s799 = scalar_lea.vmem %s12, %s798
        $region76: #{transformer_forward.3} parent=23 // pred_fallthru
          _
        // Predicated region
        $region77: #{transformer_forward.3} parent=23 // pred_check
          %p800 = pneg %p403
        $region78: #{transformer_forward.3} parent=23 // pred_check_branch
          %802 = sbr.rel (%p800) target = $region80
        $region79: #{transformer_forward.3} parent=23 // pred_region
          %p803 = scmp.lt.s32.totalorder %s41, 1
          %s804 = scalar_select %p803, %s41, 1
          %s805 = scalar_lea.vmem %s13, %s804
        $region80: #{transformer_forward.3} parent=23 // pred_fallthru
          _
        // Predicated region
        $region81: #{transformer_forward.3} parent=23 // pred_check
          %p806 = pneg %p429
        $region82: #{transformer_forward.3} parent=23 // pred_check_branch
          %808 = sbr.rel (%p806) target = $region84
        $region83: #{transformer_forward.3} parent=23 // pred_region
          %p809 = scmp.lt.s32.totalorder %s41, 1
          %s810 = scalar_select %p809, %s41, 1
          %s811 = scalar_lea.vmem %s14, %s810
        $region84: #{transformer_forward.3} parent=23 // pred_fallthru
          _
        // Predicated region
        $region85: #{transformer_forward.3} parent=23 // pred_check
          %p812 = pneg %p455
        $region86: #{transformer_forward.3} parent=23 // pred_check_branch
          %814 = sbr.rel (%p812) target = $region88
        $region87: #{transformer_forward.3} parent=23 // pred_region
          %p815 = scmp.lt.s32.totalorder %s41, 1
          %s816 = scalar_select %p815, %s41, 1
          %s817 = scalar_lea.vmem %s15, %s816
        $region88: #{transformer_forward.3} parent=23 // pred_fallthru
          _
        // Predicated region
        $region89: #{transformer_forward.3} parent=23 // pred_check
          %p818 = pneg %p481
        $region90: #{transformer_forward.3} parent=23 // pred_check_branch
          %820 = sbr.rel (%p818) target = $region92
        $region91: #{transformer_forward.3} parent=23 // pred_region
          %p821 = scmp.lt.s32.totalorder %s41, 1
          %s822 = scalar_select %p821, %s41, 1
          %s823 = smul.addr %s822, 4
          %s824 = smul.addr %s823, 8
          %s825 = scalar_lea.vmem %s16, %s824
        $region92: #{transformer_forward.3} parent=23 // pred_fallthru
          _
        // Predicated region
        $region93: #{transformer_forward.3} parent=23 // pred_check
          %p826 = pneg %p507
        $region94: #{transformer_forward.3} parent=23 // pred_check_branch
          %828 = sbr.rel (%p826) target = $region96
        $region95: #{transformer_forward.3} parent=23 // pred_region
          %p829 = scmp.lt.s32.totalorder %s41, 1
          %s830 = scalar_select %p829, %s41, 1
          %s831 = scalar_lea.vmem %s17, %s830
        $region96: #{transformer_forward.3} parent=23 // pred_fallthru
          _
        // Predicated region
        $region97: #{transformer_forward.3} parent=23 // pred_check
          %p832 = pneg %p533
        $region98: #{transformer_forward.3} parent=23 // pred_check_branch
          %834 = sbr.rel (%p832) target = $region100
        $region99: #{transformer_forward.3} parent=23 // pred_region
          %p835 = scmp.lt.s32.totalorder %s41, 1
          %s836 = scalar_select %p835, %s41, 1
          %s837 = smul.addr %s836, 8
          %s838 = smul.addr %s837, 8
          %s839 = scalar_lea.vmem %s18, %s838
        $region100: #{transformer_forward.3} parent=23 // pred_fallthru
          _
        // Predicated region
        $region101: #{transformer_forward.3} parent=23 // pred_check
          %p840 = pneg %p559
        $region102: #{transformer_forward.3} parent=23 // pred_check_branch
          %842 = sbr.rel (%p840) target = $region104
        $region103: #{transformer_forward.3} parent=23 // pred_region
          %p843 = scmp.lt.s32.totalorder %s41, 1
          %s844 = scalar_select %p843, %s41, 1
          %s845 = scalar_lea.vmem %s19, %s844
        $region104: #{transformer_forward.3} parent=23 // pred_fallthru
          _
        // Predicated region
        $region105: #{transformer_forward.3} parent=23 // pred_check
          %p846 = pneg %p585
        $region106: #{transformer_forward.3} parent=23 // pred_check_branch
          %848 = sbr.rel (%p846) target = $region108
        $region107: #{transformer_forward.3} parent=23 // pred_region
          %p849 = scmp.lt.s32.totalorder %s41, 1
          %s850 = scalar_select %p849, %s41, 1
          %s851 = scalar_lea.vmem %s20, %s850
        $region108: #{transformer_forward.3} parent=23 // pred_fallthru
          _
        // Predicated region
        $region109: #{transformer_forward.3} parent=23 // pred_check
          %p852 = pneg %p611
        $region110: #{transformer_forward.3} parent=23 // pred_check_branch
          %854 = sbr.rel (%p852) target = $region112
        $region111: #{transformer_forward.3} parent=23 // pred_region
          %p855 = scmp.lt.s32.totalorder %s41, 1
          %s856 = scalar_select %p855, %s41, 1
          %s857 = scalar_lea.vmem %s21, %s856
        $region112: #{transformer_forward.3} parent=23 // pred_fallthru
          _
      $region24: #{transformer_forward.3} parent=5 // pred_fallthru
        _
      %p858 = scmp.le.s32.totalorder 1, %s33
      %p859 = scmp.lt.s32.totalorder %s33, 5
      %p860 = pnand %p858, %p859
      %p861 = pneg %p860
      // Predicated region
      $region113: #{transformer_forward.3} parent=5 // pred_check
        _
      $region114: #{transformer_forward.3} parent=5 // pred_check_branch
        %863 = sbr.rel (%p860) target = $region116
      $region115: #{transformer_forward.3} parent=5 // pred_region
        %s864 = ssub.s32 %s33, 1
        %p865 = scmp.lt.s32.totalorder %s42, 1
        %s866 = scalar_select %p865, %s42, 1
        %s867 = smul.addr %s866, 8
        %s868 = scalar_lea.vmem %s0, %s867
        %p869 = pneg %p71
        %p870 = pneg %p68
        %p871 = scmp.lt.s32.totalorder %s42, 1
        %s872 = scalar_select %p871, %s42, 1
        %s873 = smul.addr %s872, 8
        %s874 = scalar_lea.vmem %s1, %s873
        %p875 = pneg %p97
        %p876 = pneg %p94
        %p877 = scmp.lt.s32.totalorder %s43, 1
        %s878 = scalar_select %p877, %s43, 1
        %s879 = smul.addr %s878, 4
        %s880 = smul.addr %s879, 8
        %s881 = scalar_lea.vmem %s2, %s880
        %p882 = pneg %p123
        %p883 = pneg %p120
        %p884 = scmp.lt.s32.totalorder %s43, 1
        %s885 = scalar_select %p884, %s43, 1
        %s886 = scalar_lea.vmem %s3, %s885
        %p887 = pneg %p149
        %p888 = pneg %p146
        %p889 = scmp.lt.s32.totalorder %s43, 1
        %s890 = scalar_select %p889, %s43, 1
        %s891 = smul.addr %s890, 4
        %s892 = smul.addr %s891, 8
        %s893 = scalar_lea.vmem %s4, %s892
        %p894 = pneg %p175
        %p895 = pneg %p172
        %p896 = scmp.lt.s32.totalorder %s43, 1
        %s897 = scalar_select %p896, %s43, 1
        %s898 = scalar_lea.vmem %s5, %s897
        %p899 = pneg %p201
        %p900 = pneg %p198
        %p901 = scmp.lt.s32.totalorder %s43, 1
        %s902 = scalar_select %p901, %s43, 1
        %s903 = scalar_lea.vmem %s6, %s902
        %p904 = pneg %p227
        %p905 = pneg %p224
        %p906 = scmp.lt.s32.totalorder %s43, 1
        %s907 = scalar_select %p906, %s43, 1
        %s908 = scalar_lea.vmem %s7, %s907
        %p909 = pneg %p253
        %p910 = pneg %p250
        %p911 = scmp.lt.s32.totalorder %s43, 1
        %s912 = scalar_select %p911, %s43, 1
        %s913 = smul.addr %s912, 4
        %s914 = smul.addr %s913, 8
        %s915 = scalar_lea.vmem %s8, %s914
        %p916 = pneg %p279
        %p917 = pneg %p276
        %p918 = scmp.lt.s32.totalorder %s43, 1
        %s919 = scalar_select %p918, %s43, 1
        %s920 = scalar_lea.vmem %s9, %s919
        %p921 = pneg %p305
        %p922 = pneg %p302
        %p923 = scmp.lt.s32.totalorder %s43, 1
        %s924 = scalar_select %p923, %s43, 1
        %s925 = smul.addr %s924, 4
        %s926 = smul.addr %s925, 8
        %s927 = scalar_lea.vmem %s10, %s926
        %p928 = pneg %p331
        %p929 = pneg %p328
        %p930 = scmp.lt.s32.totalorder %s43, 1
        %s931 = scalar_select %p930, %s43, 1
        %s932 = scalar_lea.vmem %s11, %s931
        %p933 = pneg %p357
        %p934 = pneg %p354
        %p935 = scmp.lt.s32.totalorder %s43, 1
        %s936 = scalar_select %p935, %s43, 1
        %s937 = smul.addr %s936, 4
        %s938 = smul.addr %s937, 8
        %s939 = scalar_lea.vmem %s12, %s938
        %p940 = pneg %p383
        %p941 = pneg %p380
        %p942 = scmp.lt.s32.totalorder %s43, 1
        %s943 = scalar_select %p942, %s43, 1
        %s944 = scalar_lea.vmem %s13, %s943
        %p945 = pneg %p409
        %p946 = pneg %p406
        %p947 = scmp.lt.s32.totalorder %s43, 1
        %s948 = scalar_select %p947, %s43, 1
        %s949 = scalar_lea.vmem %s14, %s948
        %p950 = pneg %p435
        %p951 = pneg %p432
        %p952 = scmp.lt.s32.totalorder %s43, 1
        %s953 = scalar_select %p952, %s43, 1
        %s954 = scalar_lea.vmem %s15, %s953
        %p955 = pneg %p461
        %p956 = pneg %p458
        %p957 = scmp.lt.s32.totalorder %s43, 1
        %s958 = scalar_select %p957, %s43, 1
        %s959 = smul.addr %s958, 4
        %s960 = smul.addr %s959, 8
        %s961 = scalar_lea.vmem %s16, %s960
        %p962 = pneg %p487
        %p963 = pneg %p484
        %p964 = scmp.lt.s32.totalorder %s43, 1
        %s965 = scalar_select %p964, %s43, 1
        %s966 = scalar_lea.vmem %s17, %s965
        %p967 = pneg %p513
        %p968 = pneg %p510
        %p969 = scmp.lt.s32.totalorder %s43, 1
        %s970 = scalar_select %p969, %s43, 1
        %s971 = smul.addr %s970, 8
        %s972 = smul.addr %s971, 8
        %s973 = scalar_lea.vmem %s18, %s972
        %p974 = pneg %p539
        %p975 = pneg %p536
        %p976 = scmp.lt.s32.totalorder %s43, 1
        %s977 = scalar_select %p976, %s43, 1
        %s978 = scalar_lea.vmem %s19, %s977
        %p979 = pneg %p565
        %p980 = pneg %p562
        %p981 = scmp.lt.s32.totalorder %s43, 1
        %s982 = scalar_select %p981, %s43, 1
        %s983 = scalar_lea.vmem %s20, %s982
        %p984 = pneg %p591
        %p985 = pneg %p588
        %p986 = scmp.lt.s32.totalorder %s43, 1
        %s987 = scalar_select %p986, %s43, 1
        %s988 = scalar_lea.vmem %s21, %s987
        %p989 = pneg %p617
        %p990 = pneg %p614
        %p991 = pneg %p638
        %p992 = pneg %p635
        %p993 = pneg %p659
        %p994 = pneg %p656
        %p995 = pneg %p685
        %p996 = pneg %p682
        %s997 = sand.u32 %s672, 1
        %s998 = scalar_lea.sflag [#allocation4], %s997
        %s999 = sand.u32 %s672, 1
        %s1000 = smul.addr %s999, 8
        %s1001 = scalar_lea.vmem [#allocation3], %s1000
        %p1002 = scmp.lt.s32.totalorder %s42, 1
        %s1003 = scalar_select %p1002, %s42, 1
        %s1004 = smul.addr %s1003, 8
        %s1005 = scalar_lea.vmem %s0, %s1004
        %p1006 = scmp.lt.s32.totalorder %s42, 1
        %s1007 = scalar_select %p1006, %s42, 1
        %s1008 = smul.addr %s1007, 8
        %s1009 = scalar_lea.vmem %s1, %s1008
        %p1010 = scmp.lt.s32.totalorder %s43, 1
        %s1011 = scalar_select %p1010, %s43, 1
        %s1012 = smul.addr %s1011, 4
        %s1013 = smul.addr %s1012, 8
        %s1014 = scalar_lea.vmem %s2, %s1013
        %p1015 = scmp.lt.s32.totalorder %s43, 1
        %s1016 = scalar_select %p1015, %s43, 1
        %s1017 = scalar_lea.vmem %s3, %s1016
        %p1018 = scmp.lt.s32.totalorder %s43, 1
        %s1019 = scalar_select %p1018, %s43, 1
        %s1020 = smul.addr %s1019, 4
        %s1021 = smul.addr %s1020, 8
        %s1022 = scalar_lea.vmem %s4, %s1021
        %p1023 = scmp.lt.s32.totalorder %s43, 1
        %s1024 = scalar_select %p1023, %s43, 1
        %s1025 = scalar_lea.vmem %s5, %s1024
        %p1026 = scmp.lt.s32.totalorder %s43, 1
        %s1027 = scalar_select %p1026, %s43, 1
        %s1028 = scalar_lea.vmem %s6, %s1027
        %p1029 = scmp.lt.s32.totalorder %s43, 1
        %s1030 = scalar_select %p1029, %s43, 1
        %s1031 = scalar_lea.vmem %s7, %s1030
        %p1032 = scmp.lt.s32.totalorder %s43, 1
        %s1033 = scalar_select %p1032, %s43, 1
        %s1034 = smul.addr %s1033, 4
        %s1035 = smul.addr %s1034, 8
        %s1036 = scalar_lea.vmem %s8, %s1035
        %p1037 = scmp.lt.s32.totalorder %s43, 1
        %s1038 = scalar_select %p1037, %s43, 1
        %s1039 = scalar_lea.vmem %s9, %s1038
        %p1040 = scmp.lt.s32.totalorder %s43, 1
        %s1041 = scalar_select %p1040, %s43, 1
        %s1042 = smul.addr %s1041, 4
        %s1043 = smul.addr %s1042, 8
        %s1044 = scalar_lea.vmem %s10, %s1043
        %p1045 = scmp.lt.s32.totalorder %s43, 1
        %s1046 = scalar_select %p1045, %s43, 1
        %s1047 = scalar_lea.vmem %s11, %s1046
        %p1048 = scmp.lt.s32.totalorder %s43, 1
        %s1049 = scalar_select %p1048, %s43, 1
        %s1050 = smul.addr %s1049, 4
        %s1051 = smul.addr %s1050, 8
        %s1052 = scalar_lea.vmem %s12, %s1051
        %p1053 = scmp.lt.s32.totalorder %s43, 1
        %s1054 = scalar_select %p1053, %s43, 1
        %s1055 = scalar_lea.vmem %s13, %s1054
        %p1056 = scmp.lt.s32.totalorder %s43, 1
        %s1057 = scalar_select %p1056, %s43, 1
        %s1058 = scalar_lea.vmem %s14, %s1057
        %p1059 = scmp.lt.s32.totalorder %s43, 1
        %s1060 = scalar_select %p1059, %s43, 1
        %s1061 = scalar_lea.vmem %s15, %s1060
        %p1062 = scmp.lt.s32.totalorder %s43, 1
        %s1063 = scalar_select %p1062, %s43, 1
        %s1064 = smul.addr %s1063, 4
        %s1065 = smul.addr %s1064, 8
        %s1066 = scalar_lea.vmem %s16, %s1065
        %p1067 = scmp.lt.s32.totalorder %s43, 1
        %s1068 = scalar_select %p1067, %s43, 1
        %s1069 = scalar_lea.vmem %s17, %s1068
        %p1070 = scmp.lt.s32.totalorder %s43, 1
        %s1071 = scalar_select %p1070, %s43, 1
        %s1072 = smul.addr %s1071, 8
        %s1073 = smul.addr %s1072, 8
        %s1074 = scalar_lea.vmem %s18, %s1073
        %p1075 = scmp.lt.s32.totalorder %s43, 1
        %s1076 = scalar_select %p1075, %s43, 1
        %s1077 = scalar_lea.vmem %s19, %s1076
        %p1078 = scmp.lt.s32.totalorder %s43, 1
        %s1079 = scalar_select %p1078, %s43, 1
        %s1080 = scalar_lea.vmem %s20, %s1079
        %p1081 = scmp.lt.s32.totalorder %s43, 1
        %s1082 = scalar_select %p1081, %s43, 1
        %s1083 = scalar_lea.vmem %s21, %s1082
        %p1085 = scmp.eq.s32.totalorder %s43, 0
        // Predicated region
        $region117: #{transformer_forward.3} parent=115 // pred_check
          %p1086 = pneg %p1085
        $region118: #{transformer_forward.3} parent=115 // pred_check_branch
          %1088 = sbr.rel (%p1086) target = $region120
        $region119: #{transformer_forward.3} parent=115 // pred_region
          %v1089 = vld [vmem:[%s1009] sm:$0xff]
          %vm1090 = vcmask 261120
          %1091 = vst.msk [vmem:[#allocation2] sm:$0xff] %vm1090, %v1089
        $region120: #{transformer_forward.3} parent=115 // pred_fallthru
          _
        %v1092 = vld [vmem:[#allocation2] sm:$0xff]
        %v1093 = vld [vmem:[%s1005] sm:$0xff]
        %v1094 = vld [vmem:[%s1014] sm:$0xff]
        %v1095 = vld [vmem:[%s1014 + $0x8] sm:$0xff]
        %v1096 = vld [vmem:[%s1014 + $0x10] sm:$0xff]
        %v1097 = vld [vmem:[%s1014 + $0x18] sm:$0xff]
        %v1098 = vpack.c.bf16 %v1092, %v1092
        %v1099 = vpack.c.bf16 %v1095, %v1094
        %v1100 = vpack.c.bf16 %v1097, %v1096
        %v1101 = vld [vmem:[%s1017] sm:$0x1]
        %v1103 = vlaneseq
        %v1104 = vshrl.u32 %v1103, 7
        %v1105 = vsub.s32 0, %v1104
        %v1106 = vrot.slane %v1101, %v1105
        %vm1108 = vcmask 261120
        %v1110 = vsel %vm1108, %v1098, 0
        %1112 = vmatprep.subr.bf16.mxu0 0
        %1113 = vmatpush1.bf16.msra.mxu0 %v1099
        %1114 = vmatprep.subr.bf16.mxu0 0
        %1115 = vmatpush1.bf16.msra.mxu0 %v1100
        %1116 = vmatprep.subr.bf16.mxu0 0
        %1117 = vmatpush1.bf16.msra.mxu0 0
        %1118 = vmatprep.subr.bf16.mxu0 0
        %1119 = vmatpush1.bf16.msra.mxu0 0
        %1120 = vmatprep.subr.bf16.mxu0 0
        %1121 = vmatpush1.bf16.msra.mxu0 0
        %1122 = vmatprep.subr.bf16.mxu0 0
        %1123 = vmatpush1.bf16.msra.mxu0 0
        %1124 = vmatprep.subr.bf16.mxu0 0
        %1125 = vmatpush1.bf16.msra.mxu0 0
        %1126 = vmatprep.subr.bf16.mxu0 0
        %1127 = vmatpush1.bf16.msra.mxu0 0
        %1128 = vmatprep.subr.bf16.mxu0 0
        %1129 = vmatpush1.bf16.msra.mxu0 0
        %1130 = vmatprep.subr.bf16.mxu0 0
        %1131 = vmatpush1.bf16.msra.mxu0 0
        %1132 = vmatprep.subr.bf16.mxu0 0
        %1133 = vmatpush1.bf16.msra.mxu0 0
        %1134 = vmatprep.subr.bf16.mxu0 0
        %1135 = vmatpush1.bf16.msra.mxu0 0
        %1136 = vmatprep.subr.bf16.mxu0 0
        %1137 = vmatpush1.bf16.msra.mxu0 0
        %1138 = vmatprep.subr.bf16.mxu0 0
        %1139 = vmatpush1.bf16.msra.mxu0 0
        %1140 = vmatprep.subr.bf16.mxu0 0
        %1141 = vmatpush1.bf16.msra.mxu0 0
        %1142 = vmatprep.subr.bf16.mxu0 0
        %1143 = vmatpush1.bf16.msra.mxu0 0
        %1144 = vmatprep.mubr.bf16.mxu0 0
        %1145 = vmatmul.mubr.bf16.gmra.mrb[0].mxu0 %v1110
        %v1146 = vpop.f32.mrb[0].mxu0
        %v1147 = vadd.f32 %v1106, %v1146
        %v1148 = vpop.f32.mrb[0].mxu0
        %v1149 = vpop.f32.mrb[0].mxu0
        %v1150 = vpop.f32.mrb[0].mxu0
        %1151 = vdwg.mxu0
        %v1152 = vpack.c.bf16 %v1147, %v1147
        %1154 = vrot.lane.b32.xlu0 %v1152, 96
        %v1155 = vpop.permute.xlu0 %1154
        %vm1156 = vcmask 64512
        %v1158 = vsel %vm1156, %v1152, 0
        %v1161 = vsel %vm1156, %v1155, 0
        %1163 = vmatprep.subr.bf16.mxu0 0
        %1164 = vmatpush1.bf16.xpose.msra.mxu0 %v1161
        %1165 = vmatprep.subr.bf16.mxu0 0
        %1166 = vmatpush1.bf16.xpose.msra.mxu0 0
        %1167 = vmatprep.subr.bf16.mxu0 0
        %1168 = vmatpush1.bf16.xpose.msra.mxu0 0
        %1169 = vmatprep.subr.bf16.mxu0 0
        %1170 = vmatpush1.bf16.xpose.msra.mxu0 0
        %1171 = vmatprep.subr.bf16.mxu0 0
        %1172 = vmatpush1.bf16.xpose.msra.mxu0 0
        %1173 = vmatprep.subr.bf16.mxu0 0
        %1174 = vmatpush1.bf16.xpose.msra.mxu0 0
        %1175 = vmatprep.subr.bf16.mxu0 0
        %1176 = vmatpush1.bf16.xpose.msra.mxu0 0
        %1177 = vmatprep.subr.bf16.mxu0 0
        %1178 = vmatpush1.bf16.xpose.msra.mxu0 0
        %1179 = vmatprep.subr.bf16.mxu0 0
        %1180 = vmatpush1.bf16.xpose.msra.mxu0 0
        %1181 = vmatprep.subr.bf16.mxu0 0
        %1182 = vmatpush1.bf16.xpose.msra.mxu0 0
        %1183 = vmatprep.subr.bf16.mxu0 0
        %1184 = vmatpush1.bf16.xpose.msra.mxu0 0
        %1185 = vmatprep.subr.bf16.mxu0 0
        %1186 = vmatpush1.bf16.xpose.msra.mxu0 0
        %1187 = vmatprep.subr.bf16.mxu0 0
        %1188 = vmatpush1.bf16.xpose.msra.mxu0 0
        %1189 = vmatprep.subr.bf16.mxu0 0
        %1190 = vmatpush1.bf16.xpose.msra.mxu0 0
        %1191 = vmatprep.subr.bf16.mxu0 0
        %1192 = vmatpush1.bf16.xpose.msra.mxu0 0
        %1193 = vmatprep.subr.bf16.mxu0 0
        %1194 = vmatpush1.bf16.xpose.msra.mxu0 0
        %1195 = vmatprep.mubr.bf16.mxu0 0
        %1196 = vmatmul.mubr.bf16.gmra.mrb[0].mxu0 %v1158
        %v1197 = vpop.f32.mrb[0].mxu0
        %v1198 = vadd.f32 0.0, %v1197
        %v1199 = vpop.f32.mrb[0].mxu0
        %v1200 = vpop.f32.mrb[0].mxu0
        %v1201 = vpop.f32.mrb[0].mxu0
        %1202 = vdwg.mxu0
        %v1203 = vmul.f32 %v1198, 0.35355338
        %v1204 = vsel %vm1156, %v1203, -inf
        %1205 = vmax.xlane.f32.xlu0 %v1204
        %v1206 = vpop.xlane.xlu0 %1205
        %v1207 = vsub.f32 %v1203, %v1206
        %v1208 = vmul.f32 %v1207, 1.442695
        %v1209 = vpow.pop %v1208
        %v1210 = vsel %vm1156, %v1209, 0.0
        %1211 = vadd.xlane.f32.xlu0 %v1210
        %v1212 = vpop.xlane.xlu0 %1211
        %v1213 = vrcp.pop %v1212
        %v1214 = vmul.f32 %v1209, %v1213
        %v1215 = vpack.c.bf16 %v1214, %v1214
        %1216 = vrot.lane.b32.xlu0 %v1152, 64
        %v1217 = vpop.permute.xlu0 %1216
        %v1219 = vsel %vm1156, %v1215, 0
        %vm1221 = vcmask 1043456
        %v1223 = vsel %vm1221, %v1217, 0
        %1225 = vmatprep.subr.bf16.mxu0 0
        %1226 = vmatpush1.bf16.msra.mxu0 %v1223
        %1227 = vmatprep.subr.bf16.mxu0 0
        %1228 = vmatpush1.bf16.msra.mxu0 0
        %1229 = vmatprep.subr.bf16.mxu0 0
        %1230 = vmatpush1.bf16.msra.mxu0 0
        %1231 = vmatprep.subr.bf16.mxu0 0
        %1232 = vmatpush1.bf16.msra.mxu0 0
        %1233 = vmatprep.subr.bf16.mxu0 0
        %1234 = vmatpush1.bf16.msra.mxu0 0
        %1235 = vmatprep.subr.bf16.mxu0 0
        %1236 = vmatpush1.bf16.msra.mxu0 0
        %1237 = vmatprep.subr.bf16.mxu0 0
        %1238 = vmatpush1.bf16.msra.mxu0 0
        %1239 = vmatprep.subr.bf16.mxu0 0
        %1240 = vmatpush1.bf16.msra.mxu0 0
        %1241 = vmatprep.subr.bf16.mxu0 0
        %1242 = vmatpush1.bf16.msra.mxu0 0
        %1243 = vmatprep.subr.bf16.mxu0 0
        %1244 = vmatpush1.bf16.msra.mxu0 0
        %1245 = vmatprep.subr.bf16.mxu0 0
        %1246 = vmatpush1.bf16.msra.mxu0 0
        %1247 = vmatprep.subr.bf16.mxu0 0
        %1248 = vmatpush1.bf16.msra.mxu0 0
        %1249 = vmatprep.subr.bf16.mxu0 0
        %1250 = vmatpush1.bf16.msra.mxu0 0
        %1251 = vmatprep.subr.bf16.mxu0 0
        %1252 = vmatpush1.bf16.msra.mxu0 0
        %1253 = vmatprep.subr.bf16.mxu0 0
        %1254 = vmatpush1.bf16.msra.mxu0 0
        %1255 = vmatprep.subr.bf16.mxu0 0
        %1256 = vmatpush1.bf16.msra.mxu0 0
        %1257 = vmatprep.mubr.bf16.mxu0 0
        %1258 = vmatmul.mubr.bf16.gmra.mrb[0].mxu0 %v1219
        %v1259 = vpop.f32.mrb[0].mxu0
        %v1260 = vadd.f32 0.0, %v1259
        %v1261 = vpop.f32.mrb[0].mxu0
        %v1262 = vpop.f32.mrb[0].mxu0
        %v1263 = vpop.f32.mrb[0].mxu0
        %1264 = vdwg.mxu0
        %1265 = vrot.lane.b32.xlu0 %v1152, 120
        %v1266 = vpop.permute.xlu0 %1265
        %1267 = vrot.lane.b32.xlu0 %v1152, 88
        %v1268 = vpop.permute.xlu0 %1267
        %v1270 = vsel %vm1156, %v1266, 0
        %v1273 = vsel %vm1156, %v1268, 0
        %1275 = vmatprep.subr.bf16.mxu0 0
        %1276 = vmatpush1.bf16.xpose.msra.mxu0 %v1273
        %1277 = vmatprep.subr.bf16.mxu0 0
        %1278 = vmatpush1.bf16.xpose.msra.mxu0 0
        %1279 = vmatprep.subr.bf16.mxu0 0
        %1280 = vmatpush1.bf16.xpose.msra.mxu0 0
        %1281 = vmatprep.subr.bf16.mxu0 0
        %1282 = vmatpush1.bf16.xpose.msra.mxu0 0
        %1283 = vmatprep.subr.bf16.mxu0 0
        %1284 = vmatpush1.bf16.xpose.msra.mxu0 0
        %1285 = vmatprep.subr.bf16.mxu0 0
        %1286 = vmatpush1.bf16.xpose.msra.mxu0 0
        %1287 = vmatprep.subr.bf16.mxu0 0
        %1288 = vmatpush1.bf16.xpose.msra.mxu0 0
        %1289 = vmatprep.subr.bf16.mxu0 0
        %1290 = vmatpush1.bf16.xpose.msra.mxu0 0
        %1291 = vmatprep.subr.bf16.mxu0 0
        %1292 = vmatpush1.bf16.xpose.msra.mxu0 0
        %1293 = vmatprep.subr.bf16.mxu0 0
        %1294 = vmatpush1.bf16.xpose.msra.mxu0 0
        %1295 = vmatprep.subr.bf16.mxu0 0
        %1296 = vmatpush1.bf16.xpose.msra.mxu0 0
        %1297 = vmatprep.subr.bf16.mxu0 0
        %1298 = vmatpush1.bf16.xpose.msra.mxu0 0
        %1299 = vmatprep.subr.bf16.mxu0 0
        %1300 = vmatpush1.bf16.xpose.msra.mxu0 0
        %1301 = vmatprep.subr.bf16.mxu0 0
        %1302 = vmatpush1.bf16.xpose.msra.mxu0 0
        %1303 = vmatprep.subr.bf16.mxu0 0
        %1304 = vmatpush1.bf16.xpose.msra.mxu0 0
        %1305 = vmatprep.subr.bf16.mxu0 0
        %1306 = vmatpush1.bf16.xpose.msra.mxu0 0
        %1307 = vmatprep.mubr.bf16.mxu0 0
        %1308 = vmatmul.mubr.bf16.gmra.mrb[0].mxu0 %v1270
        %v1309 = vpop.f32.mrb[0].mxu0
        %v1310 = vadd.f32 0.0, %v1309
        %v1311 = vpop.f32.mrb[0].mxu0
        %v1312 = vpop.f32.mrb[0].mxu0
        %v1313 = vpop.f32.mrb[0].mxu0
        %1314 = vdwg.mxu0
        %v1315 = vmul.f32 %v1310, 0.35355338
        %v1316 = vsel %vm1156, %v1315, -inf
        %1317 = vmax.xlane.f32.xlu0 %v1316
        %v1318 = vpop.xlane.xlu0 %1317
        %v1319 = vsub.f32 %v1315, %v1318
        %v1320 = vmul.f32 %v1319, 1.442695
        %v1321 = vpow.pop %v1320
        %v1322 = vsel %vm1156, %v1321, 0.0
        %1323 = vadd.xlane.f32.xlu0 %v1322
        %v1324 = vpop.xlane.xlu0 %1323
        %v1325 = vrcp.pop %v1324
        %v1326 = vmul.f32 %v1321, %v1325
        %v1327 = vpack.c.bf16 %v1326, %v1326
        %1328 = vrot.lane.b32.xlu0 %v1152, 56
        %v1329 = vpop.permute.xlu0 %1328
        %v1331 = vsel %vm1156, %v1327, 0
        %v1334 = vsel %vm1221, %v1329, 0
        %1336 = vmatprep.subr.bf16.mxu0 0
        %1337 = vmatpush1.bf16.msra.mxu0 %v1334
        %1338 = vmatprep.subr.bf16.mxu0 0
        %1339 = vmatpush1.bf16.msra.mxu0 0
        %1340 = vmatprep.subr.bf16.mxu0 0
        %1341 = vmatpush1.bf16.msra.mxu0 0
        %1342 = vmatprep.subr.bf16.mxu0 0
        %1343 = vmatpush1.bf16.msra.mxu0 0
        %1344 = vmatprep.subr.bf16.mxu0 0
        %1345 = vmatpush1.bf16.msra.mxu0 0
        %1346 = vmatprep.subr.bf16.mxu0 0
        %1347 = vmatpush1.bf16.msra.mxu0 0
        %1348 = vmatprep.subr.bf16.mxu0 0
        %1349 = vmatpush1.bf16.msra.mxu0 0
        %1350 = vmatprep.subr.bf16.mxu0 0
        %1351 = vmatpush1.bf16.msra.mxu0 0
        %1352 = vmatprep.subr.bf16.mxu0 0
        %1353 = vmatpush1.bf16.msra.mxu0 0
        %1354 = vmatprep.subr.bf16.mxu0 0
        %1355 = vmatpush1.bf16.msra.mxu0 0
        %1356 = vmatprep.subr.bf16.mxu0 0
        %1357 = vmatpush1.bf16.msra.mxu0 0
        %1358 = vmatprep.subr.bf16.mxu0 0
        %1359 = vmatpush1.bf16.msra.mxu0 0
        %1360 = vmatprep.subr.bf16.mxu0 0
        %1361 = vmatpush1.bf16.msra.mxu0 0
        %1362 = vmatprep.subr.bf16.mxu0 0
        %1363 = vmatpush1.bf16.msra.mxu0 0
        %1364 = vmatprep.subr.bf16.mxu0 0
        %1365 = vmatpush1.bf16.msra.mxu0 0
        %1366 = vmatprep.subr.bf16.mxu0 0
        %1367 = vmatpush1.bf16.msra.mxu0 0
        %1368 = vmatprep.mubr.bf16.mxu0 0
        %1369 = vmatmul.mubr.bf16.gmra.mrb[0].mxu0 %v1331
        %v1370 = vpop.f32.mrb[0].mxu0
        %v1371 = vadd.f32 0.0, %v1370
        %v1372 = vpop.f32.mrb[0].mxu0
        %v1373 = vpop.f32.mrb[0].mxu0
        %v1374 = vpop.f32.mrb[0].mxu0
        %1375 = vdwg.mxu0
        %1376 = vrot.lane.b32.xlu0 %v1152, 112
        %v1377 = vpop.permute.xlu0 %1376
        %1378 = vrot.lane.b32.xlu0 %v1152, 80
        %v1379 = vpop.permute.xlu0 %1378
        %v1381 = vsel %vm1156, %v1377, 0
        %v1384 = vsel %vm1156, %v1379, 0
        %1386 = vmatprep.subr.bf16.mxu0 0
        %1387 = vmatpush1.bf16.xpose.msra.mxu0 %v1384
        %1388 = vmatprep.subr.bf16.mxu0 0
        %1389 = vmatpush1.bf16.xpose.msra.mxu0 0
        %1390 = vmatprep.subr.bf16.mxu0 0
        %1391 = vmatpush1.bf16.xpose.msra.mxu0 0
        %1392 = vmatprep.subr.bf16.mxu0 0
        %1393 = vmatpush1.bf16.xpose.msra.mxu0 0
        %1394 = vmatprep.subr.bf16.mxu0 0
        %1395 = vmatpush1.bf16.xpose.msra.mxu0 0
        %1396 = vmatprep.subr.bf16.mxu0 0
        %1397 = vmatpush1.bf16.xpose.msra.mxu0 0
        %1398 = vmatprep.subr.bf16.mxu0 0
        %1399 = vmatpush1.bf16.xpose.msra.mxu0 0
        %1400 = vmatprep.subr.bf16.mxu0 0
        %1401 = vmatpush1.bf16.xpose.msra.mxu0 0
        %1402 = vmatprep.subr.bf16.mxu0 0
        %1403 = vmatpush1.bf16.xpose.msra.mxu0 0
        %1404 = vmatprep.subr.bf16.mxu0 0
        %1405 = vmatpush1.bf16.xpose.msra.mxu0 0
        %1406 = vmatprep.subr.bf16.mxu0 0
        %1407 = vmatpush1.bf16.xpose.msra.mxu0 0
        %1408 = vmatprep.subr.bf16.mxu0 0
        %1409 = vmatpush1.bf16.xpose.msra.mxu0 0
        %1410 = vmatprep.subr.bf16.mxu0 0
        %1411 = vmatpush1.bf16.xpose.msra.mxu0 0
        %1412 = vmatprep.subr.bf16.mxu0 0
        %1413 = vmatpush1.bf16.xpose.msra.mxu0 0
        %1414 = vmatprep.subr.bf16.mxu0 0
        %1415 = vmatpush1.bf16.xpose.msra.mxu0 0
        %1416 = vmatprep.subr.bf16.mxu0 0
        %1417 = vmatpush1.bf16.xpose.msra.mxu0 0
        %1418 = vmatprep.mubr.bf16.mxu0 0
        %1419 = vmatmul.mubr.bf16.gmra.mrb[0].mxu0 %v1381
        %v1420 = vpop.f32.mrb[0].mxu0
        %v1421 = vadd.f32 0.0, %v1420
        %v1422 = vpop.f32.mrb[0].mxu0
        %v1423 = vpop.f32.mrb[0].mxu0
        %v1424 = vpop.f32.mrb[0].mxu0
        %1425 = vdwg.mxu0
        %v1426 = vmul.f32 %v1421, 0.35355338
        %v1427 = vsel %vm1156, %v1426, -inf
        %1428 = vmax.xlane.f32.xlu0 %v1427
        %v1429 = vpop.xlane.xlu0 %1428
        %v1430 = vsub.f32 %v1426, %v1429
        %v1431 = vmul.f32 %v1430, 1.442695
        %v1432 = vpow.pop %v1431
        %v1433 = vsel %vm1156, %v1432, 0.0
        %1434 = vadd.xlane.f32.xlu0 %v1433
        %v1435 = vpop.xlane.xlu0 %1434
        %v1436 = vrcp.pop %v1435
        %v1437 = vmul.f32 %v1432, %v1436
        %v1438 = vpack.c.bf16 %v1437, %v1437
        %1439 = vrot.lane.b32.xlu0 %v1152, 48
        %v1440 = vpop.permute.xlu0 %1439
        %v1442 = vsel %vm1156, %v1438, 0
        %v1445 = vsel %vm1221, %v1440, 0
        %1447 = vmatprep.subr.bf16.mxu0 0
        %1448 = vmatpush1.bf16.msra.mxu0 %v1445
        %1449 = vmatprep.subr.bf16.mxu0 0
        %1450 = vmatpush1.bf16.msra.mxu0 0
        %1451 = vmatprep.subr.bf16.mxu0 0
        %1452 = vmatpush1.bf16.msra.mxu0 0
        %1453 = vmatprep.subr.bf16.mxu0 0
        %1454 = vmatpush1.bf16.msra.mxu0 0
        %1455 = vmatprep.subr.bf16.mxu0 0
        %1456 = vmatpush1.bf16.msra.mxu0 0
        %1457 = vmatprep.subr.bf16.mxu0 0
        %1458 = vmatpush1.bf16.msra.mxu0 0
        %1459 = vmatprep.subr.bf16.mxu0 0
        %1460 = vmatpush1.bf16.msra.mxu0 0
        %1461 = vmatprep.subr.bf16.mxu0 0
        %1462 = vmatpush1.bf16.msra.mxu0 0
        %1463 = vmatprep.subr.bf16.mxu0 0
        %1464 = vmatpush1.bf16.msra.mxu0 0
        %1465 = vmatprep.subr.bf16.mxu0 0
        %1466 = vmatpush1.bf16.msra.mxu0 0
        %1467 = vmatprep.subr.bf16.mxu0 0
        %1468 = vmatpush1.bf16.msra.mxu0 0
        %1469 = vmatprep.subr.bf16.mxu0 0
        %1470 = vmatpush1.bf16.msra.mxu0 0
        %1471 = vmatprep.subr.bf16.mxu0 0
        %1472 = vmatpush1.bf16.msra.mxu0 0
        %1473 = vmatprep.subr.bf16.mxu0 0
        %1474 = vmatpush1.bf16.msra.mxu0 0
        %1475 = vmatprep.subr.bf16.mxu0 0
        %1476 = vmatpush1.bf16.msra.mxu0 0
        %1477 = vmatprep.subr.bf16.mxu0 0
        %1478 = vmatpush1.bf16.msra.mxu0 0
        %1479 = vmatprep.mubr.bf16.mxu0 0
        %1480 = vmatmul.mubr.bf16.gmra.mrb[0].mxu0 %v1442
        %v1481 = vpop.f32.mrb[0].mxu0
        %v1482 = vadd.f32 0.0, %v1481
        %v1483 = vpop.f32.mrb[0].mxu0
        %v1484 = vpop.f32.mrb[0].mxu0
        %v1485 = vpop.f32.mrb[0].mxu0
        %1486 = vdwg.mxu0
        %1487 = vrot.lane.b32.xlu0 %v1152, 104
        %v1488 = vpop.permute.xlu0 %1487
        %1489 = vrot.lane.b32.xlu0 %v1152, 72
        %v1490 = vpop.permute.xlu0 %1489
        %v1492 = vsel %vm1156, %v1488, 0
        %v1495 = vsel %vm1156, %v1490, 0
        %1497 = vmatprep.subr.bf16.mxu0 0
        %1498 = vmatpush1.bf16.xpose.msra.mxu0 %v1495
        %1499 = vmatprep.subr.bf16.mxu0 0
        %1500 = vmatpush1.bf16.xpose.msra.mxu0 0
        %1501 = vmatprep.subr.bf16.mxu0 0
        %1502 = vmatpush1.bf16.xpose.msra.mxu0 0
        %1503 = vmatprep.subr.bf16.mxu0 0
        %1504 = vmatpush1.bf16.xpose.msra.mxu0 0
        %1505 = vmatprep.subr.bf16.mxu0 0
        %1506 = vmatpush1.bf16.xpose.msra.mxu0 0
        %1507 = vmatprep.subr.bf16.mxu0 0
        %1508 = vmatpush1.bf16.xpose.msra.mxu0 0
        %1509 = vmatprep.subr.bf16.mxu0 0
        %1510 = vmatpush1.bf16.xpose.msra.mxu0 0
        %1511 = vmatprep.subr.bf16.mxu0 0
        %1512 = vmatpush1.bf16.xpose.msra.mxu0 0
        %1513 = vmatprep.subr.bf16.mxu0 0
        %1514 = vmatpush1.bf16.xpose.msra.mxu0 0
        %1515 = vmatprep.subr.bf16.mxu0 0
        %1516 = vmatpush1.bf16.xpose.msra.mxu0 0
        %1517 = vmatprep.subr.bf16.mxu0 0
        %1518 = vmatpush1.bf16.xpose.msra.mxu0 0
        %1519 = vmatprep.subr.bf16.mxu0 0
        %1520 = vmatpush1.bf16.xpose.msra.mxu0 0
        %1521 = vmatprep.subr.bf16.mxu0 0
        %1522 = vmatpush1.bf16.xpose.msra.mxu0 0
        %1523 = vmatprep.subr.bf16.mxu0 0
        %1524 = vmatpush1.bf16.xpose.msra.mxu0 0
        %1525 = vmatprep.subr.bf16.mxu0 0
        %1526 = vmatpush1.bf16.xpose.msra.mxu0 0
        %1527 = vmatprep.subr.bf16.mxu0 0
        %1528 = vmatpush1.bf16.xpose.msra.mxu0 0
        %1529 = vmatprep.mubr.bf16.mxu0 0
        %1530 = vmatmul.mubr.bf16.gmra.mrb[0].mxu0 %v1492
        %v1531 = vpop.f32.mrb[0].mxu0
        %v1532 = vadd.f32 0.0, %v1531
        %v1533 = vpop.f32.mrb[0].mxu0
        %v1534 = vpop.f32.mrb[0].mxu0
        %v1535 = vpop.f32.mrb[0].mxu0
        %1536 = vdwg.mxu0
        %v1537 = vmul.f32 %v1532, 0.35355338
        %v1538 = vsel %vm1156, %v1537, -inf
        %1539 = vmax.xlane.f32.xlu0 %v1538
        %v1540 = vpop.xlane.xlu0 %1539
        %v1541 = vsub.f32 %v1537, %v1540
        %v1542 = vmul.f32 %v1541, 1.442695
        %v1543 = vpow.pop %v1542
        %v1544 = vsel %vm1156, %v1543, 0.0
        %1545 = vadd.xlane.f32.xlu0 %v1544
        %v1546 = vpop.xlane.xlu0 %1545
        %v1547 = vrcp.pop %v1546
        %v1548 = vmul.f32 %v1543, %v1547
        %v1549 = vpack.c.bf16 %v1548, %v1548
        %1550 = vrot.lane.b32.xlu0 %v1152, 40
        %v1551 = vpop.permute.xlu0 %1550
        %v1553 = vsel %vm1156, %v1549, 0
        %v1556 = vsel %vm1221, %v1551, 0
        %1558 = vmatprep.subr.bf16.mxu0 0
        %1559 = vmatpush1.bf16.msra.mxu0 %v1556
        %1560 = vmatprep.subr.bf16.mxu0 0
        %1561 = vmatpush1.bf16.msra.mxu0 0
        %1562 = vmatprep.subr.bf16.mxu0 0
        %1563 = vmatpush1.bf16.msra.mxu0 0
        %1564 = vmatprep.subr.bf16.mxu0 0
        %1565 = vmatpush1.bf16.msra.mxu0 0
        %1566 = vmatprep.subr.bf16.mxu0 0
        %1567 = vmatpush1.bf16.msra.mxu0 0
        %1568 = vmatprep.subr.bf16.mxu0 0
        %1569 = vmatpush1.bf16.msra.mxu0 0
        %1570 = vmatprep.subr.bf16.mxu0 0
        %1571 = vmatpush1.bf16.msra.mxu0 0
        %1572 = vmatprep.subr.bf16.mxu0 0
        %1573 = vmatpush1.bf16.msra.mxu0 0
        %1574 = vmatprep.subr.bf16.mxu0 0
        %1575 = vmatpush1.bf16.msra.mxu0 0
        %1576 = vmatprep.subr.bf16.mxu0 0
        %1577 = vmatpush1.bf16.msra.mxu0 0
        %1578 = vmatprep.subr.bf16.mxu0 0
        %1579 = vmatpush1.bf16.msra.mxu0 0
        %1580 = vmatprep.subr.bf16.mxu0 0
        %1581 = vmatpush1.bf16.msra.mxu0 0
        %1582 = vmatprep.subr.bf16.mxu0 0
        %1583 = vmatpush1.bf16.msra.mxu0 0
        %1584 = vmatprep.subr.bf16.mxu0 0
        %1585 = vmatpush1.bf16.msra.mxu0 0
        %1586 = vmatprep.subr.bf16.mxu0 0
        %1587 = vmatpush1.bf16.msra.mxu0 0
        %1588 = vmatprep.subr.bf16.mxu0 0
        %1589 = vmatpush1.bf16.msra.mxu0 0
        %1590 = vmatprep.mubr.bf16.mxu0 0
        %1591 = vmatmul.mubr.bf16.gmra.mrb[0].mxu0 %v1553
        %v1592 = vpop.f32.mrb[0].mxu0
        %v1593 = vadd.f32 0.0, %v1592
        %v1594 = vpop.f32.mrb[0].mxu0
        %v1595 = vpop.f32.mrb[0].mxu0
        %v1596 = vpop.f32.mrb[0].mxu0
        %1597 = vdwg.mxu0
        %1599 = vrot.lane.b32.xlu0 %v1371, 8
        %v1600 = vpop.permute.xlu0 %1599
        %1603 = vrot.lane.b32.xlu0 %v1482, 16
        %v1604 = vpop.permute.xlu0 %1603
        %1607 = vrot.lane.b32.xlu0 %v1593, 24
        %v1608 = vpop.permute.xlu0 %1607
        %v1610 = vsel %vm1156, %v1260, %v1600
        %vm1611 = vcmask 130048
        %v1612 = vsel %vm1611, %v1610, %v1604
        %vm1613 = vcmask 195584
        %v1614 = vsel %vm1613, %v1612, %v1608
        %v1615 = vld [vmem:[%s1022] sm:$0xff]
        %v1616 = vld [vmem:[%s1022 + $0x8] sm:$0xff]
        %v1617 = vld [vmem:[%s1022 + $0x10] sm:$0xff]
        %v1618 = vld [vmem:[%s1022 + $0x18] sm:$0xff]
        %v1619 = vpack.c.bf16 %v1614, %v1614
        %v1620 = vpack.c.bf16 %v1616, %v1615
        %v1621 = vpack.c.bf16 %v1618, %v1617
        %v1622 = vld [vmem:[%s1025] sm:$0x1]
        %v1624 = vlaneseq
        %v1625 = vshrl.u32 %v1624, 7
        %v1626 = vsub.s32 0, %v1625
        %v1627 = vrot.slane %v1622, %v1626
        %v1630 = vsel %vm1108, %v1619, 0
        %1632 = vmatprep.subr.bf16.mxu0 0
        %1633 = vmatpush1.bf16.msra.mxu0 %v1620
        %1634 = vmatprep.subr.bf16.mxu0 0
        %1635 = vmatpush1.bf16.msra.mxu0 %v1621
        %1636 = vmatprep.subr.bf16.mxu0 0
        %1637 = vmatpush1.bf16.msra.mxu0 0
        %1638 = vmatprep.subr.bf16.mxu0 0
        %1639 = vmatpush1.bf16.msra.mxu0 0
        %1640 = vmatprep.subr.bf16.mxu0 0
        %1641 = vmatpush1.bf16.msra.mxu0 0
        %1642 = vmatprep.subr.bf16.mxu0 0
        %1643 = vmatpush1.bf16.msra.mxu0 0
        %1644 = vmatprep.subr.bf16.mxu0 0
        %1645 = vmatpush1.bf16.msra.mxu0 0
        %1646 = vmatprep.subr.bf16.mxu0 0
        %1647 = vmatpush1.bf16.msra.mxu0 0
        %1648 = vmatprep.subr.bf16.mxu0 0
        %1649 = vmatpush1.bf16.msra.mxu0 0
        %1650 = vmatprep.subr.bf16.mxu0 0
        %1651 = vmatpush1.bf16.msra.mxu0 0
        %1652 = vmatprep.subr.bf16.mxu0 0
        %1653 = vmatpush1.bf16.msra.mxu0 0
        %1654 = vmatprep.subr.bf16.mxu0 0
        %1655 = vmatpush1.bf16.msra.mxu0 0
        %1656 = vmatprep.subr.bf16.mxu0 0
        %1657 = vmatpush1.bf16.msra.mxu0 0
        %1658 = vmatprep.subr.bf16.mxu0 0
        %1659 = vmatpush1.bf16.msra.mxu0 0
        %1660 = vmatprep.subr.bf16.mxu0 0
        %1661 = vmatpush1.bf16.msra.mxu0 0
        %1662 = vmatprep.subr.bf16.mxu0 0
        %1663 = vmatpush1.bf16.msra.mxu0 0
        %1664 = vmatprep.mubr.bf16.mxu0 0
        %1665 = vmatmul.mubr.bf16.gmra.mrb[0].mxu0 %v1630
        %v1666 = vpop.f32.mrb[0].mxu0
        %v1667 = vadd.f32 %v1627, %v1666
        %v1668 = vpop.f32.mrb[0].mxu0
        %v1669 = vpop.f32.mrb[0].mxu0
        %v1670 = vpop.f32.mrb[0].mxu0
        %1671 = vdwg.mxu0
        %v1672 = vadd.f32 %v1667, %v1092
        %v1673 = vld [vmem:[%s1028] sm:$0x1]
        %v1674 = vld [vmem:[%s1031] sm:$0x1]
        %v1675 = vsel %vm1108, %v1672, 0.0
        %1676 = vadd.xlane.f32.xlu0 %v1675
        %v1677 = vpop.xlane.xlu0 %1676
        %v1678 = vrcp.pop 32.0
        %v1679 = vmul.f32 %v1677, %v1678
        %v1680 = vsub.f32 %v1672, %v1679
        %v1681 = vmul.f32 %v1680, %v1680
        %v1682 = vsel %vm1108, %v1681, 0.0
        %1683 = vadd.xlane.f32.xlu0 %v1682
        %v1684 = vpop.xlane.xlu0 %1683
        %v1685 = vmul.f32 %v1684, %v1678
        %v1686 = vadd.f32 %v1685, 1e-05
        %v1687 = vrsqrt.pop %v1686
        %v1688 = vmul.f32 %v1680, %v1687
        %v1690 = vlaneseq
        %v1691 = vshrl.u32 %v1690, 7
        %v1692 = vsub.s32 0, %v1691
        %v1693 = vrot.slane %v1673, %v1692
        %v1695 = vmul.f32 %v1693, %v1688
        %v1697 = vlaneseq
        %v1698 = vshrl.u32 %v1697, 7
        %v1699 = vsub.s32 0, %v1698
        %v1700 = vrot.slane %v1674, %v1699
        %v1702 = vadd.f32 %v1695, %v1700
        %v1703 = vld [vmem:[%s1036] sm:$0xff]
        %v1704 = vld [vmem:[%s1036 + $0x8] sm:$0xff]
        %v1705 = vld [vmem:[%s1036 + $0x10] sm:$0xff]
        %v1706 = vld [vmem:[%s1036 + $0x18] sm:$0xff]
        %v1707 = vpack.c.bf16 %v1093, %v1093
        %v1708 = vpack.c.bf16 %v1704, %v1703
        %v1709 = vpack.c.bf16 %v1706, %v1705
        %v1710 = vld [vmem:[%s1039] sm:$0x1]
        %v1712 = vlaneseq
        %v1713 = vshrl.u32 %v1712, 7
        %v1714 = vsub.s32 0, %v1713
        %v1715 = vrot.slane %v1710, %v1714
        %v1718 = vsel %vm1108, %v1707, 0
        %1720 = vmatprep.subr.bf16.mxu0 0
        %1721 = vmatpush1.bf16.msra.mxu0 %v1708
        %1722 = vmatprep.subr.bf16.mxu0 0
        %1723 = vmatpush1.bf16.msra.mxu0 %v1709
        %1724 = vmatprep.subr.bf16.mxu0 0
        %1725 = vmatpush1.bf16.msra.mxu0 0
        %1726 = vmatprep.subr.bf16.mxu0 0
        %1727 = vmatpush1.bf16.msra.mxu0 0
        %1728 = vmatprep.subr.bf16.mxu0 0
        %1729 = vmatpush1.bf16.msra.mxu0 0
        %1730 = vmatprep.subr.bf16.mxu0 0
        %1731 = vmatpush1.bf16.msra.mxu0 0
        %1732 = vmatprep.subr.bf16.mxu0 0
        %1733 = vmatpush1.bf16.msra.mxu0 0
        %1734 = vmatprep.subr.bf16.mxu0 0
        %1735 = vmatpush1.bf16.msra.mxu0 0
        %1736 = vmatprep.subr.bf16.mxu0 0
        %1737 = vmatpush1.bf16.msra.mxu0 0
        %1738 = vmatprep.subr.bf16.mxu0 0
        %1739 = vmatpush1.bf16.msra.mxu0 0
        %1740 = vmatprep.subr.bf16.mxu0 0
        %1741 = vmatpush1.bf16.msra.mxu0 0
        %1742 = vmatprep.subr.bf16.mxu0 0
        %1743 = vmatpush1.bf16.msra.mxu0 0
        %1744 = vmatprep.subr.bf16.mxu0 0
        %1745 = vmatpush1.bf16.msra.mxu0 0
        %1746 = vmatprep.subr.bf16.mxu0 0
        %1747 = vmatpush1.bf16.msra.mxu0 0
        %1748 = vmatprep.subr.bf16.mxu0 0
        %1749 = vmatpush1.bf16.msra.mxu0 0
        %1750 = vmatprep.subr.bf16.mxu0 0
        %1751 = vmatpush1.bf16.msra.mxu0 0
        %1752 = vmatprep.mubr.bf16.mxu0 0
        %1753 = vmatmul.mubr.bf16.gmra.mrb[0].mxu0 %v1718
        %v1754 = vpop.f32.mrb[0].mxu0
        %v1755 = vadd.f32 %v1715, %v1754
        %v1756 = vpop.f32.mrb[0].mxu0
        %v1757 = vpop.f32.mrb[0].mxu0
        %v1758 = vpop.f32.mrb[0].mxu0
        %1759 = vdwg.mxu0
        %v1760 = vld [vmem:[%s1044] sm:$0xff]
        %v1761 = vld [vmem:[%s1044 + $0x8] sm:$0xff]
        %v1762 = vld [vmem:[%s1044 + $0x10] sm:$0xff]
        %v1763 = vld [vmem:[%s1044 + $0x18] sm:$0xff]
        %v1764 = vpack.c.bf16 %v1702, %v1702
        %v1765 = vpack.c.bf16 %v1761, %v1760
        %v1766 = vpack.c.bf16 %v1763, %v1762
        %v1767 = vld [vmem:[%s1047] sm:$0x1]
        %v1769 = vlaneseq
        %v1770 = vshrl.u32 %v1769, 7
        %v1771 = vsub.s32 0, %v1770
        %v1772 = vrot.slane %v1767, %v1771
        %v1775 = vsel %vm1108, %v1764, 0
        %1777 = vmatprep.subr.bf16.mxu0 0
        %1778 = vmatpush1.bf16.msra.mxu0 %v1765
        %1779 = vmatprep.subr.bf16.mxu0 0
        %1780 = vmatpush1.bf16.msra.mxu0 %v1766
        %1781 = vmatprep.subr.bf16.mxu0 0
        %1782 = vmatpush1.bf16.msra.mxu0 0
        %1783 = vmatprep.subr.bf16.mxu0 0
        %1784 = vmatpush1.bf16.msra.mxu0 0
        %1785 = vmatprep.subr.bf16.mxu0 0
        %1786 = vmatpush1.bf16.msra.mxu0 0
        %1787 = vmatprep.subr.bf16.mxu0 0
        %1788 = vmatpush1.bf16.msra.mxu0 0
        %1789 = vmatprep.subr.bf16.mxu0 0
        %1790 = vmatpush1.bf16.msra.mxu0 0
        %1791 = vmatprep.subr.bf16.mxu0 0
        %1792 = vmatpush1.bf16.msra.mxu0 0
        %1793 = vmatprep.subr.bf16.mxu0 0
        %1794 = vmatpush1.bf16.msra.mxu0 0
        %1795 = vmatprep.subr.bf16.mxu0 0
        %1796 = vmatpush1.bf16.msra.mxu0 0
        %1797 = vmatprep.subr.bf16.mxu0 0
        %1798 = vmatpush1.bf16.msra.mxu0 0
        %1799 = vmatprep.subr.bf16.mxu0 0
        %1800 = vmatpush1.bf16.msra.mxu0 0
        %1801 = vmatprep.subr.bf16.mxu0 0
        %1802 = vmatpush1.bf16.msra.mxu0 0
        %1803 = vmatprep.subr.bf16.mxu0 0
        %1804 = vmatpush1.bf16.msra.mxu0 0
        %1805 = vmatprep.subr.bf16.mxu0 0
        %1806 = vmatpush1.bf16.msra.mxu0 0
        %1807 = vmatprep.subr.bf16.mxu0 0
        %1808 = vmatpush1.bf16.msra.mxu0 0
        %1809 = vmatprep.mubr.bf16.mxu0 0
        %1810 = vmatmul.mubr.bf16.gmra.mrb[0].mxu0 %v1775
        %v1811 = vpop.f32.mrb[0].mxu0
        %v1812 = vadd.f32 %v1772, %v1811
        %v1813 = vpop.f32.mrb[0].mxu0
        %v1814 = vpop.f32.mrb[0].mxu0
        %v1815 = vpop.f32.mrb[0].mxu0
        %1816 = vdwg.mxu0
        %v1817 = vpack.c.bf16 %v1812, %v1812
        %v1818 = vpack.c.bf16 %v1755, %v1755
        %v1820 = vsel %vm1156, %v1817, 0
        %v1823 = vsel %vm1156, %v1818, 0
        %1825 = vmatprep.subr.bf16.mxu0 0
        %1826 = vmatpush1.bf16.xpose.msra.mxu0 %v1823
        %1827 = vmatprep.subr.bf16.mxu0 0
        %1828 = vmatpush1.bf16.xpose.msra.mxu0 0
        %1829 = vmatprep.subr.bf16.mxu0 0
        %1830 = vmatpush1.bf16.xpose.msra.mxu0 0
        %1831 = vmatprep.subr.bf16.mxu0 0
        %1832 = vmatpush1.bf16.xpose.msra.mxu0 0
        %1833 = vmatprep.subr.bf16.mxu0 0
        %1834 = vmatpush1.bf16.xpose.msra.mxu0 0
        %1835 = vmatprep.subr.bf16.mxu0 0
        %1836 = vmatpush1.bf16.xpose.msra.mxu0 0
        %1837 = vmatprep.subr.bf16.mxu0 0
        %1838 = vmatpush1.bf16.xpose.msra.mxu0 0
        %1839 = vmatprep.subr.bf16.mxu0 0
        %1840 = vmatpush1.bf16.xpose.msra.mxu0 0
        %1841 = vmatprep.subr.bf16.mxu0 0
        %1842 = vmatpush1.bf16.xpose.msra.mxu0 0
        %1843 = vmatprep.subr.bf16.mxu0 0
        %1844 = vmatpush1.bf16.xpose.msra.mxu0 0
        %1845 = vmatprep.subr.bf16.mxu0 0
        %1846 = vmatpush1.bf16.xpose.msra.mxu0 0
        %1847 = vmatprep.subr.bf16.mxu0 0
        %1848 = vmatpush1.bf16.xpose.msra.mxu0 0
        %1849 = vmatprep.subr.bf16.mxu0 0
        %1850 = vmatpush1.bf16.xpose.msra.mxu0 0
        %1851 = vmatprep.subr.bf16.mxu0 0
        %1852 = vmatpush1.bf16.xpose.msra.mxu0 0
        %1853 = vmatprep.subr.bf16.mxu0 0
        %1854 = vmatpush1.bf16.xpose.msra.mxu0 0
        %1855 = vmatprep.subr.bf16.mxu0 0
        %1856 = vmatpush1.bf16.xpose.msra.mxu0 0
        %1857 = vmatprep.mubr.bf16.mxu0 0
        %1858 = vmatmul.mubr.bf16.gmra.mrb[0].mxu0 %v1820
        %v1859 = vpop.f32.mrb[0].mxu0
        %v1860 = vadd.f32 0.0, %v1859
        %v1861 = vpop.f32.mrb[0].mxu0
        %v1862 = vpop.f32.mrb[0].mxu0
        %v1863 = vpop.f32.mrb[0].mxu0
        %1864 = vdwg.mxu0
        %v1865 = vmul.f32 %v1860, 0.35355338
        %v1866 = vsel %vm1156, %v1865, -inf
        %1867 = vmax.xlane.f32.xlu0 %v1866
        %v1868 = vpop.xlane.xlu0 %1867
        %v1869 = vsub.f32 %v1865, %v1868
        %v1870 = vmul.f32 %v1869, 1.442695
        %v1871 = vpow.pop %v1870
        %v1872 = vsel %vm1156, %v1871, 0.0
        %1873 = vadd.xlane.f32.xlu0 %v1872
        %v1874 = vpop.xlane.xlu0 %1873
        %v1875 = vrcp.pop %v1874
        %v1876 = vmul.f32 %v1871, %v1875
        %v1877 = vpack.c.bf16 %v1876, %v1876
        %1879 = vrot.lane.b32.xlu0 %v1818, 96
        %v1880 = vpop.permute.xlu0 %1879
        %v1882 = vsel %vm1156, %v1877, 0
        %v1885 = vsel %vm1221, %v1880, 0
        %1887 = vmatprep.subr.bf16.mxu0 0
        %1888 = vmatpush1.bf16.msra.mxu0 %v1885
        %1889 = vmatprep.subr.bf16.mxu0 0
        %1890 = vmatpush1.bf16.msra.mxu0 0
        %1891 = vmatprep.subr.bf16.mxu0 0
        %1892 = vmatpush1.bf16.msra.mxu0 0
        %1893 = vmatprep.subr.bf16.mxu0 0
        %1894 = vmatpush1.bf16.msra.mxu0 0
        %1895 = vmatprep.subr.bf16.mxu0 0
        %1896 = vmatpush1.bf16.msra.mxu0 0
        %1897 = vmatprep.subr.bf16.mxu0 0
        %1898 = vmatpush1.bf16.msra.mxu0 0
        %1899 = vmatprep.subr.bf16.mxu0 0
        %1900 = vmatpush1.bf16.msra.mxu0 0
        %1901 = vmatprep.subr.bf16.mxu0 0
        %1902 = vmatpush1.bf16.msra.mxu0 0
        %1903 = vmatprep.subr.bf16.mxu0 0
        %1904 = vmatpush1.bf16.msra.mxu0 0
        %1905 = vmatprep.subr.bf16.mxu0 0
        %1906 = vmatpush1.bf16.msra.mxu0 0
        %1907 = vmatprep.subr.bf16.mxu0 0
        %1908 = vmatpush1.bf16.msra.mxu0 0
        %1909 = vmatprep.subr.bf16.mxu0 0
        %1910 = vmatpush1.bf16.msra.mxu0 0
        %1911 = vmatprep.subr.bf16.mxu0 0
        %1912 = vmatpush1.bf16.msra.mxu0 0
        %1913 = vmatprep.subr.bf16.mxu0 0
        %1914 = vmatpush1.bf16.msra.mxu0 0
        %1915 = vmatprep.subr.bf16.mxu0 0
        %1916 = vmatpush1.bf16.msra.mxu0 0
        %1917 = vmatprep.subr.bf16.mxu0 0
        %1918 = vmatpush1.bf16.msra.mxu0 0
        %1919 = vmatprep.mubr.bf16.mxu0 0
        %1920 = vmatmul.mubr.bf16.gmra.mrb[0].mxu0 %v1882
        %v1921 = vpop.f32.mrb[0].mxu0
        %v1922 = vadd.f32 0.0, %v1921
        %v1923 = vpop.f32.mrb[0].mxu0
        %v1924 = vpop.f32.mrb[0].mxu0
        %v1925 = vpop.f32.mrb[0].mxu0
        %1926 = vdwg.mxu0
        %1928 = vrot.lane.b32.xlu0 %v1817, 120
        %v1929 = vpop.permute.xlu0 %1928
        %1930 = vrot.lane.b32.xlu0 %v1818, 120
        %v1931 = vpop.permute.xlu0 %1930
        %v1933 = vsel %vm1156, %v1929, 0
        %v1936 = vsel %vm1156, %v1931, 0
        %1938 = vmatprep.subr.bf16.mxu0 0
        %1939 = vmatpush1.bf16.xpose.msra.mxu0 %v1936
        %1940 = vmatprep.subr.bf16.mxu0 0
        %1941 = vmatpush1.bf16.xpose.msra.mxu0 0
        %1942 = vmatprep.subr.bf16.mxu0 0
        %1943 = vmatpush1.bf16.xpose.msra.mxu0 0
        %1944 = vmatprep.subr.bf16.mxu0 0
        %1945 = vmatpush1.bf16.xpose.msra.mxu0 0
        %1946 = vmatprep.subr.bf16.mxu0 0
        %1947 = vmatpush1.bf16.xpose.msra.mxu0 0
        %1948 = vmatprep.subr.bf16.mxu0 0
        %1949 = vmatpush1.bf16.xpose.msra.mxu0 0
        %1950 = vmatprep.subr.bf16.mxu0 0
        %1951 = vmatpush1.bf16.xpose.msra.mxu0 0
        %1952 = vmatprep.subr.bf16.mxu0 0
        %1953 = vmatpush1.bf16.xpose.msra.mxu0 0
        %1954 = vmatprep.subr.bf16.mxu0 0
        %1955 = vmatpush1.bf16.xpose.msra.mxu0 0
        %1956 = vmatprep.subr.bf16.mxu0 0
        %1957 = vmatpush1.bf16.xpose.msra.mxu0 0
        %1958 = vmatprep.subr.bf16.mxu0 0
        %1959 = vmatpush1.bf16.xpose.msra.mxu0 0
        %1960 = vmatprep.subr.bf16.mxu0 0
        %1961 = vmatpush1.bf16.xpose.msra.mxu0 0
        %1962 = vmatprep.subr.bf16.mxu0 0
        %1963 = vmatpush1.bf16.xpose.msra.mxu0 0
        %1964 = vmatprep.subr.bf16.mxu0 0
        %1965 = vmatpush1.bf16.xpose.msra.mxu0 0
        %1966 = vmatprep.subr.bf16.mxu0 0
        %1967 = vmatpush1.bf16.xpose.msra.mxu0 0
        %1968 = vmatprep.subr.bf16.mxu0 0
        %1969 = vmatpush1.bf16.xpose.msra.mxu0 0
        %1970 = vmatprep.mubr.bf16.mxu0 0
        %1971 = vmatmul.mubr.bf16.gmra.mrb[0].mxu0 %v1933
        %v1972 = vpop.f32.mrb[0].mxu0
        %v1973 = vadd.f32 0.0, %v1972
        %v1974 = vpop.f32.mrb[0].mxu0
        %v1975 = vpop.f32.mrb[0].mxu0
        %v1976 = vpop.f32.mrb[0].mxu0
        %1977 = vdwg.mxu0
        %v1978 = vmul.f32 %v1973, 0.35355338
        %v1979 = vsel %vm1156, %v1978, -inf
        %1980 = vmax.xlane.f32.xlu0 %v1979
        %v1981 = vpop.xlane.xlu0 %1980
        %v1982 = vsub.f32 %v1978, %v1981
        %v1983 = vmul.f32 %v1982, 1.442695
        %v1984 = vpow.pop %v1983
        %v1985 = vsel %vm1156, %v1984, 0.0
        %1986 = vadd.xlane.f32.xlu0 %v1985
        %v1987 = vpop.xlane.xlu0 %1986
        %v1988 = vrcp.pop %v1987
        %v1989 = vmul.f32 %v1984, %v1988
        %v1990 = vpack.c.bf16 %v1989, %v1989
        %1991 = vrot.lane.b32.xlu0 %v1818, 88
        %v1992 = vpop.permute.xlu0 %1991
        %v1994 = vsel %vm1156, %v1990, 0
        %v1997 = vsel %vm1221, %v1992, 0
        %1999 = vmatprep.subr.bf16.mxu0 0
        %2000 = vmatpush1.bf16.msra.mxu0 %v1997
        %2001 = vmatprep.subr.bf16.mxu0 0
        %2002 = vmatpush1.bf16.msra.mxu0 0
        %2003 = vmatprep.subr.bf16.mxu0 0
        %2004 = vmatpush1.bf16.msra.mxu0 0
        %2005 = vmatprep.subr.bf16.mxu0 0
        %2006 = vmatpush1.bf16.msra.mxu0 0
        %2007 = vmatprep.subr.bf16.mxu0 0
        %2008 = vmatpush1.bf16.msra.mxu0 0
        %2009 = vmatprep.subr.bf16.mxu0 0
        %2010 = vmatpush1.bf16.msra.mxu0 0
        %2011 = vmatprep.subr.bf16.mxu0 0
        %2012 = vmatpush1.bf16.msra.mxu0 0
        %2013 = vmatprep.subr.bf16.mxu0 0
        %2014 = vmatpush1.bf16.msra.mxu0 0
        %2015 = vmatprep.subr.bf16.mxu0 0
        %2016 = vmatpush1.bf16.msra.mxu0 0
        %2017 = vmatprep.subr.bf16.mxu0 0
        %2018 = vmatpush1.bf16.msra.mxu0 0
        %2019 = vmatprep.subr.bf16.mxu0 0
        %2020 = vmatpush1.bf16.msra.mxu0 0
        %2021 = vmatprep.subr.bf16.mxu0 0
        %2022 = vmatpush1.bf16.msra.mxu0 0
        %2023 = vmatprep.subr.bf16.mxu0 0
        %2024 = vmatpush1.bf16.msra.mxu0 0
        %2025 = vmatprep.subr.bf16.mxu0 0
        %2026 = vmatpush1.bf16.msra.mxu0 0
        %2027 = vmatprep.subr.bf16.mxu0 0
        %2028 = vmatpush1.bf16.msra.mxu0 0
        %2029 = vmatprep.subr.bf16.mxu0 0
        %2030 = vmatpush1.bf16.msra.mxu0 0
        %2031 = vmatprep.mubr.bf16.mxu0 0
        %2032 = vmatmul.mubr.bf16.gmra.mrb[0].mxu0 %v1994
        %v2033 = vpop.f32.mrb[0].mxu0
        %v2034 = vadd.f32 0.0, %v2033
        %v2035 = vpop.f32.mrb[0].mxu0
        %v2036 = vpop.f32.mrb[0].mxu0
        %v2037 = vpop.f32.mrb[0].mxu0
        %2038 = vdwg.mxu0
        %2039 = vrot.lane.b32.xlu0 %v1817, 112
        %v2040 = vpop.permute.xlu0 %2039
        %2041 = vrot.lane.b32.xlu0 %v1818, 112
        %v2042 = vpop.permute.xlu0 %2041
        %v2044 = vsel %vm1156, %v2040, 0
        %v2047 = vsel %vm1156, %v2042, 0
        %2049 = vmatprep.subr.bf16.mxu0 0
        %2050 = vmatpush1.bf16.xpose.msra.mxu0 %v2047
        %2051 = vmatprep.subr.bf16.mxu0 0
        %2052 = vmatpush1.bf16.xpose.msra.mxu0 0
        %2053 = vmatprep.subr.bf16.mxu0 0
        %2054 = vmatpush1.bf16.xpose.msra.mxu0 0
        %2055 = vmatprep.subr.bf16.mxu0 0
        %2056 = vmatpush1.bf16.xpose.msra.mxu0 0
        %2057 = vmatprep.subr.bf16.mxu0 0
        %2058 = vmatpush1.bf16.xpose.msra.mxu0 0
        %2059 = vmatprep.subr.bf16.mxu0 0
        %2060 = vmatpush1.bf16.xpose.msra.mxu0 0
        %2061 = vmatprep.subr.bf16.mxu0 0
        %2062 = vmatpush1.bf16.xpose.msra.mxu0 0
        %2063 = vmatprep.subr.bf16.mxu0 0
        %2064 = vmatpush1.bf16.xpose.msra.mxu0 0
        %2065 = vmatprep.subr.bf16.mxu0 0
        %2066 = vmatpush1.bf16.xpose.msra.mxu0 0
        %2067 = vmatprep.subr.bf16.mxu0 0
        %2068 = vmatpush1.bf16.xpose.msra.mxu0 0
        %2069 = vmatprep.subr.bf16.mxu0 0
        %2070 = vmatpush1.bf16.xpose.msra.mxu0 0
        %2071 = vmatprep.subr.bf16.mxu0 0
        %2072 = vmatpush1.bf16.xpose.msra.mxu0 0
        %2073 = vmatprep.subr.bf16.mxu0 0
        %2074 = vmatpush1.bf16.xpose.msra.mxu0 0
        %2075 = vmatprep.subr.bf16.mxu0 0
        %2076 = vmatpush1.bf16.xpose.msra.mxu0 0
        %2077 = vmatprep.subr.bf16.mxu0 0
        %2078 = vmatpush1.bf16.xpose.msra.mxu0 0
        %2079 = vmatprep.subr.bf16.mxu0 0
        %2080 = vmatpush1.bf16.xpose.msra.mxu0 0
        %2081 = vmatprep.mubr.bf16.mxu0 0
        %2082 = vmatmul.mubr.bf16.gmra.mrb[0].mxu0 %v2044
        %v2083 = vpop.f32.mrb[0].mxu0
        %v2084 = vadd.f32 0.0, %v2083
        %v2085 = vpop.f32.mrb[0].mxu0
        %v2086 = vpop.f32.mrb[0].mxu0
        %v2087 = vpop.f32.mrb[0].mxu0
        %2088 = vdwg.mxu0
        %v2089 = vmul.f32 %v2084, 0.35355338
        %v2090 = vsel %vm1156, %v2089, -inf
        %2091 = vmax.xlane.f32.xlu0 %v2090
        %v2092 = vpop.xlane.xlu0 %2091
        %v2093 = vsub.f32 %v2089, %v2092
        %v2094 = vmul.f32 %v2093, 1.442695
        %v2095 = vpow.pop %v2094
        %v2096 = vsel %vm1156, %v2095, 0.0
        %2097 = vadd.xlane.f32.xlu0 %v2096
        %v2098 = vpop.xlane.xlu0 %2097
        %v2099 = vrcp.pop %v2098
        %v2100 = vmul.f32 %v2095, %v2099
        %v2101 = vpack.c.bf16 %v2100, %v2100
        %2102 = vrot.lane.b32.xlu0 %v1818, 80
        %v2103 = vpop.permute.xlu0 %2102
        %v2105 = vsel %vm1156, %v2101, 0
        %v2108 = vsel %vm1221, %v2103, 0
        %2110 = vmatprep.subr.bf16.mxu0 0
        %2111 = vmatpush1.bf16.msra.mxu0 %v2108
        %2112 = vmatprep.subr.bf16.mxu0 0
        %2113 = vmatpush1.bf16.msra.mxu0 0
        %2114 = vmatprep.subr.bf16.mxu0 0
        %2115 = vmatpush1.bf16.msra.mxu0 0
        %2116 = vmatprep.subr.bf16.mxu0 0
        %2117 = vmatpush1.bf16.msra.mxu0 0
        %2118 = vmatprep.subr.bf16.mxu0 0
        %2119 = vmatpush1.bf16.msra.mxu0 0
        %2120 = vmatprep.subr.bf16.mxu0 0
        %2121 = vmatpush1.bf16.msra.mxu0 0
        %2122 = vmatprep.subr.bf16.mxu0 0
        %2123 = vmatpush1.bf16.msra.mxu0 0
        %2124 = vmatprep.subr.bf16.mxu0 0
        %2125 = vmatpush1.bf16.msra.mxu0 0
        %2126 = vmatprep.subr.bf16.mxu0 0
        %2127 = vmatpush1.bf16.msra.mxu0 0
        %2128 = vmatprep.subr.bf16.mxu0 0
        %2129 = vmatpush1.bf16.msra.mxu0 0
        %2130 = vmatprep.subr.bf16.mxu0 0
        %2131 = vmatpush1.bf16.msra.mxu0 0
        %2132 = vmatprep.subr.bf16.mxu0 0
        %2133 = vmatpush1.bf16.msra.mxu0 0
        %2134 = vmatprep.subr.bf16.mxu0 0
        %2135 = vmatpush1.bf16.msra.mxu0 0
        %2136 = vmatprep.subr.bf16.mxu0 0
        %2137 = vmatpush1.bf16.msra.mxu0 0
        %2138 = vmatprep.subr.bf16.mxu0 0
        %2139 = vmatpush1.bf16.msra.mxu0 0
        %2140 = vmatprep.subr.bf16.mxu0 0
        %2141 = vmatpush1.bf16.msra.mxu0 0
        %2142 = vmatprep.mubr.bf16.mxu0 0
        %2143 = vmatmul.mubr.bf16.gmra.mrb[0].mxu0 %v2105
        %v2144 = vpop.f32.mrb[0].mxu0
        %v2145 = vadd.f32 0.0, %v2144
        %v2146 = vpop.f32.mrb[0].mxu0
        %v2147 = vpop.f32.mrb[0].mxu0
        %v2148 = vpop.f32.mrb[0].mxu0
        %2149 = vdwg.mxu0
        %2150 = vrot.lane.b32.xlu0 %v1817, 104
        %v2151 = vpop.permute.xlu0 %2150
        %2152 = vrot.lane.b32.xlu0 %v1818, 104
        %v2153 = vpop.permute.xlu0 %2152
        %v2155 = vsel %vm1156, %v2151, 0
        %v2158 = vsel %vm1156, %v2153, 0
        %2160 = vmatprep.subr.bf16.mxu0 0
        %2161 = vmatpush1.bf16.xpose.msra.mxu0 %v2158
        %2162 = vmatprep.subr.bf16.mxu0 0
        %2163 = vmatpush1.bf16.xpose.msra.mxu0 0
        %2164 = vmatprep.subr.bf16.mxu0 0
        %2165 = vmatpush1.bf16.xpose.msra.mxu0 0
        %2166 = vmatprep.subr.bf16.mxu0 0
        %2167 = vmatpush1.bf16.xpose.msra.mxu0 0
        %2168 = vmatprep.subr.bf16.mxu0 0
        %2169 = vmatpush1.bf16.xpose.msra.mxu0 0
        %2170 = vmatprep.subr.bf16.mxu0 0
        %2171 = vmatpush1.bf16.xpose.msra.mxu0 0
        %2172 = vmatprep.subr.bf16.mxu0 0
        %2173 = vmatpush1.bf16.xpose.msra.mxu0 0
        %2174 = vmatprep.subr.bf16.mxu0 0
        %2175 = vmatpush1.bf16.xpose.msra.mxu0 0
        %2176 = vmatprep.subr.bf16.mxu0 0
        %2177 = vmatpush1.bf16.xpose.msra.mxu0 0
        %2178 = vmatprep.subr.bf16.mxu0 0
        %2179 = vmatpush1.bf16.xpose.msra.mxu0 0
        %2180 = vmatprep.subr.bf16.mxu0 0
        %2181 = vmatpush1.bf16.xpose.msra.mxu0 0
        %2182 = vmatprep.subr.bf16.mxu0 0
        %2183 = vmatpush1.bf16.xpose.msra.mxu0 0
        %2184 = vmatprep.subr.bf16.mxu0 0
        %2185 = vmatpush1.bf16.xpose.msra.mxu0 0
        %2186 = vmatprep.subr.bf16.mxu0 0
        %2187 = vmatpush1.bf16.xpose.msra.mxu0 0
        %2188 = vmatprep.subr.bf16.mxu0 0
        %2189 = vmatpush1.bf16.xpose.msra.mxu0 0
        %2190 = vmatprep.subr.bf16.mxu0 0
        %2191 = vmatpush1.bf16.xpose.msra.mxu0 0
        %2192 = vmatprep.mubr.bf16.mxu0 0
        %2193 = vmatmul.mubr.bf16.gmra.mrb[0].mxu0 %v2155
        %v2194 = vpop.f32.mrb[0].mxu0
        %v2195 = vadd.f32 0.0, %v2194
        %v2196 = vpop.f32.mrb[0].mxu0
        %v2197 = vpop.f32.mrb[0].mxu0
        %v2198 = vpop.f32.mrb[0].mxu0
        %2199 = vdwg.mxu0
        %v2200 = vmul.f32 %v2195, 0.35355338
        %v2201 = vsel %vm1156, %v2200, -inf
        %2202 = vmax.xlane.f32.xlu0 %v2201
        %v2203 = vpop.xlane.xlu0 %2202
        %v2204 = vsub.f32 %v2200, %v2203
        %v2205 = vmul.f32 %v2204, 1.442695
        %v2206 = vpow.pop %v2205
        %v2207 = vsel %vm1156, %v2206, 0.0
        %2208 = vadd.xlane.f32.xlu0 %v2207
        %v2209 = vpop.xlane.xlu0 %2208
        %v2210 = vrcp.pop %v2209
        %v2211 = vmul.f32 %v2206, %v2210
        %v2212 = vpack.c.bf16 %v2211, %v2211
        %2213 = vrot.lane.b32.xlu0 %v1818, 72
        %v2214 = vpop.permute.xlu0 %2213
        %v2216 = vsel %vm1156, %v2212, 0
        %v2219 = vsel %vm1221, %v2214, 0
        %2221 = vmatprep.subr.bf16.mxu0 0
        %2222 = vmatpush1.bf16.msra.mxu0 %v2219
        %2223 = vmatprep.subr.bf16.mxu0 0
        %2224 = vmatpush1.bf16.msra.mxu0 0
        %2225 = vmatprep.subr.bf16.mxu0 0
        %2226 = vmatpush1.bf16.msra.mxu0 0
        %2227 = vmatprep.subr.bf16.mxu0 0
        %2228 = vmatpush1.bf16.msra.mxu0 0
        %2229 = vmatprep.subr.bf16.mxu0 0
        %2230 = vmatpush1.bf16.msra.mxu0 0
        %2231 = vmatprep.subr.bf16.mxu0 0
        %2232 = vmatpush1.bf16.msra.mxu0 0
        %2233 = vmatprep.subr.bf16.mxu0 0
        %2234 = vmatpush1.bf16.msra.mxu0 0
        %2235 = vmatprep.subr.bf16.mxu0 0
        %2236 = vmatpush1.bf16.msra.mxu0 0
        %2237 = vmatprep.subr.bf16.mxu0 0
        %2238 = vmatpush1.bf16.msra.mxu0 0
        %2239 = vmatprep.subr.bf16.mxu0 0
        %2240 = vmatpush1.bf16.msra.mxu0 0
        %2241 = vmatprep.subr.bf16.mxu0 0
        %2242 = vmatpush1.bf16.msra.mxu0 0
        %2243 = vmatprep.subr.bf16.mxu0 0
        %2244 = vmatpush1.bf16.msra.mxu0 0
        %2245 = vmatprep.subr.bf16.mxu0 0
        %2246 = vmatpush1.bf16.msra.mxu0 0
        %2247 = vmatprep.subr.bf16.mxu0 0
        %2248 = vmatpush1.bf16.msra.mxu0 0
        %2249 = vmatprep.subr.bf16.mxu0 0
        %2250 = vmatpush1.bf16.msra.mxu0 0
        %2251 = vmatprep.subr.bf16.mxu0 0
        %2252 = vmatpush1.bf16.msra.mxu0 0
        %2253 = vmatprep.mubr.bf16.mxu0 0
        %2254 = vmatmul.mubr.bf16.gmra.mrb[0].mxu0 %v2216
        %v2255 = vpop.f32.mrb[0].mxu0
        %v2256 = vadd.f32 0.0, %v2255
        %v2257 = vpop.f32.mrb[0].mxu0
        %v2258 = vpop.f32.mrb[0].mxu0
        %v2259 = vpop.f32.mrb[0].mxu0
        %2260 = vdwg.mxu0
        %2262 = vrot.lane.b32.xlu0 %v2034, 8
        %v2263 = vpop.permute.xlu0 %2262
        %2266 = vrot.lane.b32.xlu0 %v2145, 16
        %v2267 = vpop.permute.xlu0 %2266
        %2270 = vrot.lane.b32.xlu0 %v2256, 24
        %v2271 = vpop.permute.xlu0 %2270
        %v2273 = vsel %vm1156, %v1922, %v2263
        %v2274 = vsel %vm1611, %v2273, %v2267
        %v2275 = vsel %vm1613, %v2274, %v2271
        %v2276 = vld [vmem:[%s1052] sm:$0xff]
        %v2277 = vld [vmem:[%s1052 + $0x8] sm:$0xff]
        %v2278 = vld [vmem:[%s1052 + $0x10] sm:$0xff]
        %v2279 = vld [vmem:[%s1052 + $0x18] sm:$0xff]
        %v2280 = vpack.c.bf16 %v2275, %v2275
        %v2281 = vpack.c.bf16 %v2277, %v2276
        %v2282 = vpack.c.bf16 %v2279, %v2278
        %v2283 = vld [vmem:[%s1055] sm:$0x1]
        %v2285 = vlaneseq
        %v2286 = vshrl.u32 %v2285, 7
        %v2287 = vsub.s32 0, %v2286
        %v2288 = vrot.slane %v2283, %v2287
        %v2291 = vsel %vm1108, %v2280, 0
        %2293 = vmatprep.subr.bf16.mxu0 0
        %2294 = vmatpush1.bf16.msra.mxu0 %v2281
        %2295 = vmatprep.subr.bf16.mxu0 0
        %2296 = vmatpush1.bf16.msra.mxu0 %v2282
        %2297 = vmatprep.subr.bf16.mxu0 0
        %2298 = vmatpush1.bf16.msra.mxu0 0
        %2299 = vmatprep.subr.bf16.mxu0 0
        %2300 = vmatpush1.bf16.msra.mxu0 0
        %2301 = vmatprep.subr.bf16.mxu0 0
        %2302 = vmatpush1.bf16.msra.mxu0 0
        %2303 = vmatprep.subr.bf16.mxu0 0
        %2304 = vmatpush1.bf16.msra.mxu0 0
        %2305 = vmatprep.subr.bf16.mxu0 0
        %2306 = vmatpush1.bf16.msra.mxu0 0
        %2307 = vmatprep.subr.bf16.mxu0 0
        %2308 = vmatpush1.bf16.msra.mxu0 0
        %2309 = vmatprep.subr.bf16.mxu0 0
        %2310 = vmatpush1.bf16.msra.mxu0 0
        %2311 = vmatprep.subr.bf16.mxu0 0
        %2312 = vmatpush1.bf16.msra.mxu0 0
        %2313 = vmatprep.subr.bf16.mxu0 0
        %2314 = vmatpush1.bf16.msra.mxu0 0
        %2315 = vmatprep.subr.bf16.mxu0 0
        %2316 = vmatpush1.bf16.msra.mxu0 0
        %2317 = vmatprep.subr.bf16.mxu0 0
        %2318 = vmatpush1.bf16.msra.mxu0 0
        %2319 = vmatprep.subr.bf16.mxu0 0
        %2320 = vmatpush1.bf16.msra.mxu0 0
        %2321 = vmatprep.subr.bf16.mxu0 0
        %2322 = vmatpush1.bf16.msra.mxu0 0
        %2323 = vmatprep.subr.bf16.mxu0 0
        %2324 = vmatpush1.bf16.msra.mxu0 0
        %2325 = vmatprep.mubr.bf16.mxu0 0
        %2326 = vmatmul.mubr.bf16.gmra.mrb[0].mxu0 %v2291
        %v2327 = vpop.f32.mrb[0].mxu0
        %v2328 = vadd.f32 %v2288, %v2327
        %v2329 = vpop.f32.mrb[0].mxu0
        %v2330 = vpop.f32.mrb[0].mxu0
        %v2331 = vpop.f32.mrb[0].mxu0
        %2332 = vdwg.mxu0
        %v2333 = vadd.f32 %v2328, %v1702
        %v2334 = vld [vmem:[%s1058] sm:$0x1]
        %v2335 = vld [vmem:[%s1061] sm:$0x1]
        %v2336 = vsel %vm1108, %v2333, 0.0
        %2337 = vadd.xlane.f32.xlu0 %v2336
        %v2338 = vpop.xlane.xlu0 %2337
        %v2339 = vmul.f32 %v2338, %v1678
        %v2340 = vsub.f32 %v2333, %v2339
        %v2341 = vmul.f32 %v2340, %v2340
        %v2342 = vsel %vm1108, %v2341, 0.0
        %2343 = vadd.xlane.f32.xlu0 %v2342
        %v2344 = vpop.xlane.xlu0 %2343
        %v2345 = vmul.f32 %v2344, %v1678
        %v2346 = vadd.f32 %v2345, 1e-05
        %v2347 = vrsqrt.pop %v2346
        %v2348 = vmul.f32 %v2340, %v2347
        %v2350 = vlaneseq
        %v2351 = vshrl.u32 %v2350, 7
        %v2352 = vsub.s32 0, %v2351
        %v2353 = vrot.slane %v2334, %v2352
        %v2355 = vmul.f32 %v2353, %v2348
        %v2357 = vlaneseq
        %v2358 = vshrl.u32 %v2357, 7
        %v2359 = vsub.s32 0, %v2358
        %v2360 = vrot.slane %v2335, %v2359
        %v2362 = vadd.f32 %v2355, %v2360
        %v2363 = vld [vmem:[%s1066] sm:$0xff]
        %v2364 = vld [vmem:[%s1066 + $0x8] sm:$0xff]
        %v2365 = vld [vmem:[%s1066 + $0x10] sm:$0xff]
        %v2366 = vld [vmem:[%s1066 + $0x18] sm:$0xff]
        %v2367 = vpack.c.bf16 %v2362, %v2362
        %v2368 = vpack.c.bf16 %v2364, %v2363
        %v2369 = vpack.c.bf16 %v2366, %v2365
        %v2370 = vld [vmem:[%s1069] sm:$0x1]
        %v2372 = vlaneseq
        %v2373 = vshrl.u32 %v2372, 7
        %v2374 = vsub.s32 0, %v2373
        %v2375 = vrot.slane %v2370, %v2374
        %v2378 = vsel %vm1108, %v2367, 0
        %2380 = vmatprep.subr.bf16.mxu0 0
        %2381 = vmatpush1.bf16.msra.mxu0 %v2368
        %2382 = vmatprep.subr.bf16.mxu0 0
        %2383 = vmatpush1.bf16.msra.mxu0 %v2369
        %2384 = vmatprep.subr.bf16.mxu0 0
        %2385 = vmatpush1.bf16.msra.mxu0 0
        %2386 = vmatprep.subr.bf16.mxu0 0
        %2387 = vmatpush1.bf16.msra.mxu0 0
        %2388 = vmatprep.subr.bf16.mxu0 0
        %2389 = vmatpush1.bf16.msra.mxu0 0
        %2390 = vmatprep.subr.bf16.mxu0 0
        %2391 = vmatpush1.bf16.msra.mxu0 0
        %2392 = vmatprep.subr.bf16.mxu0 0
        %2393 = vmatpush1.bf16.msra.mxu0 0
        %2394 = vmatprep.subr.bf16.mxu0 0
        %2395 = vmatpush1.bf16.msra.mxu0 0
        %2396 = vmatprep.subr.bf16.mxu0 0
        %2397 = vmatpush1.bf16.msra.mxu0 0
        %2398 = vmatprep.subr.bf16.mxu0 0
        %2399 = vmatpush1.bf16.msra.mxu0 0
        %2400 = vmatprep.subr.bf16.mxu0 0
        %2401 = vmatpush1.bf16.msra.mxu0 0
        %2402 = vmatprep.subr.bf16.mxu0 0
        %2403 = vmatpush1.bf16.msra.mxu0 0
        %2404 = vmatprep.subr.bf16.mxu0 0
        %2405 = vmatpush1.bf16.msra.mxu0 0
        %2406 = vmatprep.subr.bf16.mxu0 0
        %2407 = vmatpush1.bf16.msra.mxu0 0
        %2408 = vmatprep.subr.bf16.mxu0 0
        %2409 = vmatpush1.bf16.msra.mxu0 0
        %2410 = vmatprep.subr.bf16.mxu0 0
        %2411 = vmatpush1.bf16.msra.mxu0 0
        %2412 = vmatprep.mubr.bf16.mxu0 0
        %2413 = vmatmul.mubr.bf16.gmra.mrb[0].mxu0 %v2378
        %v2414 = vpop.f32.mrb[0].mxu0
        %v2415 = vadd.f32 %v2375, %v2414
        %v2416 = vpop.f32.mrb[0].mxu0
        %v2417 = vpop.f32.mrb[0].mxu0
        %v2418 = vpop.f32.mrb[0].mxu0
        %2419 = vdwg.mxu0
        %v2420 = vmax.f32 %v2415, 0.0
        %v2421 = vld [vmem:[%s1074] sm:$0xff]
        %v2422 = vld [vmem:[%s1074 + $0x8] sm:$0xff]
        %v2423 = vld [vmem:[%s1074 + $0x10] sm:$0xff]
        %v2424 = vld [vmem:[%s1074 + $0x18] sm:$0xff]
        %v2425 = vld [vmem:[%s1074 + $0x20] sm:$0xff]
        %v2426 = vld [vmem:[%s1074 + $0x28] sm:$0xff]
        %v2427 = vld [vmem:[%s1074 + $0x30] sm:$0xff]
        %v2428 = vld [vmem:[%s1074 + $0x38] sm:$0xff]
        %v2429 = vpack.c.bf16 %v2420, %v2420
        %v2430 = vpack.c.bf16 %v2422, %v2421
        %v2431 = vpack.c.bf16 %v2424, %v2423
        %v2432 = vpack.c.bf16 %v2426, %v2425
        %v2433 = vpack.c.bf16 %v2428, %v2427
        %v2434 = vld [vmem:[%s1077] sm:$0x1]
        %v2436 = vlaneseq
        %v2437 = vshrl.u32 %v2436, 7
        %v2438 = vsub.s32 0, %v2437
        %v2439 = vrot.slane %v2434, %v2438
        %vm2441 = vcmask 523264
        %v2443 = vsel %vm2441, %v2429, 0
        %2445 = vmatprep.subr.bf16.mxu0 0
        %2446 = vmatpush1.bf16.msra.mxu0 %v2430
        %2447 = vmatprep.subr.bf16.mxu0 0
        %2448 = vmatpush1.bf16.msra.mxu0 %v2431
        %2449 = vmatprep.subr.bf16.mxu0 0
        %2450 = vmatpush1.bf16.msra.mxu0 %v2432
        %2451 = vmatprep.subr.bf16.mxu0 0
        %2452 = vmatpush1.bf16.msra.mxu0 %v2433
        %2453 = vmatprep.subr.bf16.mxu0 0
        %2454 = vmatpush1.bf16.msra.mxu0 0
        %2455 = vmatprep.subr.bf16.mxu0 0
        %2456 = vmatpush1.bf16.msra.mxu0 0
        %2457 = vmatprep.subr.bf16.mxu0 0
        %2458 = vmatpush1.bf16.msra.mxu0 0
        %2459 = vmatprep.subr.bf16.mxu0 0
        %2460 = vmatpush1.bf16.msra.mxu0 0
        %2461 = vmatprep.subr.bf16.mxu0 0
        %2462 = vmatpush1.bf16.msra.mxu0 0
        %2463 = vmatprep.subr.bf16.mxu0 0
        %2464 = vmatpush1.bf16.msra.mxu0 0
        %2465 = vmatprep.subr.bf16.mxu0 0
        %2466 = vmatpush1.bf16.msra.mxu0 0
        %2467 = vmatprep.subr.bf16.mxu0 0
        %2468 = vmatpush1.bf16.msra.mxu0 0
        %2469 = vmatprep.subr.bf16.mxu0 0
        %2470 = vmatpush1.bf16.msra.mxu0 0
        %2471 = vmatprep.subr.bf16.mxu0 0
        %2472 = vmatpush1.bf16.msra.mxu0 0
        %2473 = vmatprep.subr.bf16.mxu0 0
        %2474 = vmatpush1.bf16.msra.mxu0 0
        %2475 = vmatprep.subr.bf16.mxu0 0
        %2476 = vmatpush1.bf16.msra.mxu0 0
        %2477 = vmatprep.mubr.bf16.mxu0 0
        %2478 = vmatmul.mubr.bf16.gmra.mrb[0].mxu0 %v2443
        %v2479 = vpop.f32.mrb[0].mxu0
        %v2480 = vadd.f32 %v2439, %v2479
        %v2481 = vpop.f32.mrb[0].mxu0
        %v2482 = vpop.f32.mrb[0].mxu0
        %v2483 = vpop.f32.mrb[0].mxu0
        %2484 = vdwg.mxu0
        %v2485 = vadd.f32 %v2480, %v2362
        %v2486 = vld [vmem:[%s1080] sm:$0x1]
        %v2487 = vld [vmem:[%s1083] sm:$0x1]
        %v2488 = vsel %vm1108, %v2485, 0.0
        %2489 = vadd.xlane.f32.xlu0 %v2488
        %v2490 = vpop.xlane.xlu0 %2489
        %v2491 = vmul.f32 %v2490, %v1678
        %v2492 = vsub.f32 %v2485, %v2491
        %v2493 = vmul.f32 %v2492, %v2492
        %v2494 = vsel %vm1108, %v2493, 0.0
        %2495 = vadd.xlane.f32.xlu0 %v2494
        %v2496 = vpop.xlane.xlu0 %2495
        %v2497 = vmul.f32 %v2496, %v1678
        %v2498 = vadd.f32 %v2497, 1e-05
        %v2499 = vrsqrt.pop %v2498
        %v2500 = vmul.f32 %v2492, %v2499
        %v2502 = vlaneseq
        %v2503 = vshrl.u32 %v2502, 7
        %v2504 = vsub.s32 0, %v2503
        %v2505 = vrot.slane %v2486, %v2504
        %v2507 = vmul.f32 %v2505, %v2500
        %v2509 = vlaneseq
        %v2510 = vshrl.u32 %v2509, 7
        %v2511 = vsub.s32 0, %v2510
        %v2512 = vrot.slane %v2487, %v2511
        %v2514 = vadd.f32 %v2507, %v2512
        %2515 = vst.msk [vmem:[#allocation2] sm:$0xff] %vm1108, %v2514
        %p2516 = scmp.eq.s32.totalorder %s43, 1
        // Predicated region
        $region121: #{transformer_forward.3} parent=115 // pred_check
          %p2517 = pneg %p2516
        $region122: #{transformer_forward.3} parent=115 // pred_check_branch
          %2519 = sbr.rel (%p2517) target = $region124
        $region123: #{transformer_forward.3} parent=115 // pred_region
          %v2520 = vld [vmem:[%s22] sm:$0xff]
          %v2521 = vld [vmem:[%s22 + $0x8] sm:$0xff]
          %v2522 = vld [vmem:[%s22 + $0x10] sm:$0xff]
          %v2523 = vld [vmem:[%s22 + $0x18] sm:$0xff]
          %v2524 = vpack.c.bf16 %v2514, %v2514
          %v2525 = vpack.c.bf16 %v2521, %v2520
          %v2526 = vpack.c.bf16 %v2523, %v2522
          %v2527 = vld [vmem:[%s23] sm:$0x1]
          %v2529 = vlaneseq
          %v2530 = vshrl.u32 %v2529, 7
          %v2531 = vsub.s32 0, %v2530
          %v2532 = vrot.slane %v2527, %v2531
          %v2535 = vsel %vm1108, %v2524, 0
          %2537 = vmatprep.subr.bf16.mxu0 0
          %2538 = vmatpush1.bf16.msra.mxu0 %v2525
          %2539 = vmatprep.subr.bf16.mxu0 0
          %2540 = vmatpush1.bf16.msra.mxu0 %v2526
          %2541 = vmatprep.subr.bf16.mxu0 0
          %2542 = vmatpush1.bf16.msra.mxu0 0
          %2543 = vmatprep.subr.bf16.mxu0 0
          %2544 = vmatpush1.bf16.msra.mxu0 0
          %2545 = vmatprep.subr.bf16.mxu0 0
          %2546 = vmatpush1.bf16.msra.mxu0 0
          %2547 = vmatprep.subr.bf16.mxu0 0
          %2548 = vmatpush1.bf16.msra.mxu0 0
          %2549 = vmatprep.subr.bf16.mxu0 0
          %2550 = vmatpush1.bf16.msra.mxu0 0
          %2551 = vmatprep.subr.bf16.mxu0 0
          %2552 = vmatpush1.bf16.msra.mxu0 0
          %2553 = vmatprep.subr.bf16.mxu0 0
          %2554 = vmatpush1.bf16.msra.mxu0 0
          %2555 = vmatprep.subr.bf16.mxu0 0
          %2556 = vmatpush1.bf16.msra.mxu0 0
          %2557 = vmatprep.subr.bf16.mxu0 0
          %2558 = vmatpush1.bf16.msra.mxu0 0
          %2559 = vmatprep.subr.bf16.mxu0 0
          %2560 = vmatpush1.bf16.msra.mxu0 0
          %2561 = vmatprep.subr.bf16.mxu0 0
          %2562 = vmatpush1.bf16.msra.mxu0 0
          %2563 = vmatprep.subr.bf16.mxu0 0
          %2564 = vmatpush1.bf16.msra.mxu0 0
          %2565 = vmatprep.subr.bf16.mxu0 0
          %2566 = vmatpush1.bf16.msra.mxu0 0
          %2567 = vmatprep.subr.bf16.mxu0 0
          %2568 = vmatpush1.bf16.msra.mxu0 0
          %2569 = vmatprep.mubr.bf16.mxu0 0
          %2570 = vmatmul.mubr.bf16.gmra.mrb[0].mxu0 %v2535
          %v2571 = vpop.f32.mrb[0].mxu0
          %v2572 = vadd.f32 %v2532, %v2571
          %v2573 = vpop.f32.mrb[0].mxu0
          %v2574 = vpop.f32.mrb[0].mxu0
          %v2575 = vpop.f32.mrb[0].mxu0
          %2576 = vdwg.mxu0
          %2577 = vst [vmem:[%s1001] sm:$0xff] %v2572
        $region124: #{transformer_forward.3} parent=115 // pred_fallthru
          _
        %s2578 = sand.u32 %s672, 1
        %s2579 = scalar_lea.sflag [#allocation4], %s2578
        %s2580 = sand.u32 %s672, 1
        %s2581 = smul.addr %s2580, 8
        %s2582 = scalar_lea.vmem [#allocation3], %s2581
        // Predicated region
        $region125: #{transformer_forward.3} parent=115 // pred_check
          %p2583 = pneg %p682
        $region126: #{transformer_forward.3} parent=115 // pred_check_branch
          %2585 = sbr.rel (%p2583) target = $region128
        $region127: #{transformer_forward.3} parent=115 // pred_region
          %s2587 = ssub.s32 128, 128
          %2588 = vsyncadd %s2579, %s2587
          %s2589 = smul.addr %s42, 128
          %s2590 = scalar_lea.hbm %s24, %s2589
          %s2592 = sshll.u32 %s2582, 4
          %s2593 = int_to_ptr.vmem [resolvable:$true] %s2592
          %2595 = dma.vmem_to_hbm [thread:$0]  %s2593, 128, %s2590, %s2579
        $region128: #{transformer_forward.3} parent=115 // pred_fallthru
          _
      $region116: #{transformer_forward.3} parent=5 // pred_fallthru
        _
      %p2596 = scmp.le.s32.totalorder 2, %s33
      // Predicated region
      $region129: #{transformer_forward.3} parent=5 // pred_check
        %p2597 = pneg %p2596
      $region130: #{transformer_forward.3} parent=5 // pred_check_branch
        %2599 = sbr.rel (%p2597) target = $region132
      $region131: #{transformer_forward.3} parent=5 // pred_region
        %s2600 = ssub.s32 %s33, 2
        // Predicated region
        $region133: #{transformer_forward.3} parent=131 // pred_check
          %p2601 = pneg %p688
        $region134: #{transformer_forward.3} parent=131 // pred_check_branch
          %2603 = sbr.rel (%p2601) target = $region136
        $region135: #{transformer_forward.3} parent=131 // pred_region
          %s2604 = sand.u32 %s673, 1
          %s2605 = scalar_lea.sflag [#allocation4], %s2604
          %s2606 = sand.u32 %s673, 1
          %s2607 = smul.addr %s2606, 8
          %s2608 = scalar_lea.vmem [#allocation3], %s2607
          %2609 = dma.done %s2605, 128
        $region136: #{transformer_forward.3} parent=131 // pred_fallthru
          _
      $region132: #{transformer_forward.3} parent=5 // pred_fallthru
        _
    $region6: #{transformer_forward.3} parent=1 // loop_footer
      %s37 = sadd.s32 1, %s33
    $region7: #{transformer_forward.3} parent=1 // loop_footer_branch
      %32 = sbr.rel target = $region3
    $region8: #{transformer_forward.3} parent=1 // loop_exit
      _
    %2610 = vsyncpa [#allocation4], 1
    %s2611 = scalar_lea.sflag [#allocation4], 1
    %2612 = vsyncpa %s2611, 1

</llo_original>
